<compile_context>
chip_gen: v5e
topology: v5e:2x2
jax: 0.10.0
libtpu: 0.0.40
codegen_flags: <defaults>
</compile_context>

<pallas_src>
import functools
import math
import numpy as np
import jax
import jax.numpy as jnp
from jax.experimental import pallas as pl
from jax.experimental.pallas import tpu as pltpu

EPS = 1e-6
_SQRT2 = math.sqrt(2.0)
_SQRT_2_OVER_PI = math.sqrt(2.0 / math.pi)


def _gelu_exact(g):
    # PyTorch F.gelu default (erf form); kept in f32 for parity with the reference module.
    return 0.5 * g * (1.0 + jax.lax.erf(g / _SQRT2))


def _gelu_tanh(g):
    # tanh-approx GELU, only used for the optional bf16 activation path (v6e/v7x VPU saving).
    return 0.5 * g * (1.0 + jnp.tanh(_SQRT_2_OVER_PI * (g + 0.044715 * g * g * g)))


def _round_up(a, m):
    return ((a + m - 1) // m) * m


def _vmem_capacity_bytes():
    try:
        return int(pltpu.get_tpu_info().vmem_capacity_bytes)
    except Exception:
        return 64 << 20  # conservative (v7x-sized) fallback


def _num_tensorcores():
    # Best-effort: only used to decide whether splitting a single row tile can help (megacore).
    try:
        info = pltpu.get_tpu_info()
        for attr in ("num_cores", "core_count", "num_tensorcores", "tensorcores_per_chip"):
            v = getattr(info, attr, None)
            if isinstance(v, int) and v > 0:
                return v
    except Exception:
        pass
    return 1


def _vmem_estimate(tm, t_ff, d_model, kt, x_itemsize, single_buf):
    wbuf = 1 if (kt == 1 and single_buf) else 2
    weights = wbuf * (2 * d_model * t_ff + t_ff * d_model) * 2      # bf16 wv + wg + wdown
    io = 2 * (tm * d_model * x_itemsize) * 2                        # x + out, double-buffered
    scratch = tm * d_model * (4 + 2)                                # acc f32 + xn bf16
    temps = 3 * tm * t_ff * 4                                       # val / gate / act f32
    return weights + io + scratch + temps + (4 << 20)               # + internal headroom


def mapping_ffn_kernel(x_ref, wv_ref, wg_ref, wdn_ref, o_ref, acc_ref, xn_ref, *,
                       gelu_bf16=False):
    """Row tile x d_ff chunk: RMSNorm (k==0) -> GEGLU partial -> down-proj accumulate."""
    k = pl.program_id(1)

    @pl.when(k == 0)
    def _():
        xf = x_ref[...].astype(jnp.float32)                # (tm, d_model)
        mean_sq = jnp.mean(xf * xf, axis=-1, keepdims=True)
        # RMSNorm scale is pre-folded into the up-proj weight rows.
        xn_ref[...] = (xf * jax.lax.rsqrt(mean_sq + EPS)).astype(jnp.bfloat16)
        acc_ref[...] = xf                                  # residual (skip) folded into acc init

    xn_bf = xn_ref[...]                                    # (tm, d_model) bf16
    val = jnp.dot(xn_bf, wv_ref[...], preferred_element_type=jnp.float32)    # (tm, t_ff)
    gate = jnp.dot(xn_bf, wg_ref[...], preferred_element_type=jnp.float32)   # (tm, t_ff)
    if gelu_bf16:
        act = val.astype(jnp.bfloat16) * _gelu_tanh(gate.astype(jnp.bfloat16))
    else:
        act = (val * _gelu_exact(gate)).astype(jnp.bfloat16)

    # Dropout(p=0.0): identity.
    # TODO(synk): training-time dropout (p>0) would need pltpu.prng_seed / prng_random_bits.

    acc_ref[...] += jnp.dot(act, wdn_ref[...], preferred_element_type=jnp.float32)

    @pl.when(k == pl.num_programs(1) - 1)
    def _():
        o_ref[...] = acc_ref[...].astype(o_ref.dtype)


def prepare_weights(norm_scale, w_up, w_down):
    """One-time weight prep (call once, NOT per forward step):
      * split up-proj into value / gate halves (torch chunk(2, -1) order),
      * fold the RMSNorm learned scale into the up-proj rows (d_model axis),
      * cast to bf16 (MXU-native operands, half the HBM->VMEM DMA bytes)."""
    d_model = w_up.shape[0]
    d_ff = w_down.shape[0]
    assert w_up.shape == (d_model, 2 * d_ff)
    assert w_down.shape == (d_ff, d_model)
    scale = norm_scale.astype(jnp.float32).reshape(d_model, 1)
    w_value = (w_up[:, :d_ff].astype(jnp.float32) * scale).astype(jnp.bfloat16)
    w_gate = (w_up[:, d_ff:].astype(jnp.float32) * scale).astype(jnp.bfloat16)
    w_down_bf = w_down.astype(jnp.bfloat16)
    return w_value, w_gate, w_down_bf


def mapping_feed_forward_block(x, w_value, w_gate, w_down, *, tm=256, t_ff=None,
                               single_buffer_weights=True, gelu_bf16=False):
    """x: (N, d_model); w_value/w_gate: (d_model, d_ff) bf16 (scale-folded); w_down: (d_ff, d_model)."""
    n, d_model = x.shape
    d_ff = w_down.shape[0]
    assert w_value.shape == (d_model, d_ff) and w_gate.shape == (d_model, d_ff)
    assert w_down.shape == (d_ff, d_model)

    budget = int(0.85 * _vmem_capacity_bytes())
    itemsize = x.dtype.itemsize

    # Row tile: multiple of 16 (bf16 sublane packing), as large as possible for MXU M-dim.
    n16 = _round_up(max(n, 1), 16)
    tm_eff = _round_up(min(tm, n16), 16)
    ncores = _num_tensorcores()
    if ncores > 1 and n16 <= tm_eff and tm_eff > 16:
        # Only split one row tile into several when a second TensorCore can use them (v7x).
        tm_eff = max(16, _round_up(-(-n16 // ncores), 16))

    # d_ff tile: largest divisor (multiple of 128 unless == d_ff) fitting the VMEM budget.
    if t_ff is None:
        cands = [d_ff]
        c = d_ff
        while c % 2 == 0 and (c // 2) % 128 == 0:
            c //= 2
            cands.append(c)
        t_ff = cands[-1]
        for c in cands:
            if _vmem_estimate(tm_eff, c, d_model, d_ff // c, itemsize,
                              single_buffer_weights) <= budget:
                t_ff = c
                break
    assert d_ff % t_ff == 0
    kt = d_ff // t_ff

    # Last resort: shrink the row tile if even the smallest d_ff tile does not fit.
    while (tm_eff > 16 and
           _vmem_estimate(tm_eff, t_ff, d_model, kt, itemsize,
                          single_buffer_weights) > budget):
        tm_eff = max(16, _round_up(tm_eff // 2, 16))

    n_pad = _round_up(n, tm_eff)
    x_in = x if n_pad == n else jnp.pad(x, ((0, n_pad - n), (0, 0)))
    rows = n_pad // tm_eff

    def weight_spec(shape, index_map):
        if single_buffer_weights and kt == 1:
            # Grid-invariant weights: one VMEM buffer, DMA'd exactly once.
            return pl.BlockSpec(shape, index_map, pipeline_mode=pl.Buffered(1))
        return pl.BlockSpec(shape, index_map)

    grid_spec = pltpu.PrefetchScalarGridSpec(
        num_scalar_prefetch=0,
        grid=(rows, kt),
        in_specs=[
            pl.BlockSpec((tm_eff, d_model), lambda i, k: (i, 0)),   # x row tile
            weight_spec((d_model, t_ff), lambda i, k: (0, k)),      # up-proj value half
            weight_spec((d_model, t_ff), lambda i, k: (0, k)),      # up-proj gate half
            weight_spec((t_ff, d_model), lambda i, k: (k, 0)),      # down-proj
        ],
        out_specs=pl.BlockSpec((tm_eff, d_model), lambda i, k: (i, 0)),
        scratch_shapes=[
            pltpu.VMEM((tm_eff, d_model), jnp.float32),    # accumulator (skip + down-proj)
            pltpu.VMEM((tm_eff, d_model), jnp.bfloat16),   # RMSNorm'd activations (bf16)
        ],
    )

    # Advisory cost estimate (weights read once when kt == 1, once per row tile otherwise).
    wbytes = (w_value.size + w_gate.size + w_down.size) * 2
    weight_reads = wbytes * (1 if kt == 1 else rows)
    cost = pl.CostEstimate(
        flops=6 * n_pad * d_model * d_ff,
        transcendentals=n_pad * d_ff,
        bytes_accessed=2 * n_pad * d_model * itemsize + weight_reads,
    )

    vmem_need = _vmem_estimate(tm_eff, t_ff, d_model, kt, itemsize, single_buffer_weights)
    vmem_limit = int(min(max(vmem_need, 32 << 20), budget))

    kern = functools.partial(mapping_ffn_kernel, gelu_bf16=gelu_bf16)
    out = pl.pallas_call(
        kern,
        out_shape=jax.ShapeDtypeStruct((n_pad, d_model), x.dtype),
        grid_spec=grid_spec,
        compiler_params=pltpu.CompilerParams(
            dimension_semantics=("parallel", "arbitrary"),
            vmem_limit_bytes=vmem_limit,
        ),
        cost_estimate=cost,
    )(x_in, w_value, w_gate, w_down)

    return out if n_pad == n else out[:n]


def reference(x, norm_scale, w_up, w_down):
    """Pure-f32 reference matching the PyTorch module semantics."""
    xf = x.astype(jnp.float32)
    mean_sq = jnp.mean(xf * xf, axis=-1, keepdims=True)
    xn = xf * jax.lax.rsqrt(mean_sq + EPS) * norm_scale.astype(jnp.float32)
    h = xn @ w_up.astype(jnp.float32)
    d_ff = w_down.shape[0]
    val, gate = h[:, :d_ff], h[:, d_ff:]
    act = val * _gelu_exact(gate)
    y = act @ w_down.astype(jnp.float32)
    return (y + xf).astype(x.dtype)


if __name__ == "__main__":
    # Small but representative shapes; N=200 exercises the ragged-row padding path.
    d_model, d_ff, batch = 128, 256, 200

    key = jax.random.PRNGKey(0)
    kx, ks, kup, kdown = jax.random.split(key, 4)

    x = jax.random.normal(kx, (batch, d_model), dtype=jnp.float32)
    # RMSNorm init is ones; perturb slightly so the scale-folding path is really exercised.
    norm_scale = 1.0 + 0.1 * jax.random.normal(ks, (d_model,), dtype=jnp.float32)
    # nn.Linear(d_model, 2*d_ff).weight is (2*d_ff, d_model); we store its transpose so the
    # kernel computes x @ W. Value columns first, gate columns second (torch chunk(2, -1)).
    w_up = 0.02 * jax.random.normal(kup, (d_model, 2 * d_ff), dtype=jnp.float32)
    # Module zero-inits down_proj; use a deterministic nonzero init so the matmul path is tested.
    w_down = 0.02 * jax.random.normal(kdown, (d_ff, d_model), dtype=jnp.float32)

    # One-time weight prep (hoisted out of the per-call path).
    w_value, w_gate, w_down_bf = jax.block_until_ready(
        prepare_weights(norm_scale, w_up, w_down))

    ref = reference(x, norm_scale, w_up, w_down)

    # Config 1: single fused step (kt == 1, single-buffered VMEM-resident weights).
    out1 = jax.block_until_ready(
        mapping_feed_forward_block(x, w_value, w_gate, w_down_bf))
    np.testing.assert_allclose(np.asarray(out1), np.asarray(ref), rtol=2e-2, atol=2e-2)

    # Config 2: exercise the streamed-d_ff accumulator path + multi-row-tile padding
    # (tm=128 -> 2 row tiles at N=200; t_ff=128 -> 2 reduction steps over d_ff).
    out2 = jax.block_until_ready(
        mapping_feed_forward_block(x, w_value, w_gate, w_down_bf, tm=128, t_ff=128))
    np.testing.assert_allclose(np.asarray(out2), np.asarray(ref), rtol=2e-2, atol=2e-2)

    print("KERNEL_OK")
</pallas_src>

<mosaic_0001>
module attributes {stable_mosaic.version = 11 : i64} {
  func.func @mapping_ffn_kernel(%arg0: i32, %arg1: i32, %arg2: memref<208x128xf32, #tpu.memory_space<vmem>>, %arg3: memref<128x256xbf16, #tpu.memory_space<vmem>>, %arg4: memref<128x256xbf16, #tpu.memory_space<vmem>>, %arg5: memref<256x128xbf16, #tpu.memory_space<vmem>>, %arg6: memref<208x128xf32, #tpu.memory_space<vmem>>, %arg7: memref<208x128xf32, #tpu.memory_space<vmem>>, %arg8: memref<208x128xbf16, #tpu.memory_space<vmem>>) attributes {dimension_semantics = [#tpu.dimension_semantics<parallel>, #tpu.dimension_semantics<arbitrary>], iteration_bounds = array<i64: 1, 1>, scalar_prefetch = 0 : i64, scratch_operands = 2 : i64, tpu.core_type = #tpu.core_type<tc>, window_params = [{transform_indices = @transform_0, window_bounds = array<i64: 208, 128>}, {pipeline_mode = #tpu.pipeline_mode<synchronous>, transform_indices = @transform_1, window_bounds = array<i64: 128, 256>}, {pipeline_mode = #tpu.pipeline_mode<synchronous>, transform_indices = @transform_2, window_bounds = array<i64: 128, 256>}, {pipeline_mode = #tpu.pipeline_mode<synchronous>, transform_indices = @transform_3, window_bounds = array<i64: 256, 128>}, {transform_indices = @transform_4, window_bounds = array<i64: 208, 128>}]} {
    %c0_i32 = arith.constant 0 : i32
    %0 = arith.cmpi eq, %arg1, %c0_i32 : i32
    %1 = arith.extui %0 : i1 to i32
    %c0_i32_0 = arith.constant 0 : i32
    %2 = arith.cmpi ne, %1, %c0_i32_0 : i32
    scf.if %2 {
      %c0_19 = arith.constant 0 : index
      %c0_20 = arith.constant 0 : index
      %26 = vector.load %arg2[%c0_19, %c0_20] : memref<208x128xf32, #tpu.memory_space<vmem>>, vector<208x128xf32>
      %27 = arith.mulf %26, %26 : vector<208x128xf32>
      %cst_21 = arith.constant dense<0.000000e+00> : vector<208xf32>
      %28 = vector.multi_reduction <add>, %27, %cst_21 [1] : vector<208x128xf32> to vector<208xf32>
      %29 = vector.shape_cast %28 : vector<208xf32> to vector<208x1xf32>
      %cst_22 = arith.constant 1.280000e+02 : f32
      %30 = vector.broadcast %cst_22 : f32 to vector<208x1xf32>
      %31 = arith.divf %29, %30 : vector<208x1xf32>
      %cst_23 = arith.constant 9.99999997E-7 : f32
      %32 = vector.broadcast %cst_23 : f32 to vector<208x1xf32>
      %33 = arith.addf %31, %32 : vector<208x1xf32>
      %34 = math.rsqrt %33 : vector<208x1xf32>
      %35 = vector.broadcast %34 : vector<208x1xf32> to vector<208x128xf32>
      %36 = arith.mulf %26, %35 : vector<208x128xf32>
      %37 = arith.truncf %36 : vector<208x128xf32> to vector<208x128xbf16>
      %c0_24 = arith.constant 0 : index
      %c0_25 = arith.constant 0 : index
      %38 = vector.load %arg8[%c0_24, %c0_25] : memref<208x128xbf16, #tpu.memory_space<vmem>>, vector<208x128xbf16>
      tpu.vector_store %arg8[%c0_24, %c0_25], %37 {strides = array<i32>} : memref<208x128xbf16, #tpu.memory_space<vmem>>, vector<208x128xbf16>,
      %c0_26 = arith.constant 0 : index
      %c0_27 = arith.constant 0 : index
      %39 = vector.load %arg7[%c0_26, %c0_27] : memref<208x128xf32, #tpu.memory_space<vmem>>, vector<208x128xf32>
      tpu.vector_store %arg7[%c0_26, %c0_27], %26 {strides = array<i32>} : memref<208x128xf32, #tpu.memory_space<vmem>>, vector<208x128xf32>,
    } else {
    }
    %c0 = arith.constant 0 : index
    %c0_1 = arith.constant 0 : index
    %3 = vector.load %arg8[%c0, %c0_1] : memref<208x128xbf16, #tpu.memory_space<vmem>>, vector<208x128xbf16>
    %c0_2 = arith.constant 0 : index
    %c0_3 = arith.constant 0 : index
    %4 = vector.load %arg3[%c0_2, %c0_3] : memref<128x256xbf16, #tpu.memory_space<vmem>>, vector<128x256xbf16>
    %cst = arith.constant dense<0.000000e+00> : vector<208x256xf32>
    %5 = tpu.matmul %3, %4, %cst {dimension_numbers = #tpu.dot_dimension_numbers<[1], [0], [0], [1], [0, 0, 1, 1], [], []>} : vector<208x128xbf16>, vector<128x256xbf16>, vector<208x256xf32> -> vector<208x256xf32>
    %c0_4 = arith.constant 0 : index
    %c0_5 = arith.constant 0 : index
    %6 = vector.load %arg4[%c0_4, %c0_5] : memref<128x256xbf16, #tpu.memory_space<vmem>>, vector<128x256xbf16>
    %cst_6 = arith.constant dense<0.000000e+00> : vector<208x256xf32>
    %7 = tpu.matmul %3, %6, %cst_6 {dimension_numbers = #tpu.dot_dimension_numbers<[1], [0], [0], [1], [0, 0, 1, 1], [], []>} : vector<208x128xbf16>, vector<128x256xbf16>, vector<208x256xf32> -> vector<208x256xf32>
    %cst_7 = arith.constant 5.000000e-01 : f32
    %8 = vector.broadcast %cst_7 : f32 to vector<208x256xf32>
    %9 = arith.mulf %8, %7 : vector<208x256xf32>
    %cst_8 = arith.constant 1.41421354 : f32
    %10 = vector.broadcast %cst_8 : f32 to vector<208x256xf32>
    %11 = arith.divf %7, %10 : vector<208x256xf32>
    %12 = math.erf %11 : vector<208x256xf32>
    %cst_9 = arith.constant 1.000000e+00 : f32
    %13 = vector.broadcast %cst_9 : f32 to vector<208x256xf32>
    %14 = arith.addf %13, %12 : vector<208x256xf32>
    %15 = arith.mulf %9, %14 : vector<208x256xf32>
    %16 = arith.mulf %5, %15 : vector<208x256xf32>
    %17 = arith.truncf %16 : vector<208x256xf32> to vector<208x256xbf16>
    %c0_10 = arith.constant 0 : index
    %c0_11 = arith.constant 0 : index
    %18 = vector.load %arg7[%c0_10, %c0_11] : memref<208x128xf32, #tpu.memory_space<vmem>>, vector<208x128xf32>
    %c0_12 = arith.constant 0 : index
    %c0_13 = arith.constant 0 : index
    %19 = vector.load %arg5[%c0_12, %c0_13] : memref<256x128xbf16, #tpu.memory_space<vmem>>, vector<256x128xbf16>
    %cst_14 = arith.constant dense<0.000000e+00> : vector<208x128xf32>
    %20 = tpu.matmul %17, %19, %cst_14 {dimension_numbers = #tpu.dot_dimension_numbers<[1], [0], [0], [1], [0, 0, 1, 1], [], []>} : vector<208x256xbf16>, vector<256x128xbf16>, vector<208x128xf32> -> vector<208x128xf32>
    %21 = arith.addf %18, %20 : vector<208x128xf32>
    %c0_15 = arith.constant 0 : index
    %c0_16 = arith.constant 0 : index
    %22 = vector.load %arg7[%c0_15, %c0_16] : memref<208x128xf32, #tpu.memory_space<vmem>>, vector<208x128xf32>
    tpu.vector_store %arg7[%c0_15, %c0_16], %21 {strides = array<i32>} : memref<208x128xf32, #tpu.memory_space<vmem>>, vector<208x128xf32>,
    %c0_i32_17 = arith.constant 0 : i32
    %23 = arith.cmpi eq, %arg1, %c0_i32_17 : i32
    %24 = arith.extui %23 : i1 to i32
    %c0_i32_18 = arith.constant 0 : i32
    %25 = arith.cmpi ne, %24, %c0_i32_18 : i32
    scf.if %25 {
      %c0_19 = arith.constant 0 : index
      %c0_20 = arith.constant 0 : index
      %26 = vector.load %arg7[%c0_19, %c0_20] : memref<208x128xf32, #tpu.memory_space<vmem>>, vector<208x128xf32>
      %c0_21 = arith.constant 0 : index
      %c0_22 = arith.constant 0 : index
      %27 = vector.load %arg6[%c0_21, %c0_22] : memref<208x128xf32, #tpu.memory_space<vmem>>, vector<208x128xf32>
      tpu.vector_store %arg6[%c0_21, %c0_22], %26 {strides = array<i32>} : memref<208x128xf32, #tpu.memory_space<vmem>>, vector<208x128xf32>,
    } else {
    }
    return
  }
  func.func @transform_0(%arg0: i32, %arg1: i32) -> (i32, i32) {
    %c0_i32 = arith.constant 0 : i32
    %c0_i32_0 = arith.constant 0 : i32
    return %arg0, %c0_i32 : i32, i32
  }
  func.func @transform_1(%arg0: i32, %arg1: i32) -> (i32, i32) {
    %c0_i32 = arith.constant 0 : i32
    %c0_i32_0 = arith.constant 0 : i32
    return %c0_i32, %arg1 : i32, i32
  }
  func.func @transform_2(%arg0: i32, %arg1: i32) -> (i32, i32) {
    %c0_i32 = arith.constant 0 : i32
    %c0_i32_0 = arith.constant 0 : i32
    return %c0_i32, %arg1 : i32, i32
  }
  func.func @transform_3(%arg0: i32, %arg1: i32) -> (i32, i32) {
    %c0_i32 = arith.constant 0 : i32
    %c0_i32_0 = arith.constant 0 : i32
    return %arg1, %c0_i32 : i32, i32
  }
  func.func @transform_4(%arg0: i32, %arg1: i32) -> (i32, i32) {
    %c0_i32 = arith.constant 0 : i32
    %c0_i32_0 = arith.constant 0 : i32
    return %arg0, %c0_i32 : i32, i32
  }
}

</mosaic_0001>

<llo_original>
// kernel: tpu_custom_call.1
$region0: #{tpu_custom_call.1}
  #allocation0 [shape = 'u32[]', space=smem, size = 0x4, offset = 0x4, fixed_abs, tag = 'smem constant byte address 0x4 - core index']
  #allocation1 [shape = 'u32[72,128]{1,0:T(1,128)}', space=vmem, size = 0x9000, scoped, tag = 'internal scratch']
  #allocation2 [shape = 'f32[208,128]{1,0:T(8,128)}', space=vmem, size = 0x1a000, scoped, tag = 'scratch operand']
  #allocation3 [shape = 'bf16[208,128]{1,0:T(8,128)(2,1)}', space=vmem, size = 0xd000, scoped, tag = 'scratch operand']
  %s0 = inlined_call_operand.hbm [shape: f32[208,128], index: 0, kind: input, shape index: {}]
  %s1 = inlined_call_operand.hbm [shape: bf16[128,256], index: 1, kind: input, shape index: {}]
  %s2 = inlined_call_operand.hbm [shape: bf16[128,256], index: 2, kind: input, shape index: {}]
  %s3 = inlined_call_operand.hbm [shape: bf16[256,128], index: 3, kind: input, shape index: {}]
  %s4 = inlined_call_operand.hbm [shape: f32[208,128], index: 4, kind: output, shape index: {}]
  %s5 = sld [smem:[#allocation0]]
  $region50: #{tpu_custom_call.1} parent=0
    _
  %s7 = ssub.s32 1, %s5
  %s8 = scalar_select 0, %s7, %s5
  $region1: #{tpu_custom_call.1} parent=0
    #allocation4 [shape = 'u8[106496]{0}', space=vmem, size = 0x1a000, scoped, tag = 'input window, operand 0, single buffered']
    #allocation5 [shape = 's32[1]{0}', space=sflag, size = 0x4, scoped, tag = 'scoped memory for tpu_custom_call.1']
    #allocation6 [shape = 's32[1]{0}', space=sflag, size = 0x4, scoped, tag = 'scoped memory for tpu_custom_call.1']
    #allocation7 [shape = 'u8[65536]{0}', space=vmem, size = 0x10000, scoped, tag = 'input window, operand 1, single buffered']
    #allocation8 [shape = 's32[1]{0}', space=sflag, size = 0x4, scoped, tag = 'scoped memory for tpu_custom_call.1']
    #allocation9 [shape = 'u8[65536]{0}', space=vmem, size = 0x10000, scoped, tag = 'input window, operand 2, single buffered']
    #allocation10 [shape = 'u8[65536]{0}', space=vmem, size = 0x10000, scoped, tag = 'input window, operand 3, single buffered']
    #allocation11 [shape = 's32[1]{0}', space=sflag, size = 0x4, scoped, tag = 'scoped memory for tpu_custom_call.1']
    #allocation12 [shape = 'u8[106496]{0}', space=vmem, size = 0x1a000, scoped, tag = 'output window, operand 0, single buffered']
    %9 = vsyncpa [#allocation5], 0
    %10 = vsyncpa [#allocation8], 0
    %11 = vsyncpa [#allocation11], 0
    %12 = vsyncpa [#allocation6], 0
    // Predicated region
    $region2: #{tpu_custom_call.1} parent=1 // pred_check
      _
    $region3: #{tpu_custom_call.1} parent=1 // pred_check_branch
      %14 = sbr.rel (0) target = $region5
    $region4: #{tpu_custom_call.1} parent=1 // pred_region
      %16 = vsyncadd [#allocation5], 0
      %s17 = sshll.u32 %s0, 4
      %s18 = int_to_ptr.hbm [resolvable:$true] %s17
      %s19 = sshll.u32 [#allocation4], 4
      %s20 = int_to_ptr.vmem [resolvable:$true] %s19
      %25 = dma.hbm_to_vmem [thread:$0]  %s18, 3328, %s20, [#allocation5], 128, 128, 8
    $region5: #{tpu_custom_call.1} parent=1 // pred_fallthru
      _
    // Predicated region
    $region6: #{tpu_custom_call.1} parent=1 // pred_check
      _
    $region7: #{tpu_custom_call.1} parent=1 // pred_check_branch
      %27 = sbr.rel (0) target = $region9
    $region8: #{tpu_custom_call.1} parent=1 // pred_region
      %29 = vsyncadd [#allocation8], 0
      %s30 = sshll.u32 %s1, 4
      %s31 = int_to_ptr.hbm [resolvable:$true] %s30
      %s32 = sshll.u32 [#allocation7], 4
      %s33 = int_to_ptr.vmem [resolvable:$true] %s32
      %38 = dma.hbm_to_vmem [thread:$0]  %s31, 2048, %s33, [#allocation8], 128, 128, 8
    $region9: #{tpu_custom_call.1} parent=1 // pred_fallthru
      _
    // Predicated region
    $region10: #{tpu_custom_call.1} parent=1 // pred_check
      _
    $region11: #{tpu_custom_call.1} parent=1 // pred_check_branch
      %40 = sbr.rel (0) target = $region13
    $region12: #{tpu_custom_call.1} parent=1 // pred_region
      %42 = vsyncadd [#allocation8], 0
      %s43 = sshll.u32 %s2, 4
      %s44 = int_to_ptr.hbm [resolvable:$true] %s43
      %s45 = sshll.u32 [#allocation9], 4
      %s46 = int_to_ptr.vmem [resolvable:$true] %s45
      %51 = dma.hbm_to_vmem [thread:$0]  %s44, 2048, %s46, [#allocation8], 128, 128, 8
    $region13: #{tpu_custom_call.1} parent=1 // pred_fallthru
      _
    // Predicated region
    $region14: #{tpu_custom_call.1} parent=1 // pred_check
      _
    $region15: #{tpu_custom_call.1} parent=1 // pred_check_branch
      %53 = sbr.rel (0) target = $region17
    $region16: #{tpu_custom_call.1} parent=1 // pred_region
      %55 = vsyncadd [#allocation11], 0
      %s56 = sshll.u32 %s3, 4
      %s57 = int_to_ptr.hbm [resolvable:$true] %s56
      %s58 = sshll.u32 [#allocation10], 4
      %s59 = int_to_ptr.vmem [resolvable:$true] %s58
      %64 = dma.hbm_to_vmem [thread:$0]  %s57, 2048, %s59, [#allocation11], 64, 64, 4
    $region17: #{tpu_custom_call.1} parent=1 // pred_fallthru
      _
    // Predicated region
    $region18: #{tpu_custom_call.1} parent=1 // pred_check
      _
    $region19: #{tpu_custom_call.1} parent=1 // pred_check_branch
      %66 = sbr.rel (0) target = $region21
    $region20: #{tpu_custom_call.1} parent=1 // pred_region
      %68 = dma.done [#allocation5], 3328
    $region21: #{tpu_custom_call.1} parent=1 // pred_fallthru
      _
    // Predicated region
    $region22: #{tpu_custom_call.1} parent=1 // pred_check
      _
    $region23: #{tpu_custom_call.1} parent=1 // pred_check_branch
      %70 = sbr.rel (0) target = $region25
    $region24: #{tpu_custom_call.1} parent=1 // pred_region
      %72 = dma.done [#allocation8], 2048
    $region25: #{tpu_custom_call.1} parent=1 // pred_fallthru
      _
    // Predicated region
    $region26: #{tpu_custom_call.1} parent=1 // pred_check
      _
    $region27: #{tpu_custom_call.1} parent=1 // pred_check_branch
      %74 = sbr.rel (0) target = $region29
    $region28: #{tpu_custom_call.1} parent=1 // pred_region
      %76 = dma.done [#allocation8], 2048
    $region29: #{tpu_custom_call.1} parent=1 // pred_fallthru
      _
    // Predicated region
    $region30: #{tpu_custom_call.1} parent=1 // pred_check
      _
    $region31: #{tpu_custom_call.1} parent=1 // pred_check_branch
      %78 = sbr.rel (0) target = $region33
    $region32: #{tpu_custom_call.1} parent=1 // pred_region
      %80 = dma.done [#allocation11], 2048
    $region33: #{tpu_custom_call.1} parent=1 // pred_fallthru
      _
    %p81 = scmp.eq.s32.totalorder 0, 0
    // Predicated region
    $region34: #{tpu_custom_call.1} parent=1 // pred_check
      %p82 = pneg %p81
    $region35: #{tpu_custom_call.1} parent=1 // pred_check_branch
      %84 = sbr.rel (%p82) target = $region37
    $region36: #{tpu_custom_call.1} parent=1 // pred_region
      %v85 = vld [vmem:[#allocation4] sm:$0xff]
      %v86 = vld [vmem:[#allocation4 + $0x8] sm:$0xff]
      %v87 = vld [vmem:[#allocation4 + $0x10] sm:$0xff]
      %v88 = vld [vmem:[#allocation4 + $0x18] sm:$0xff]
      %v89 = vld [vmem:[#allocation4 + $0x20] sm:$0xff]
      %v90 = vld [vmem:[#allocation4 + $0x28] sm:$0xff]
      %v91 = vld [vmem:[#allocation4 + $0x30] sm:$0xff]
      %v92 = vld [vmem:[#allocation4 + $0x38] sm:$0xff]
      %v93 = vld [vmem:[#allocation4 + $0x40] sm:$0xff]
      %v94 = vld [vmem:[#allocation4 + $0x48] sm:$0xff]
      %v95 = vld [vmem:[#allocation4 + $0x50] sm:$0xff]
      %v96 = vld [vmem:[#allocation4 + $0x58] sm:$0xff]
      %v97 = vld [vmem:[#allocation4 + $0x60] sm:$0xff]
      %v98 = vld [vmem:[#allocation4 + $0x68] sm:$0xff]
      %v99 = vld [vmem:[#allocation4 + $0x70] sm:$0xff]
      %v100 = vld [vmem:[#allocation4 + $0x78] sm:$0xff]
      %v101 = vld [vmem:[#allocation4 + $0x80] sm:$0xff]
      %v102 = vld [vmem:[#allocation4 + $0x88] sm:$0xff]
      %v103 = vld [vmem:[#allocation4 + $0x90] sm:$0xff]
      %v104 = vld [vmem:[#allocation4 + $0x98] sm:$0xff]
      %v105 = vld [vmem:[#allocation4 + $0xa0] sm:$0xff]
      %v106 = vld [vmem:[#allocation4 + $0xa8] sm:$0xff]
      %v107 = vld [vmem:[#allocation4 + $0xb0] sm:$0xff]
      %v108 = vld [vmem:[#allocation4 + $0xb8] sm:$0xff]
      %v109 = vld [vmem:[#allocation4 + $0xc0] sm:$0xff]
      %v110 = vld [vmem:[#allocation4 + $0xc8] sm:$0xff]
      %v111 = vmul.f32 %v85, %v85
      %v112 = vmul.f32 %v86, %v86
      %v113 = vmul.f32 %v87, %v87
      %v114 = vmul.f32 %v88, %v88
      %v115 = vmul.f32 %v89, %v89
      %v116 = vmul.f32 %v90, %v90
      %v117 = vmul.f32 %v91, %v91
      %v118 = vmul.f32 %v92, %v92
      %v119 = vmul.f32 %v93, %v93
      %v120 = vmul.f32 %v94, %v94
      %v121 = vmul.f32 %v95, %v95
      %v122 = vmul.f32 %v96, %v96
      %v123 = vmul.f32 %v97, %v97
      %v124 = vmul.f32 %v98, %v98
      %v125 = vmul.f32 %v99, %v99
      %v126 = vmul.f32 %v100, %v100
      %v127 = vmul.f32 %v101, %v101
      %v128 = vmul.f32 %v102, %v102
      %v129 = vmul.f32 %v103, %v103
      %v130 = vmul.f32 %v104, %v104
      %v131 = vmul.f32 %v105, %v105
      %v132 = vmul.f32 %v106, %v106
      %v133 = vmul.f32 %v107, %v107
      %v134 = vmul.f32 %v108, %v108
      %v135 = vmul.f32 %v109, %v109
      %v136 = vmul.f32 %v110, %v110
      %137 = vadd.xlane.f32.xlu0 %v111
      %v138 = vpop.xlane.xlu0 %137
      %139 = vadd.xlane.f32.xlu0 %v112
      %v140 = vpop.xlane.xlu0 %139
      %141 = vadd.xlane.f32.xlu0 %v113
      %v142 = vpop.xlane.xlu0 %141
      %143 = vadd.xlane.f32.xlu0 %v114
      %v144 = vpop.xlane.xlu0 %143
      %145 = vadd.xlane.f32.xlu0 %v115
      %v146 = vpop.xlane.xlu0 %145
      %147 = vadd.xlane.f32.xlu0 %v116
      %v148 = vpop.xlane.xlu0 %147
      %149 = vadd.xlane.f32.xlu0 %v117
      %v150 = vpop.xlane.xlu0 %149
      %151 = vadd.xlane.f32.xlu0 %v118
      %v152 = vpop.xlane.xlu0 %151
      %153 = vadd.xlane.f32.xlu0 %v119
      %v154 = vpop.xlane.xlu0 %153
      %155 = vadd.xlane.f32.xlu0 %v120
      %v156 = vpop.xlane.xlu0 %155
      %157 = vadd.xlane.f32.xlu0 %v121
      %v158 = vpop.xlane.xlu0 %157
      %159 = vadd.xlane.f32.xlu0 %v122
      %v160 = vpop.xlane.xlu0 %159
      %161 = vadd.xlane.f32.xlu0 %v123
      %v162 = vpop.xlane.xlu0 %161
      %163 = vadd.xlane.f32.xlu0 %v124
      %v164 = vpop.xlane.xlu0 %163
      %165 = vadd.xlane.f32.xlu0 %v125
      %v166 = vpop.xlane.xlu0 %165
      %167 = vadd.xlane.f32.xlu0 %v126
      %v168 = vpop.xlane.xlu0 %167
      %169 = vadd.xlane.f32.xlu0 %v127
      %v170 = vpop.xlane.xlu0 %169
      %171 = vadd.xlane.f32.xlu0 %v128
      %v172 = vpop.xlane.xlu0 %171
      %173 = vadd.xlane.f32.xlu0 %v129
      %v174 = vpop.xlane.xlu0 %173
      %175 = vadd.xlane.f32.xlu0 %v130
      %v176 = vpop.xlane.xlu0 %175
      %177 = vadd.xlane.f32.xlu0 %v131
      %v178 = vpop.xlane.xlu0 %177
      %179 = vadd.xlane.f32.xlu0 %v132
      %v180 = vpop.xlane.xlu0 %179
      %181 = vadd.xlane.f32.xlu0 %v133
      %v182 = vpop.xlane.xlu0 %181
      %183 = vadd.xlane.f32.xlu0 %v134
      %v184 = vpop.xlane.xlu0 %183
      %185 = vadd.xlane.f32.xlu0 %v135
      %v186 = vpop.xlane.xlu0 %185
      %187 = vadd.xlane.f32.xlu0 %v136
      %v188 = vpop.xlane.xlu0 %187
      %v189 = vrcp.pop 128.0
      %v190 = vmul.f32 128.0, %v189
      %v191 = vsub.f32 1.0, %v190
      %v192 = vmul.f32 %v189, %v191
      %v193 = vadd.f32 %v189, %v192
      %vm194 = vweird.f32 %v189
      %v195 = vsel %vm194, %v189, %v193
      %v196 = vmul.f32 %v138, %v195
      %v197 = vmul.f32 %v140, %v195
      %v198 = vmul.f32 %v142, %v195
      %v199 = vmul.f32 %v144, %v195
      %v200 = vmul.f32 %v146, %v195
      %v201 = vmul.f32 %v148, %v195
      %v202 = vmul.f32 %v150, %v195
      %v203 = vmul.f32 %v152, %v195
      %v204 = vmul.f32 %v154, %v195
      %v205 = vmul.f32 %v156, %v195
      %v206 = vmul.f32 %v158, %v195
      %v207 = vmul.f32 %v160, %v195
      %v208 = vmul.f32 %v162, %v195
      %v209 = vmul.f32 %v164, %v195
      %v210 = vmul.f32 %v166, %v195
      %v211 = vmul.f32 %v168, %v195
      %v212 = vmul.f32 %v170, %v195
      %v213 = vmul.f32 %v172, %v195
      %v214 = vmul.f32 %v174, %v195
      %v215 = vmul.f32 %v176, %v195
      %v216 = vmul.f32 %v178, %v195
      %v217 = vmul.f32 %v180, %v195
      %v218 = vmul.f32 %v182, %v195
      %v219 = vmul.f32 %v184, %v195
      %v220 = vmul.f32 %v186, %v195
      %v221 = vmul.f32 %v188, %v195
      %v222 = vadd.f32 %v196, 1e-06
      %v223 = vadd.f32 %v197, 1e-06
      %v224 = vadd.f32 %v198, 1e-06
      %v225 = vadd.f32 %v199, 1e-06
      %v226 = vadd.f32 %v200, 1e-06
      %v227 = vadd.f32 %v201, 1e-06
      %v228 = vadd.f32 %v202, 1e-06
      %v229 = vadd.f32 %v203, 1e-06
      %v230 = vadd.f32 %v204, 1e-06
      %v231 = vadd.f32 %v205, 1e-06
      %v232 = vadd.f32 %v206, 1e-06
      %v233 = vadd.f32 %v207, 1e-06
      %v234 = vadd.f32 %v208, 1e-06
      %v235 = vadd.f32 %v209, 1e-06
      %v236 = vadd.f32 %v210, 1e-06
      %v237 = vadd.f32 %v211, 1e-06
      %v238 = vadd.f32 %v212, 1e-06
      %v239 = vadd.f32 %v213, 1e-06
      %v240 = vadd.f32 %v214, 1e-06
      %v241 = vadd.f32 %v215, 1e-06
      %v242 = vadd.f32 %v216, 1e-06
      %v243 = vadd.f32 %v217, 1e-06
      %v244 = vadd.f32 %v218, 1e-06
      %v245 = vadd.f32 %v219, 1e-06
      %v246 = vadd.f32 %v220, 1e-06
      %v247 = vadd.f32 %v221, 1e-06
      %v248 = vrsqrt.pop %v222
      %v249 = vmul.f32 %v248, %v222
      %v250 = vmul.f32 %v249, %v248
      %v251 = vmul.f32 0.5, %v250
      %v252 = vsub.f32 1.5, %v251
      %v253 = vmul.f32 %v248, %v252
      %vm254 = vweird.f32 %v222
      %vm255 = vweird.f32 %v248
      %vm256 = vmor %vm254, %vm255
      %v257 = vsel %vm256, %v248, %v253
      %v258 = vrsqrt.pop %v223
      %v259 = vmul.f32 %v258, %v223
      %v260 = vmul.f32 %v259, %v258
      %v261 = vmul.f32 0.5, %v260
      %v262 = vsub.f32 1.5, %v261
      %v263 = vmul.f32 %v258, %v262
      %vm264 = vweird.f32 %v223
      %vm265 = vweird.f32 %v258
      %vm266 = vmor %vm264, %vm265
      %v267 = vsel %vm266, %v258, %v263
      %v268 = vrsqrt.pop %v224
      %v269 = vmul.f32 %v268, %v224
      %v270 = vmul.f32 %v269, %v268
      %v271 = vmul.f32 0.5, %v270
      %v272 = vsub.f32 1.5, %v271
      %v273 = vmul.f32 %v268, %v272
      %vm274 = vweird.f32 %v224
      %vm275 = vweird.f32 %v268
      %vm276 = vmor %vm274, %vm275
      %v277 = vsel %vm276, %v268, %v273
      %v278 = vrsqrt.pop %v225
      %v279 = vmul.f32 %v278, %v225
      %v280 = vmul.f32 %v279, %v278
      %v281 = vmul.f32 0.5, %v280
      %v282 = vsub.f32 1.5, %v281
      %v283 = vmul.f32 %v278, %v282
      %vm284 = vweird.f32 %v225
      %vm285 = vweird.f32 %v278
      %vm286 = vmor %vm284, %vm285
      %v287 = vsel %vm286, %v278, %v283
      %v288 = vrsqrt.pop %v226
      %v289 = vmul.f32 %v288, %v226
      %v290 = vmul.f32 %v289, %v288
      %v291 = vmul.f32 0.5, %v290
      %v292 = vsub.f32 1.5, %v291
      %v293 = vmul.f32 %v288, %v292
      %vm294 = vweird.f32 %v226
      %vm295 = vweird.f32 %v288
      %vm296 = vmor %vm294, %vm295
      %v297 = vsel %vm296, %v288, %v293
      %v298 = vrsqrt.pop %v227
      %v299 = vmul.f32 %v298, %v227
      %v300 = vmul.f32 %v299, %v298
      %v301 = vmul.f32 0.5, %v300
      %v302 = vsub.f32 1.5, %v301
      %v303 = vmul.f32 %v298, %v302
      %vm304 = vweird.f32 %v227
      %vm305 = vweird.f32 %v298
      %vm306 = vmor %vm304, %vm305
      %v307 = vsel %vm306, %v298, %v303
      %v308 = vrsqrt.pop %v228
      %v309 = vmul.f32 %v308, %v228
      %v310 = vmul.f32 %v309, %v308
      %v311 = vmul.f32 0.5, %v310
      %v312 = vsub.f32 1.5, %v311
      %v313 = vmul.f32 %v308, %v312
      %vm314 = vweird.f32 %v228
      %vm315 = vweird.f32 %v308
      %vm316 = vmor %vm314, %vm315
      %v317 = vsel %vm316, %v308, %v313
      %v318 = vrsqrt.pop %v229
      %v319 = vmul.f32 %v318, %v229
      %v320 = vmul.f32 %v319, %v318
      %v321 = vmul.f32 0.5, %v320
      %v322 = vsub.f32 1.5, %v321
      %v323 = vmul.f32 %v318, %v322
      %vm324 = vweird.f32 %v229
      %vm325 = vweird.f32 %v318
      %vm326 = vmor %vm324, %vm325
      %v327 = vsel %vm326, %v318, %v323
      %v328 = vrsqrt.pop %v230
      %v329 = vmul.f32 %v328, %v230
      %v330 = vmul.f32 %v329, %v328
      %v331 = vmul.f32 0.5, %v330
      %v332 = vsub.f32 1.5, %v331
      %v333 = vmul.f32 %v328, %v332
      %vm334 = vweird.f32 %v230
      %vm335 = vweird.f32 %v328
      %vm336 = vmor %vm334, %vm335
      %v337 = vsel %vm336, %v328, %v333
      %v338 = vrsqrt.pop %v231
      %v339 = vmul.f32 %v338, %v231
      %v340 = vmul.f32 %v339, %v338
      %v341 = vmul.f32 0.5, %v340
      %v342 = vsub.f32 1.5, %v341
      %v343 = vmul.f32 %v338, %v342
      %vm344 = vweird.f32 %v231
      %vm345 = vweird.f32 %v338
      %vm346 = vmor %vm344, %vm345
      %v347 = vsel %vm346, %v338, %v343
      %v348 = vrsqrt.pop %v232
      %v349 = vmul.f32 %v348, %v232
      %v350 = vmul.f32 %v349, %v348
      %v351 = vmul.f32 0.5, %v350
      %v352 = vsub.f32 1.5, %v351
      %v353 = vmul.f32 %v348, %v352
      %vm354 = vweird.f32 %v232
      %vm355 = vweird.f32 %v348
      %vm356 = vmor %vm354, %vm355
      %v357 = vsel %vm356, %v348, %v353
      %v358 = vrsqrt.pop %v233
      %v359 = vmul.f32 %v358, %v233
      %v360 = vmul.f32 %v359, %v358
      %v361 = vmul.f32 0.5, %v360
      %v362 = vsub.f32 1.5, %v361
      %v363 = vmul.f32 %v358, %v362
      %vm364 = vweird.f32 %v233
      %vm365 = vweird.f32 %v358
      %vm366 = vmor %vm364, %vm365
      %v367 = vsel %vm366, %v358, %v363
      %v368 = vrsqrt.pop %v234
      %v369 = vmul.f32 %v368, %v234
      %v370 = vmul.f32 %v369, %v368
      %v371 = vmul.f32 0.5, %v370
      %v372 = vsub.f32 1.5, %v371
      %v373 = vmul.f32 %v368, %v372
      %vm374 = vweird.f32 %v234
      %vm375 = vweird.f32 %v368
      %vm376 = vmor %vm374, %vm375
      %v377 = vsel %vm376, %v368, %v373
      %v378 = vrsqrt.pop %v235
      %v379 = vmul.f32 %v378, %v235
      %v380 = vmul.f32 %v379, %v378
      %v381 = vmul.f32 0.5, %v380
      %v382 = vsub.f32 1.5, %v381
      %v383 = vmul.f32 %v378, %v382
      %vm384 = vweird.f32 %v235
      %vm385 = vweird.f32 %v378
      %vm386 = vmor %vm384, %vm385
      %v387 = vsel %vm386, %v378, %v383
      %v388 = vrsqrt.pop %v236
      %v389 = vmul.f32 %v388, %v236
      %v390 = vmul.f32 %v389, %v388
      %v391 = vmul.f32 0.5, %v390
      %v392 = vsub.f32 1.5, %v391
      %v393 = vmul.f32 %v388, %v392
      %vm394 = vweird.f32 %v236
      %vm395 = vweird.f32 %v388
      %vm396 = vmor %vm394, %vm395
      %v397 = vsel %vm396, %v388, %v393
      %v398 = vrsqrt.pop %v237
      %v399 = vmul.f32 %v398, %v237
      %v400 = vmul.f32 %v399, %v398
      %v401 = vmul.f32 0.5, %v400
      %v402 = vsub.f32 1.5, %v401
      %v403 = vmul.f32 %v398, %v402
      %vm404 = vweird.f32 %v237
      %vm405 = vweird.f32 %v398
      %vm406 = vmor %vm404, %vm405
      %v407 = vsel %vm406, %v398, %v403
      %v408 = vrsqrt.pop %v238
      %v409 = vmul.f32 %v408, %v238
      %v410 = vmul.f32 %v409, %v408
      %v411 = vmul.f32 0.5, %v410
      %v412 = vsub.f32 1.5, %v411
      %v413 = vmul.f32 %v408, %v412
      %vm414 = vweird.f32 %v238
      %vm415 = vweird.f32 %v408
      %vm416 = vmor %vm414, %vm415
      %v417 = vsel %vm416, %v408, %v413
      %v418 = vrsqrt.pop %v239
      %v419 = vmul.f32 %v418, %v239
      %v420 = vmul.f32 %v419, %v418
      %v421 = vmul.f32 0.5, %v420
      %v422 = vsub.f32 1.5, %v421
      %v423 = vmul.f32 %v418, %v422
      %vm424 = vweird.f32 %v239
      %vm425 = vweird.f32 %v418
      %vm426 = vmor %vm424, %vm425
      %v427 = vsel %vm426, %v418, %v423
      %v428 = vrsqrt.pop %v240
      %v429 = vmul.f32 %v428, %v240
      %v430 = vmul.f32 %v429, %v428
      %v431 = vmul.f32 0.5, %v430
      %v432 = vsub.f32 1.5, %v431
      %v433 = vmul.f32 %v428, %v432
      %vm434 = vweird.f32 %v240
      %vm435 = vweird.f32 %v428
      %vm436 = vmor %vm434, %vm435
      %v437 = vsel %vm436, %v428, %v433
      %v438 = vrsqrt.pop %v241
      %v439 = vmul.f32 %v438, %v241
      %v440 = vmul.f32 %v439, %v438
      %v441 = vmul.f32 0.5, %v440
      %v442 = vsub.f32 1.5, %v441
      %v443 = vmul.f32 %v438, %v442
      %vm444 = vweird.f32 %v241
      %vm445 = vweird.f32 %v438
      %vm446 = vmor %vm444, %vm445
      %v447 = vsel %vm446, %v438, %v443
      %v448 = vrsqrt.pop %v242
      %v449 = vmul.f32 %v448, %v242
      %v450 = vmul.f32 %v449, %v448
      %v451 = vmul.f32 0.5, %v450
      %v452 = vsub.f32 1.5, %v451
      %v453 = vmul.f32 %v448, %v452
      %vm454 = vweird.f32 %v242
      %vm455 = vweird.f32 %v448
      %vm456 = vmor %vm454, %vm455
      %v457 = vsel %vm456, %v448, %v453
      %v458 = vrsqrt.pop %v243
      %v459 = vmul.f32 %v458, %v243
      %v460 = vmul.f32 %v459, %v458
      %v461 = vmul.f32 0.5, %v460
      %v462 = vsub.f32 1.5, %v461
      %v463 = vmul.f32 %v458, %v462
      %vm464 = vweird.f32 %v243
      %vm465 = vweird.f32 %v458
      %vm466 = vmor %vm464, %vm465
      %v467 = vsel %vm466, %v458, %v463
      %v468 = vrsqrt.pop %v244
      %v469 = vmul.f32 %v468, %v244
      %v470 = vmul.f32 %v469, %v468
      %v471 = vmul.f32 0.5, %v470
      %v472 = vsub.f32 1.5, %v471
      %v473 = vmul.f32 %v468, %v472
      %vm474 = vweird.f32 %v244
      %vm475 = vweird.f32 %v468
      %vm476 = vmor %vm474, %vm475
      %v477 = vsel %vm476, %v468, %v473
      %v478 = vrsqrt.pop %v245
      %v479 = vmul.f32 %v478, %v245
      %v480 = vmul.f32 %v479, %v478
      %v481 = vmul.f32 0.5, %v480
      %v482 = vsub.f32 1.5, %v481
      %v483 = vmul.f32 %v478, %v482
      %vm484 = vweird.f32 %v245
      %vm485 = vweird.f32 %v478
      %vm486 = vmor %vm484, %vm485
      %v487 = vsel %vm486, %v478, %v483
      %v488 = vrsqrt.pop %v246
      %v489 = vmul.f32 %v488, %v246
      %v490 = vmul.f32 %v489, %v488
      %v491 = vmul.f32 0.5, %v490
      %v492 = vsub.f32 1.5, %v491
      %v493 = vmul.f32 %v488, %v492
      %vm494 = vweird.f32 %v246
      %vm495 = vweird.f32 %v488
      %vm496 = vmor %vm494, %vm495
      %v497 = vsel %vm496, %v488, %v493
      %v498 = vrsqrt.pop %v247
      %v499 = vmul.f32 %v498, %v247
      %v500 = vmul.f32 %v499, %v498
      %v501 = vmul.f32 0.5, %v500
      %v502 = vsub.f32 1.5, %v501
      %v503 = vmul.f32 %v498, %v502
      %vm504 = vweird.f32 %v247
      %vm505 = vweird.f32 %v498
      %vm506 = vmor %vm504, %vm505
      %v507 = vsel %vm506, %v498, %v503
      %v508 = vmul.f32 %v85, %v257
      %v509 = vmul.f32 %v86, %v267
      %v510 = vmul.f32 %v87, %v277
      %v511 = vmul.f32 %v88, %v287
      %v512 = vmul.f32 %v89, %v297
      %v513 = vmul.f32 %v90, %v307
      %v514 = vmul.f32 %v91, %v317
      %v515 = vmul.f32 %v92, %v327
      %v516 = vmul.f32 %v93, %v337
      %v517 = vmul.f32 %v94, %v347
      %v518 = vmul.f32 %v95, %v357
      %v519 = vmul.f32 %v96, %v367
      %v520 = vmul.f32 %v97, %v377
      %v521 = vmul.f32 %v98, %v387
      %v522 = vmul.f32 %v99, %v397
      %v523 = vmul.f32 %v100, %v407
      %v524 = vmul.f32 %v101, %v417
      %v525 = vmul.f32 %v102, %v427
      %v526 = vmul.f32 %v103, %v437
      %v527 = vmul.f32 %v104, %v447
      %v528 = vmul.f32 %v105, %v457
      %v529 = vmul.f32 %v106, %v467
      %v530 = vmul.f32 %v107, %v477
      %v531 = vmul.f32 %v108, %v487
      %v532 = vmul.f32 %v109, %v497
      %v533 = vmul.f32 %v110, %v507
      %v534 = vpack.c.bf16 %v508, %v508
      %v535 = vpack.c.bf16 %v509, %v509
      %v536 = vpack.c.bf16 %v510, %v510
      %v537 = vpack.c.bf16 %v511, %v511
      %v538 = vpack.c.bf16 %v512, %v512
      %v539 = vpack.c.bf16 %v513, %v513
      %v540 = vpack.c.bf16 %v514, %v514
      %v541 = vpack.c.bf16 %v515, %v515
      %v542 = vpack.c.bf16 %v516, %v516
      %v543 = vpack.c.bf16 %v517, %v517
      %v544 = vpack.c.bf16 %v518, %v518
      %v545 = vpack.c.bf16 %v519, %v519
      %v546 = vpack.c.bf16 %v520, %v520
      %v547 = vpack.c.bf16 %v521, %v521
      %v548 = vpack.c.bf16 %v522, %v522
      %v549 = vpack.c.bf16 %v523, %v523
      %v550 = vpack.c.bf16 %v524, %v524
      %v551 = vpack.c.bf16 %v525, %v525
      %v552 = vpack.c.bf16 %v526, %v526
      %v553 = vpack.c.bf16 %v527, %v527
      %v554 = vpack.c.bf16 %v528, %v528
      %v555 = vpack.c.bf16 %v529, %v529
      %v556 = vpack.c.bf16 %v530, %v530
      %v557 = vpack.c.bf16 %v531, %v531
      %v558 = vpack.c.bf16 %v532, %v532
      %v559 = vpack.c.bf16 %v533, %v533
      %560 = vst [vmem:[#allocation3] sm:$0xf] %v534
      %561 = vst [vmem:[#allocation3 + $0x4] sm:$0xf] %v535
      %562 = vst [vmem:[#allocation3 + $0x8] sm:$0xf] %v536
      %563 = vst [vmem:[#allocation3 + $0xc] sm:$0xf] %v537
      %564 = vst [vmem:[#allocation3 + $0x10] sm:$0xf] %v538
      %565 = vst [vmem:[#allocation3 + $0x14] sm:$0xf] %v539
      %566 = vst [vmem:[#allocation3 + $0x18] sm:$0xf] %v540
      %567 = vst [vmem:[#allocation3 + $0x1c] sm:$0xf] %v541
      %568 = vst [vmem:[#allocation3 + $0x20] sm:$0xf] %v542
      %569 = vst [vmem:[#allocation3 + $0x24] sm:$0xf] %v543
      %570 = vst [vmem:[#allocation3 + $0x28] sm:$0xf] %v544
      %571 = vst [vmem:[#allocation3 + $0x2c] sm:$0xf] %v545
      %572 = vst [vmem:[#allocation3 + $0x30] sm:$0xf] %v546
      %573 = vst [vmem:[#allocation3 + $0x34] sm:$0xf] %v547
      %574 = vst [vmem:[#allocation3 + $0x38] sm:$0xf] %v548
      %575 = vst [vmem:[#allocation3 + $0x3c] sm:$0xf] %v549
      %576 = vst [vmem:[#allocation3 + $0x40] sm:$0xf] %v550
      %577 = vst [vmem:[#allocation3 + $0x44] sm:$0xf] %v551
      %578 = vst [vmem:[#allocation3 + $0x48] sm:$0xf] %v552
      %579 = vst [vmem:[#allocation3 + $0x4c] sm:$0xf] %v553
      %580 = vst [vmem:[#allocation3 + $0x50] sm:$0xf] %v554
      %581 = vst [vmem:[#allocation3 + $0x54] sm:$0xf] %v555
      %582 = vst [vmem:[#allocation3 + $0x58] sm:$0xf] %v556
      %583 = vst [vmem:[#allocation3 + $0x5c] sm:$0xf] %v557
      %584 = vst [vmem:[#allocation3 + $0x60] sm:$0xf] %v558
      %585 = vst [vmem:[#allocation3 + $0x64] sm:$0xf] %v559
      %586 = vst [vmem:[#allocation2] sm:$0xff] %v85
      %587 = vst [vmem:[#allocation2 + $0x8] sm:$0xff] %v86
      %588 = vst [vmem:[#allocation2 + $0x10] sm:$0xff] %v87
      %589 = vst [vmem:[#allocation2 + $0x18] sm:$0xff] %v88
      %590 = vst [vmem:[#allocation2 + $0x20] sm:$0xff] %v89
      %591 = vst [vmem:[#allocation2 + $0x28] sm:$0xff] %v90
      %592 = vst [vmem:[#allocation2 + $0x30] sm:$0xff] %v91
      %593 = vst [vmem:[#allocation2 + $0x38] sm:$0xff] %v92
      %594 = vst [vmem:[#allocation2 + $0x40] sm:$0xff] %v93
      %595 = vst [vmem:[#allocation2 + $0x48] sm:$0xff] %v94
      %596 = vst [vmem:[#allocation2 + $0x50] sm:$0xff] %v95
      %597 = vst [vmem:[#allocation2 + $0x58] sm:$0xff] %v96
      %598 = vst [vmem:[#allocation2 + $0x60] sm:$0xff] %v97
      %599 = vst [vmem:[#allocation2 + $0x68] sm:$0xff] %v98
      %600 = vst [vmem:[#allocation2 + $0x70] sm:$0xff] %v99
      %601 = vst [vmem:[#allocation2 + $0x78] sm:$0xff] %v100
      %602 = vst [vmem:[#allocation2 + $0x80] sm:$0xff] %v101
      %603 = vst [vmem:[#allocation2 + $0x88] sm:$0xff] %v102
      %604 = vst [vmem:[#allocation2 + $0x90] sm:$0xff] %v103
      %605 = vst [vmem:[#allocation2 + $0x98] sm:$0xff] %v104
      %606 = vst [vmem:[#allocation2 + $0xa0] sm:$0xff] %v105
      %607 = vst [vmem:[#allocation2 + $0xa8] sm:$0xff] %v106
      %608 = vst [vmem:[#allocation2 + $0xb0] sm:$0xff] %v107
      %609 = vst [vmem:[#allocation2 + $0xb8] sm:$0xff] %v108
      %610 = vst [vmem:[#allocation2 + $0xc0] sm:$0xff] %v109
      %611 = vst [vmem:[#allocation2 + $0xc8] sm:$0xff] %v110
    $region37: #{tpu_custom_call.1} parent=1 // pred_fallthru
      _
    %v612 = vld [vmem:[#allocation3] sm:$0xf]
    %v613 = vld [vmem:[#allocation3 + $0x4] sm:$0xf]
    %v614 = vld [vmem:[#allocation3 + $0x8] sm:$0xf]
    %v615 = vld [vmem:[#allocation3 + $0xc] sm:$0xf]
    %v616 = vld [vmem:[#allocation3 + $0x10] sm:$0xf]
    %v617 = vld [vmem:[#allocation3 + $0x14] sm:$0xf]
    %v618 = vld [vmem:[#allocation3 + $0x18] sm:$0xf]
    %v619 = vld [vmem:[#allocation3 + $0x1c] sm:$0xf]
    %v620 = vld [vmem:[#allocation3 + $0x20] sm:$0xf]
    %v621 = vld [vmem:[#allocation3 + $0x24] sm:$0xf]
    %v622 = vld [vmem:[#allocation3 + $0x28] sm:$0xf]
    %v623 = vld [vmem:[#allocation3 + $0x2c] sm:$0xf]
    %v624 = vld [vmem:[#allocation3 + $0x30] sm:$0xf]
    %v625 = vld [vmem:[#allocation3 + $0x34] sm:$0xf]
    %v626 = vld [vmem:[#allocation3 + $0x38] sm:$0xf]
    %v627 = vld [vmem:[#allocation3 + $0x3c] sm:$0xf]
    %v628 = vld [vmem:[#allocation3 + $0x40] sm:$0xf]
    %v629 = vld [vmem:[#allocation3 + $0x44] sm:$0xf]
    %v630 = vld [vmem:[#allocation3 + $0x48] sm:$0xf]
    %v631 = vld [vmem:[#allocation3 + $0x4c] sm:$0xf]
    %v632 = vld [vmem:[#allocation3 + $0x50] sm:$0xf]
    %v633 = vld [vmem:[#allocation3 + $0x54] sm:$0xf]
    %v634 = vld [vmem:[#allocation3 + $0x58] sm:$0xf]
    %v635 = vld [vmem:[#allocation3 + $0x5c] sm:$0xf]
    %v636 = vld [vmem:[#allocation3 + $0x60] sm:$0xf]
    %v637 = vld [vmem:[#allocation3 + $0x64] sm:$0xf]
    %v638 = vld [vmem:[#allocation7] sm:$0xff]
    %v639 = vld [vmem:[#allocation7 + $0x8] sm:$0xff]
    %v640 = vld [vmem:[#allocation7 + $0x10] sm:$0xff]
    %v641 = vld [vmem:[#allocation7 + $0x18] sm:$0xff]
    %v642 = vld [vmem:[#allocation7 + $0x20] sm:$0xff]
    %v643 = vld [vmem:[#allocation7 + $0x28] sm:$0xff]
    %v644 = vld [vmem:[#allocation7 + $0x30] sm:$0xff]
    %v645 = vld [vmem:[#allocation7 + $0x38] sm:$0xff]
    %v646 = vld [vmem:[#allocation7 + $0x40] sm:$0xff]
    %v647 = vld [vmem:[#allocation7 + $0x48] sm:$0xff]
    %v648 = vld [vmem:[#allocation7 + $0x50] sm:$0xff]
    %v649 = vld [vmem:[#allocation7 + $0x58] sm:$0xff]
    %v650 = vld [vmem:[#allocation7 + $0x60] sm:$0xff]
    %v651 = vld [vmem:[#allocation7 + $0x68] sm:$0xff]
    %v652 = vld [vmem:[#allocation7 + $0x70] sm:$0xff]
    %v653 = vld [vmem:[#allocation7 + $0x78] sm:$0xff]
    %v680 = vunpack.c.l.b16 %v612
    %v681 = vunpack.c.l.b16 %v613
    %v682 = vunpack.c.l.b16 %v614
    %v683 = vunpack.c.l.b16 %v615
    %v684 = vunpack.c.l.b16 %v616
    %v685 = vunpack.c.l.b16 %v617
    %v686 = vunpack.c.l.b16 %v618
    %v687 = vunpack.c.l.b16 %v619
    %v688 = vunpack.c.l.b16 %v620
    %v689 = vunpack.c.l.b16 %v621
    %v690 = vunpack.c.l.b16 %v622
    %v691 = vunpack.c.l.b16 %v623
    %v692 = vunpack.c.l.b16 %v624
    %v693 = vunpack.c.l.b16 %v625
    %v694 = vunpack.c.l.b16 %v626
    %v695 = vunpack.c.l.b16 %v627
    %v696 = vunpack.c.l.b16 %v628
    %v697 = vunpack.c.l.b16 %v629
    %v698 = vunpack.c.l.b16 %v630
    %v699 = vunpack.c.l.b16 %v631
    %v700 = vunpack.c.l.b16 %v632
    %v701 = vunpack.c.l.b16 %v633
    %v702 = vunpack.c.l.b16 %v634
    %v703 = vunpack.c.l.b16 %v635
    %v704 = vunpack.c.l.b16 %v636
    %v705 = vunpack.c.l.b16 %v637
    %v706 = vpack.c.b16 %v681, %v680
    %v707 = vpack.c.b16 %v683, %v682
    %v708 = vpack.c.b16 %v685, %v684
    %v709 = vpack.c.b16 %v687, %v686
    %v710 = vpack.c.b16 %v689, %v688
    %v711 = vpack.c.b16 %v691, %v690
    %v712 = vpack.c.b16 %v693, %v692
    %v713 = vpack.c.b16 %v695, %v694
    %v714 = vpack.c.b16 %v697, %v696
    %v715 = vpack.c.b16 %v699, %v698
    %v716 = vpack.c.b16 %v701, %v700
    %v717 = vpack.c.b16 %v703, %v702
    %v718 = vpack.c.b16 %v705, %v704
    %v748 = vunpack.c.l.b16 %v638
    %v749 = vunpack.c.h.b16 %v638
    %v750 = vunpack.c.l.b16 %v639
    %v751 = vunpack.c.h.b16 %v639
    %v752 = vunpack.c.l.b16 %v640
    %v753 = vunpack.c.h.b16 %v640
    %v754 = vunpack.c.l.b16 %v641
    %v755 = vunpack.c.h.b16 %v641
    %v756 = vunpack.c.l.b16 %v642
    %v757 = vunpack.c.h.b16 %v642
    %v758 = vunpack.c.l.b16 %v643
    %v759 = vunpack.c.h.b16 %v643
    %v760 = vunpack.c.l.b16 %v644
    %v761 = vunpack.c.h.b16 %v644
    %v762 = vunpack.c.l.b16 %v645
    %v763 = vunpack.c.h.b16 %v645
    %v764 = vunpack.c.l.b16 %v646
    %v765 = vunpack.c.h.b16 %v646
    %v766 = vunpack.c.l.b16 %v647
    %v767 = vunpack.c.h.b16 %v647
    %v768 = vunpack.c.l.b16 %v648
    %v769 = vunpack.c.h.b16 %v648
    %v770 = vunpack.c.l.b16 %v649
    %v771 = vunpack.c.h.b16 %v649
    %v772 = vunpack.c.l.b16 %v650
    %v773 = vunpack.c.h.b16 %v650
    %v774 = vunpack.c.l.b16 %v651
    %v775 = vunpack.c.h.b16 %v651
    %v776 = vunpack.c.l.b16 %v652
    %v777 = vunpack.c.h.b16 %v652
    %v778 = vunpack.c.l.b16 %v653
    %v779 = vunpack.c.h.b16 %v653
    %v780 = vpack.c.b16 %v750, %v748
    %v781 = vpack.c.b16 %v751, %v749
    %v782 = vpack.c.b16 %v754, %v752
    %v783 = vpack.c.b16 %v755, %v753
    %v784 = vpack.c.b16 %v758, %v756
    %v785 = vpack.c.b16 %v759, %v757
    %v786 = vpack.c.b16 %v762, %v760
    %v787 = vpack.c.b16 %v763, %v761
    %v788 = vpack.c.b16 %v766, %v764
    %v789 = vpack.c.b16 %v767, %v765
    %v790 = vpack.c.b16 %v770, %v768
    %v791 = vpack.c.b16 %v771, %v769
    %v792 = vpack.c.b16 %v774, %v772
    %v793 = vpack.c.b16 %v775, %v773
    %v794 = vpack.c.b16 %v778, %v776
    %v795 = vpack.c.b16 %v779, %v777
    %812 = vmatpush.bf16.msra.mxu0 %v794
    %813 = vmatpush.bf16.msra.mxu0 %v792
    %814 = vmatpush.bf16.msra.mxu0 %v790
    %815 = vmatpush.bf16.msra.mxu0 %v788
    %816 = vmatpush.bf16.msra.mxu0 %v786
    %817 = vmatpush.bf16.msra.mxu0 %v784
    %818 = vmatpush.bf16.msra.mxu0 %v782
    %819 = vmatpush.bf16.msra.mxu0 %v780
    %820 = vmatmul.bf16.gmra.mxu0 %v706
    %v821 = vpop.f32.mrf.mxu0
    %v822 = vadd.f32 0.0, %v821
    %v823 = vpop.f32.mrf.mxu0
    %v824 = vadd.f32 0.0, %v823
    %825 = vmatmul.bf16.gmra.mxu0 %v707
    %v826 = vpop.f32.mrf.mxu0
    %v827 = vadd.f32 0.0, %v826
    %v828 = vpop.f32.mrf.mxu0
    %v829 = vadd.f32 0.0, %v828
    %830 = vmatmul.bf16.gmra.mxu0 %v708
    %v831 = vpop.f32.mrf.mxu0
    %v832 = vadd.f32 0.0, %v831
    %v833 = vpop.f32.mrf.mxu0
    %v834 = vadd.f32 0.0, %v833
    %835 = vmatmul.bf16.gmra.mxu0 %v709
    %v836 = vpop.f32.mrf.mxu0
    %v837 = vadd.f32 0.0, %v836
    %v838 = vpop.f32.mrf.mxu0
    %v839 = vadd.f32 0.0, %v838
    %840 = vmatmul.bf16.gmra.mxu0 %v710
    %v841 = vpop.f32.mrf.mxu0
    %v842 = vadd.f32 0.0, %v841
    %v843 = vpop.f32.mrf.mxu0
    %v844 = vadd.f32 0.0, %v843
    %845 = vmatmul.bf16.gmra.mxu0 %v711
    %v846 = vpop.f32.mrf.mxu0
    %v847 = vadd.f32 0.0, %v846
    %v848 = vpop.f32.mrf.mxu0
    %v849 = vadd.f32 0.0, %v848
    %850 = vmatmul.bf16.gmra.mxu0 %v712
    %v851 = vpop.f32.mrf.mxu0
    %v852 = vadd.f32 0.0, %v851
    %v853 = vpop.f32.mrf.mxu0
    %v854 = vadd.f32 0.0, %v853
    %855 = vmatmul.bf16.gmra.mxu0 %v713
    %v856 = vpop.f32.mrf.mxu0
    %v857 = vadd.f32 0.0, %v856
    %v858 = vpop.f32.mrf.mxu0
    %v859 = vadd.f32 0.0, %v858
    %860 = vmatmul.bf16.gmra.mxu0 %v714
    %v861 = vpop.f32.mrf.mxu0
    %v862 = vadd.f32 0.0, %v861
    %v863 = vpop.f32.mrf.mxu0
    %v864 = vadd.f32 0.0, %v863
    %865 = vmatmul.bf16.gmra.mxu0 %v715
    %v866 = vpop.f32.mrf.mxu0
    %v867 = vadd.f32 0.0, %v866
    %v868 = vpop.f32.mrf.mxu0
    %v869 = vadd.f32 0.0, %v868
    %870 = vmatmul.bf16.gmra.mxu0 %v716
    %v871 = vpop.f32.mrf.mxu0
    %v872 = vadd.f32 0.0, %v871
    %v873 = vpop.f32.mrf.mxu0
    %v874 = vadd.f32 0.0, %v873
    %875 = vmatmul.bf16.gmra.mxu0 %v717
    %v876 = vpop.f32.mrf.mxu0
    %v877 = vadd.f32 0.0, %v876
    %v878 = vpop.f32.mrf.mxu0
    %v879 = vadd.f32 0.0, %v878
    %880 = vmatmul.bf16.gmra.mxu0 %v718
    %v881 = vpop.f32.mrf.mxu0
    %v882 = vadd.f32 0.0, %v881
    %v883 = vpop.f32.mrf.mxu0
    %v884 = vadd.f32 0.0, %v883
    %885 = vdwg.mxu0
    %886 = vmatpush.bf16.msra.mxu0 %v795
    %887 = vmatpush.bf16.msra.mxu0 %v793
    %888 = vmatpush.bf16.msra.mxu0 %v791
    %889 = vmatpush.bf16.msra.mxu0 %v789
    %890 = vmatpush.bf16.msra.mxu0 %v787
    %891 = vmatpush.bf16.msra.mxu0 %v785
    %892 = vmatpush.bf16.msra.mxu0 %v783
    %893 = vmatpush.bf16.msra.mxu0 %v781
    %894 = vmatmul.bf16.gmra.mxu0 %v706
    %v895 = vpop.f32.mrf.mxu0
    %v896 = vadd.f32 0.0, %v895
    %v897 = vpop.f32.mrf.mxu0
    %v898 = vadd.f32 0.0, %v897
    %899 = vmatmul.bf16.gmra.mxu0 %v707
    %v900 = vpop.f32.mrf.mxu0
    %v901 = vadd.f32 0.0, %v900
    %v902 = vpop.f32.mrf.mxu0
    %v903 = vadd.f32 0.0, %v902
    %904 = vmatmul.bf16.gmra.mxu0 %v708
    %v905 = vpop.f32.mrf.mxu0
    %v906 = vadd.f32 0.0, %v905
    %v907 = vpop.f32.mrf.mxu0
    %v908 = vadd.f32 0.0, %v907
    %909 = vmatmul.bf16.gmra.mxu0 %v709
    %v910 = vpop.f32.mrf.mxu0
    %v911 = vadd.f32 0.0, %v910
    %v912 = vpop.f32.mrf.mxu0
    %v913 = vadd.f32 0.0, %v912
    %914 = vmatmul.bf16.gmra.mxu0 %v710
    %v915 = vpop.f32.mrf.mxu0
    %v916 = vadd.f32 0.0, %v915
    %v917 = vpop.f32.mrf.mxu0
    %v918 = vadd.f32 0.0, %v917
    %919 = vmatmul.bf16.gmra.mxu0 %v711
    %v920 = vpop.f32.mrf.mxu0
    %v921 = vadd.f32 0.0, %v920
    %v922 = vpop.f32.mrf.mxu0
    %v923 = vadd.f32 0.0, %v922
    %924 = vmatmul.bf16.gmra.mxu0 %v712
    %v925 = vpop.f32.mrf.mxu0
    %v926 = vadd.f32 0.0, %v925
    %v927 = vpop.f32.mrf.mxu0
    %v928 = vadd.f32 0.0, %v927
    %929 = vmatmul.bf16.gmra.mxu0 %v713
    %v930 = vpop.f32.mrf.mxu0
    %v931 = vadd.f32 0.0, %v930
    %v932 = vpop.f32.mrf.mxu0
    %v933 = vadd.f32 0.0, %v932
    %934 = vmatmul.bf16.gmra.mxu0 %v714
    %v935 = vpop.f32.mrf.mxu0
    %v936 = vadd.f32 0.0, %v935
    %v937 = vpop.f32.mrf.mxu0
    %v938 = vadd.f32 0.0, %v937
    %939 = vmatmul.bf16.gmra.mxu0 %v715
    %v940 = vpop.f32.mrf.mxu0
    %v941 = vadd.f32 0.0, %v940
    %v942 = vpop.f32.mrf.mxu0
    %v943 = vadd.f32 0.0, %v942
    %944 = vmatmul.bf16.gmra.mxu0 %v716
    %v945 = vpop.f32.mrf.mxu0
    %v946 = vadd.f32 0.0, %v945
    %v947 = vpop.f32.mrf.mxu0
    %v948 = vadd.f32 0.0, %v947
    %949 = vmatmul.bf16.gmra.mxu0 %v717
    %v950 = vpop.f32.mrf.mxu0
    %v951 = vadd.f32 0.0, %v950
    %v952 = vpop.f32.mrf.mxu0
    %v953 = vadd.f32 0.0, %v952
    %954 = vmatmul.bf16.gmra.mxu0 %v718
    %v955 = vpop.f32.mrf.mxu0
    %v956 = vadd.f32 0.0, %v955
    %v957 = vpop.f32.mrf.mxu0
    %v958 = vadd.f32 0.0, %v957
    %959 = vdwg.mxu0
    %v960 = vld [vmem:[#allocation9] sm:$0xff]
    %v961 = vld [vmem:[#allocation9 + $0x8] sm:$0xff]
    %v962 = vld [vmem:[#allocation9 + $0x10] sm:$0xff]
    %v963 = vld [vmem:[#allocation9 + $0x18] sm:$0xff]
    %v964 = vld [vmem:[#allocation9 + $0x20] sm:$0xff]
    %v965 = vld [vmem:[#allocation9 + $0x28] sm:$0xff]
    %v966 = vld [vmem:[#allocation9 + $0x30] sm:$0xff]
    %v967 = vld [vmem:[#allocation9 + $0x38] sm:$0xff]
    %v968 = vld [vmem:[#allocation9 + $0x40] sm:$0xff]
    %v969 = vld [vmem:[#allocation9 + $0x48] sm:$0xff]
    %v970 = vld [vmem:[#allocation9 + $0x50] sm:$0xff]
    %v971 = vld [vmem:[#allocation9 + $0x58] sm:$0xff]
    %v972 = vld [vmem:[#allocation9 + $0x60] sm:$0xff]
    %v973 = vld [vmem:[#allocation9 + $0x68] sm:$0xff]
    %v974 = vld [vmem:[#allocation9 + $0x70] sm:$0xff]
    %v975 = vld [vmem:[#allocation9 + $0x78] sm:$0xff]
    %v992 = vunpack.c.l.b16 %v960
    %v993 = vunpack.c.h.b16 %v960
    %v994 = vunpack.c.l.b16 %v961
    %v995 = vunpack.c.h.b16 %v961
    %v996 = vunpack.c.l.b16 %v962
    %v997 = vunpack.c.h.b16 %v962
    %v998 = vunpack.c.l.b16 %v963
    %v999 = vunpack.c.h.b16 %v963
    %v1000 = vunpack.c.l.b16 %v964
    %v1001 = vunpack.c.h.b16 %v964
    %v1002 = vunpack.c.l.b16 %v965
    %v1003 = vunpack.c.h.b16 %v965
    %v1004 = vunpack.c.l.b16 %v966
    %v1005 = vunpack.c.h.b16 %v966
    %v1006 = vunpack.c.l.b16 %v967
    %v1007 = vunpack.c.h.b16 %v967
    %v1008 = vunpack.c.l.b16 %v968
    %v1009 = vunpack.c.h.b16 %v968
    %v1010 = vunpack.c.l.b16 %v969
    %v1011 = vunpack.c.h.b16 %v969
    %v1012 = vunpack.c.l.b16 %v970
    %v1013 = vunpack.c.h.b16 %v970
    %v1014 = vunpack.c.l.b16 %v971
    %v1015 = vunpack.c.h.b16 %v971
    %v1016 = vunpack.c.l.b16 %v972
    %v1017 = vunpack.c.h.b16 %v972
    %v1018 = vunpack.c.l.b16 %v973
    %v1019 = vunpack.c.h.b16 %v973
    %v1020 = vunpack.c.l.b16 %v974
    %v1021 = vunpack.c.h.b16 %v974
    %v1022 = vunpack.c.l.b16 %v975
    %v1023 = vunpack.c.h.b16 %v975
    %v1024 = vpack.c.b16 %v994, %v992
    %v1025 = vpack.c.b16 %v995, %v993
    %v1026 = vpack.c.b16 %v998, %v996
    %v1027 = vpack.c.b16 %v999, %v997
    %v1028 = vpack.c.b16 %v1002, %v1000
    %v1029 = vpack.c.b16 %v1003, %v1001
    %v1030 = vpack.c.b16 %v1006, %v1004
    %v1031 = vpack.c.b16 %v1007, %v1005
    %v1032 = vpack.c.b16 %v1010, %v1008
    %v1033 = vpack.c.b16 %v1011, %v1009
    %v1034 = vpack.c.b16 %v1014, %v1012
    %v1035 = vpack.c.b16 %v1015, %v1013
    %v1036 = vpack.c.b16 %v1018, %v1016
    %v1037 = vpack.c.b16 %v1019, %v1017
    %v1038 = vpack.c.b16 %v1022, %v1020
    %v1039 = vpack.c.b16 %v1023, %v1021
    %1056 = vmatpush.bf16.msra.mxu0 %v1038
    %1057 = vmatpush.bf16.msra.mxu0 %v1036
    %1058 = vmatpush.bf16.msra.mxu0 %v1034
    %1059 = vmatpush.bf16.msra.mxu0 %v1032
    %1060 = vmatpush.bf16.msra.mxu0 %v1030
    %1061 = vmatpush.bf16.msra.mxu0 %v1028
    %1062 = vmatpush.bf16.msra.mxu0 %v1026
    %1063 = vmatpush.bf16.msra.mxu0 %v1024
    %1064 = vmatmul.bf16.gmra.mxu0 %v706
    %v1065 = vpop.f32.mrf.mxu0
    %v1066 = vadd.f32 0.0, %v1065
    %v1067 = vpop.f32.mrf.mxu0
    %v1068 = vadd.f32 0.0, %v1067
    %1069 = vmatmul.bf16.gmra.mxu0 %v707
    %v1070 = vpop.f32.mrf.mxu0
    %v1071 = vadd.f32 0.0, %v1070
    %v1072 = vpop.f32.mrf.mxu0
    %v1073 = vadd.f32 0.0, %v1072
    %1074 = vmatmul.bf16.gmra.mxu0 %v708
    %v1075 = vpop.f32.mrf.mxu0
    %v1076 = vadd.f32 0.0, %v1075
    %v1077 = vpop.f32.mrf.mxu0
    %v1078 = vadd.f32 0.0, %v1077
    %1079 = vmatmul.bf16.gmra.mxu0 %v709
    %v1080 = vpop.f32.mrf.mxu0
    %v1081 = vadd.f32 0.0, %v1080
    %v1082 = vpop.f32.mrf.mxu0
    %v1083 = vadd.f32 0.0, %v1082
    %1084 = vmatmul.bf16.gmra.mxu0 %v710
    %v1085 = vpop.f32.mrf.mxu0
    %v1086 = vadd.f32 0.0, %v1085
    %v1087 = vpop.f32.mrf.mxu0
    %v1088 = vadd.f32 0.0, %v1087
    %1089 = vmatmul.bf16.gmra.mxu0 %v711
    %v1090 = vpop.f32.mrf.mxu0
    %v1091 = vadd.f32 0.0, %v1090
    %v1092 = vpop.f32.mrf.mxu0
    %v1093 = vadd.f32 0.0, %v1092
    %1094 = vmatmul.bf16.gmra.mxu0 %v712
    %v1095 = vpop.f32.mrf.mxu0
    %v1096 = vadd.f32 0.0, %v1095
    %v1097 = vpop.f32.mrf.mxu0
    %v1098 = vadd.f32 0.0, %v1097
    %1099 = vmatmul.bf16.gmra.mxu0 %v713
    %v1100 = vpop.f32.mrf.mxu0
    %v1101 = vadd.f32 0.0, %v1100
    %v1102 = vpop.f32.mrf.mxu0
    %v1103 = vadd.f32 0.0, %v1102
    %1104 = vmatmul.bf16.gmra.mxu0 %v714
    %v1105 = vpop.f32.mrf.mxu0
    %v1106 = vadd.f32 0.0, %v1105
    %v1107 = vpop.f32.mrf.mxu0
    %v1108 = vadd.f32 0.0, %v1107
    %1109 = vmatmul.bf16.gmra.mxu0 %v715
    %v1110 = vpop.f32.mrf.mxu0
    %v1111 = vadd.f32 0.0, %v1110
    %v1112 = vpop.f32.mrf.mxu0
    %v1113 = vadd.f32 0.0, %v1112
    %1114 = vmatmul.bf16.gmra.mxu0 %v716
    %v1115 = vpop.f32.mrf.mxu0
    %v1116 = vadd.f32 0.0, %v1115
    %v1117 = vpop.f32.mrf.mxu0
    %v1118 = vadd.f32 0.0, %v1117
    %1119 = vmatmul.bf16.gmra.mxu0 %v717
    %v1120 = vpop.f32.mrf.mxu0
    %v1121 = vadd.f32 0.0, %v1120
    %v1122 = vpop.f32.mrf.mxu0
    %v1123 = vadd.f32 0.0, %v1122
    %1124 = vmatmul.bf16.gmra.mxu0 %v718
    %v1125 = vpop.f32.mrf.mxu0
    %v1126 = vadd.f32 0.0, %v1125
    %v1127 = vpop.f32.mrf.mxu0
    %v1128 = vadd.f32 0.0, %v1127
    %1129 = vdwg.mxu0
    %1130 = vmatpush.bf16.msra.mxu0 %v1039
    %1131 = vmatpush.bf16.msra.mxu0 %v1037
    %1132 = vmatpush.bf16.msra.mxu0 %v1035
    %1133 = vmatpush.bf16.msra.mxu0 %v1033
    %1134 = vmatpush.bf16.msra.mxu0 %v1031
    %1135 = vmatpush.bf16.msra.mxu0 %v1029
    %1136 = vmatpush.bf16.msra.mxu0 %v1027
    %1137 = vmatpush.bf16.msra.mxu0 %v1025
    %1138 = vmatmul.bf16.gmra.mxu0 %v706
    %v1139 = vpop.f32.mrf.mxu0
    %v1140 = vadd.f32 0.0, %v1139
    %v1141 = vpop.f32.mrf.mxu0
    %v1142 = vadd.f32 0.0, %v1141
    %1143 = vmatmul.bf16.gmra.mxu0 %v707
    %v1144 = vpop.f32.mrf.mxu0
    %v1145 = vadd.f32 0.0, %v1144
    %v1146 = vpop.f32.mrf.mxu0
    %v1147 = vadd.f32 0.0, %v1146
    %1148 = vmatmul.bf16.gmra.mxu0 %v708
    %v1149 = vpop.f32.mrf.mxu0
    %v1150 = vadd.f32 0.0, %v1149
    %v1151 = vpop.f32.mrf.mxu0
    %v1152 = vadd.f32 0.0, %v1151
    %1153 = vmatmul.bf16.gmra.mxu0 %v709
    %v1154 = vpop.f32.mrf.mxu0
    %v1155 = vadd.f32 0.0, %v1154
    %v1156 = vpop.f32.mrf.mxu0
    %v1157 = vadd.f32 0.0, %v1156
    %1158 = vmatmul.bf16.gmra.mxu0 %v710
    %v1159 = vpop.f32.mrf.mxu0
    %v1160 = vadd.f32 0.0, %v1159
    %v1161 = vpop.f32.mrf.mxu0
    %v1162 = vadd.f32 0.0, %v1161
    %1163 = vmatmul.bf16.gmra.mxu0 %v711
    %v1164 = vpop.f32.mrf.mxu0
    %v1165 = vadd.f32 0.0, %v1164
    %v1166 = vpop.f32.mrf.mxu0
    %v1167 = vadd.f32 0.0, %v1166
    %1168 = vmatmul.bf16.gmra.mxu0 %v712
    %v1169 = vpop.f32.mrf.mxu0
    %v1170 = vadd.f32 0.0, %v1169
    %v1171 = vpop.f32.mrf.mxu0
    %v1172 = vadd.f32 0.0, %v1171
    %1173 = vmatmul.bf16.gmra.mxu0 %v713
    %v1174 = vpop.f32.mrf.mxu0
    %v1175 = vadd.f32 0.0, %v1174
    %v1176 = vpop.f32.mrf.mxu0
    %v1177 = vadd.f32 0.0, %v1176
    %1178 = vmatmul.bf16.gmra.mxu0 %v714
    %v1179 = vpop.f32.mrf.mxu0
    %v1180 = vadd.f32 0.0, %v1179
    %v1181 = vpop.f32.mrf.mxu0
    %v1182 = vadd.f32 0.0, %v1181
    %1183 = vmatmul.bf16.gmra.mxu0 %v715
    %v1184 = vpop.f32.mrf.mxu0
    %v1185 = vadd.f32 0.0, %v1184
    %v1186 = vpop.f32.mrf.mxu0
    %v1187 = vadd.f32 0.0, %v1186
    %1188 = vmatmul.bf16.gmra.mxu0 %v716
    %v1189 = vpop.f32.mrf.mxu0
    %v1190 = vadd.f32 0.0, %v1189
    %v1191 = vpop.f32.mrf.mxu0
    %v1192 = vadd.f32 0.0, %v1191
    %1193 = vmatmul.bf16.gmra.mxu0 %v717
    %v1194 = vpop.f32.mrf.mxu0
    %v1195 = vadd.f32 0.0, %v1194
    %v1196 = vpop.f32.mrf.mxu0
    %v1197 = vadd.f32 0.0, %v1196
    %1198 = vmatmul.bf16.gmra.mxu0 %v718
    %v1199 = vpop.f32.mrf.mxu0
    %v1200 = vadd.f32 0.0, %v1199
    %v1201 = vpop.f32.mrf.mxu0
    %v1202 = vadd.f32 0.0, %v1201
    %1203 = vdwg.mxu0
    %v1204 = vmul.f32 %v1066, 0.5
    %v1205 = vmul.f32 %v1140, 0.5
    %v1206 = vmul.f32 %v1068, 0.5
    %v1207 = vmul.f32 %v1142, 0.5
    %v1208 = vmul.f32 %v1071, 0.5
    %v1209 = vmul.f32 %v1145, 0.5
    %v1210 = vmul.f32 %v1073, 0.5
    %v1211 = vmul.f32 %v1147, 0.5
    %v1212 = vmul.f32 %v1076, 0.5
    %v1213 = vmul.f32 %v1150, 0.5
    %v1214 = vmul.f32 %v1078, 0.5
    %v1215 = vmul.f32 %v1152, 0.5
    %v1216 = vmul.f32 %v1081, 0.5
    %v1217 = vmul.f32 %v1155, 0.5
    %v1218 = vmul.f32 %v1083, 0.5
    %v1219 = vmul.f32 %v1157, 0.5
    %v1220 = vmul.f32 %v1086, 0.5
    %v1221 = vmul.f32 %v1160, 0.5
    %v1222 = vmul.f32 %v1088, 0.5
    %v1223 = vmul.f32 %v1162, 0.5
    %v1224 = vmul.f32 %v1091, 0.5
    %v1225 = vmul.f32 %v1165, 0.5
    %v1226 = vmul.f32 %v1093, 0.5
    %v1227 = vmul.f32 %v1167, 0.5
    %v1228 = vmul.f32 %v1096, 0.5
    %v1229 = vmul.f32 %v1170, 0.5
    %v1230 = vmul.f32 %v1098, 0.5
    %v1231 = vmul.f32 %v1172, 0.5
    %v1232 = vmul.f32 %v1101, 0.5
    %v1233 = vmul.f32 %v1175, 0.5
    %v1234 = vmul.f32 %v1103, 0.5
    %v1235 = vmul.f32 %v1177, 0.5
    %v1236 = vmul.f32 %v1106, 0.5
    %v1237 = vmul.f32 %v1180, 0.5
    %v1238 = vmul.f32 %v1108, 0.5
    %v1239 = vmul.f32 %v1182, 0.5
    %v1240 = vmul.f32 %v1111, 0.5
    %v1241 = vmul.f32 %v1185, 0.5
    %v1242 = vmul.f32 %v1113, 0.5
    %v1243 = vmul.f32 %v1187, 0.5
    %v1244 = vmul.f32 %v1116, 0.5
    %v1245 = vmul.f32 %v1190, 0.5
    %v1246 = vmul.f32 %v1118, 0.5
    %v1247 = vmul.f32 %v1192, 0.5
    %v1248 = vmul.f32 %v1121, 0.5
    %v1249 = vmul.f32 %v1195, 0.5
    %v1250 = vmul.f32 %v1123, 0.5
    %v1251 = vmul.f32 %v1197, 0.5
    %v1252 = vmul.f32 %v1126, 0.5
    %v1253 = vmul.f32 %v1200, 0.5
    %v1254 = vmul.f32 %v1128, 0.5
    %v1255 = vmul.f32 %v1202, 0.5
    %v1256 = vrcp.pop 1.4142135
    %v1257 = vmul.f32 1.4142135, %v1256
    %v1258 = vsub.f32 1.0, %v1257
    %v1259 = vmul.f32 %v1256, %v1258
    %v1260 = vadd.f32 %v1256, %v1259
    %vm1261 = vweird.f32 %v1256
    %v1262 = vsel %vm1261, %v1256, %v1260
    %v1263 = vmul.f32 %v1066, %v1262
    %v1264 = vmul.f32 %v1140, %v1262
    %v1265 = vmul.f32 %v1068, %v1262
    %v1266 = vmul.f32 %v1142, %v1262
    %v1267 = vmul.f32 %v1071, %v1262
    %v1268 = vmul.f32 %v1145, %v1262
    %v1269 = vmul.f32 %v1073, %v1262
    %v1270 = vmul.f32 %v1147, %v1262
    %v1271 = vmul.f32 %v1076, %v1262
    %v1272 = vmul.f32 %v1150, %v1262
    %v1273 = vmul.f32 %v1078, %v1262
    %v1274 = vmul.f32 %v1152, %v1262
    %v1275 = vmul.f32 %v1081, %v1262
    %v1276 = vmul.f32 %v1155, %v1262
    %v1277 = vmul.f32 %v1083, %v1262
    %v1278 = vmul.f32 %v1157, %v1262
    %v1279 = vmul.f32 %v1086, %v1262
    %v1280 = vmul.f32 %v1160, %v1262
    %v1281 = vmul.f32 %v1088, %v1262
    %v1282 = vmul.f32 %v1162, %v1262
    %v1283 = vmul.f32 %v1091, %v1262
    %v1284 = vmul.f32 %v1165, %v1262
    %v1285 = vmul.f32 %v1093, %v1262
    %v1286 = vmul.f32 %v1167, %v1262
    %v1287 = vmul.f32 %v1096, %v1262
    %v1288 = vmul.f32 %v1170, %v1262
    %v1289 = vmul.f32 %v1098, %v1262
    %v1290 = vmul.f32 %v1172, %v1262
    %v1291 = vmul.f32 %v1101, %v1262
    %v1292 = vmul.f32 %v1175, %v1262
    %v1293 = vmul.f32 %v1103, %v1262
    %v1294 = vmul.f32 %v1177, %v1262
    %v1295 = vmul.f32 %v1106, %v1262
    %v1296 = vmul.f32 %v1180, %v1262
    %v1297 = vmul.f32 %v1108, %v1262
    %v1298 = vmul.f32 %v1182, %v1262
    %v1299 = vmul.f32 %v1111, %v1262
    %v1300 = vmul.f32 %v1185, %v1262
    %v1301 = vmul.f32 %v1113, %v1262
    %v1302 = vmul.f32 %v1187, %v1262
    %v1303 = vmul.f32 %v1116, %v1262
    %v1304 = vmul.f32 %v1190, %v1262
    %v1305 = vmul.f32 %v1118, %v1262
    %v1306 = vmul.f32 %v1192, %v1262
    %v1307 = vmul.f32 %v1121, %v1262
    %v1308 = vmul.f32 %v1195, %v1262
    %v1309 = vmul.f32 %v1123, %v1262
    %v1310 = vmul.f32 %v1197, %v1262
    %v1311 = vmul.f32 %v1126, %v1262
    %v1312 = vmul.f32 %v1200, %v1262
    %v1313 = vmul.f32 %v1128, %v1262
    %v1314 = vmul.f32 %v1202, %v1262
    %v1315 = vmul.f32 %v1263, %v1263
    %v1316 = vmin.f32 16.0, %v1315
    %v1317 = vmul.f32 %v1316, 2.1237322e-06
    %v1318 = vadd.f32 %v1317, 0.00028619796
    %v1319 = vmul.f32 %v1316, %v1318
    %v1320 = vadd.f32 %v1319, 0.0036580483
    %v1321 = vmul.f32 %v1316, %v1320
    %v1322 = vadd.f32 %v1321, 0.05243302
    %v1323 = vmul.f32 %v1316, %v1322
    %v1324 = vadd.f32 %v1323, 0.18741608
    %v1325 = vmul.f32 %v1316, %v1324
    %v1326 = vadd.f32 %v1325, 1.1283791
    %v1327 = vmul.f32 %v1263, %v1326
    %v1328 = vmul.f32 %v1316, 3.8918573e-05
    %v1329 = vadd.f32 %v1328, 0.001143296
    %v1330 = vmul.f32 %v1316, %v1329
    %v1331 = vadd.f32 %v1330, 0.014752088
    %v1332 = vmul.f32 %v1316, %v1331
    %v1333 = vadd.f32 %v1332, 0.112945676
    %v1334 = vmul.f32 %v1316, %v1333
    %v1335 = vadd.f32 %v1334, 0.4994258
    %v1336 = vmul.f32 %v1316, %v1335
    %v1337 = vadd.f32 %v1336, 1.0
    %v1338 = vrcp.pop %v1337
    %v1339 = vmul.f32 %v1337, %v1338
    %v1340 = vsub.f32 1.0, %v1339
    %v1341 = vmul.f32 %v1338, %v1340
    %v1342 = vadd.f32 %v1338, %v1341
    %vm1343 = vweird.f32 %v1337
    %vm1344 = vweird.f32 %v1338
    %vm1345 = vmor %vm1343, %vm1344
    %v1346 = vsel %vm1345, %v1338, %v1342
    %v1347 = vand.u32 2147483647, %v1337
    %vm1348 = vcmp.eq.f32.partialorder %v1347, 8.507059e+37
    %v1349 = vand.u32 %v1337, 2147483648
    %v1350 = vor.u32 1.1754944e-38, %v1349
    %v1351 = vsel %vm1348, %v1350, %v1346
    %v1352 = vmul.f32 %v1327, %v1351
    %v1353 = vmin.f32 %v1352, 1.0
    %v1354 = vmax.f32 %v1353, -1.0
    %v1355 = vmul.f32 %v1264, %v1264
    %v1356 = vmin.f32 16.0, %v1355
    %v1357 = vmul.f32 %v1356, 2.1237322e-06
    %v1358 = vadd.f32 %v1357, 0.00028619796
    %v1359 = vmul.f32 %v1356, %v1358
    %v1360 = vadd.f32 %v1359, 0.0036580483
    %v1361 = vmul.f32 %v1356, %v1360
    %v1362 = vadd.f32 %v1361, 0.05243302
    %v1363 = vmul.f32 %v1356, %v1362
    %v1364 = vadd.f32 %v1363, 0.18741608
    %v1365 = vmul.f32 %v1356, %v1364
    %v1366 = vadd.f32 %v1365, 1.1283791
    %v1367 = vmul.f32 %v1264, %v1366
    %v1368 = vmul.f32 %v1356, 3.8918573e-05
    %v1369 = vadd.f32 %v1368, 0.001143296
    %v1370 = vmul.f32 %v1356, %v1369
    %v1371 = vadd.f32 %v1370, 0.014752088
    %v1372 = vmul.f32 %v1356, %v1371
    %v1373 = vadd.f32 %v1372, 0.112945676
    %v1374 = vmul.f32 %v1356, %v1373
    %v1375 = vadd.f32 %v1374, 0.4994258
    %v1376 = vmul.f32 %v1356, %v1375
    %v1377 = vadd.f32 %v1376, 1.0
    %v1378 = vrcp.pop %v1377
    %v1379 = vmul.f32 %v1377, %v1378
    %v1380 = vsub.f32 1.0, %v1379
    %v1381 = vmul.f32 %v1378, %v1380
    %v1382 = vadd.f32 %v1378, %v1381
    %vm1383 = vweird.f32 %v1377
    %vm1384 = vweird.f32 %v1378
    %vm1385 = vmor %vm1383, %vm1384
    %v1386 = vsel %vm1385, %v1378, %v1382
    %v1387 = vand.u32 2147483647, %v1377
    %vm1388 = vcmp.eq.f32.partialorder %v1387, 8.507059e+37
    %v1389 = vand.u32 %v1377, 2147483648
    %v1390 = vor.u32 1.1754944e-38, %v1389
    %v1391 = vsel %vm1388, %v1390, %v1386
    %v1392 = vmul.f32 %v1367, %v1391
    %v1393 = vmin.f32 %v1392, 1.0
    %v1394 = vmax.f32 %v1393, -1.0
    %v1395 = vmul.f32 %v1265, %v1265
    %v1396 = vmin.f32 16.0, %v1395
    %v1397 = vmul.f32 %v1396, 2.1237322e-06
    %v1398 = vadd.f32 %v1397, 0.00028619796
    %v1399 = vmul.f32 %v1396, %v1398
    %v1400 = vadd.f32 %v1399, 0.0036580483
    %v1401 = vmul.f32 %v1396, %v1400
    %v1402 = vadd.f32 %v1401, 0.05243302
    %v1403 = vmul.f32 %v1396, %v1402
    %v1404 = vadd.f32 %v1403, 0.18741608
    %v1405 = vmul.f32 %v1396, %v1404
    %v1406 = vadd.f32 %v1405, 1.1283791
    %v1407 = vmul.f32 %v1265, %v1406
    %v1408 = vmul.f32 %v1396, 3.8918573e-05
    %v1409 = vadd.f32 %v1408, 0.001143296
    %v1410 = vmul.f32 %v1396, %v1409
    %v1411 = vadd.f32 %v1410, 0.014752088
    %v1412 = vmul.f32 %v1396, %v1411
    %v1413 = vadd.f32 %v1412, 0.112945676
    %v1414 = vmul.f32 %v1396, %v1413
    %v1415 = vadd.f32 %v1414, 0.4994258
    %v1416 = vmul.f32 %v1396, %v1415
    %v1417 = vadd.f32 %v1416, 1.0
    %v1418 = vrcp.pop %v1417
    %v1419 = vmul.f32 %v1417, %v1418
    %v1420 = vsub.f32 1.0, %v1419
    %v1421 = vmul.f32 %v1418, %v1420
    %v1422 = vadd.f32 %v1418, %v1421
    %vm1423 = vweird.f32 %v1417
    %vm1424 = vweird.f32 %v1418
    %vm1425 = vmor %vm1423, %vm1424
    %v1426 = vsel %vm1425, %v1418, %v1422
    %v1427 = vand.u32 2147483647, %v1417
    %vm1428 = vcmp.eq.f32.partialorder %v1427, 8.507059e+37
    %v1429 = vand.u32 %v1417, 2147483648
    %v1430 = vor.u32 1.1754944e-38, %v1429
    %v1431 = vsel %vm1428, %v1430, %v1426
    %v1432 = vmul.f32 %v1407, %v1431
    %v1433 = vmin.f32 %v1432, 1.0
    %v1434 = vmax.f32 %v1433, -1.0
    %v1435 = vmul.f32 %v1266, %v1266
    %v1436 = vmin.f32 16.0, %v1435
    %v1437 = vmul.f32 %v1436, 2.1237322e-06
    %v1438 = vadd.f32 %v1437, 0.00028619796
    %v1439 = vmul.f32 %v1436, %v1438
    %v1440 = vadd.f32 %v1439, 0.0036580483
    %v1441 = vmul.f32 %v1436, %v1440
    %v1442 = vadd.f32 %v1441, 0.05243302
    %v1443 = vmul.f32 %v1436, %v1442
    %v1444 = vadd.f32 %v1443, 0.18741608
    %v1445 = vmul.f32 %v1436, %v1444
    %v1446 = vadd.f32 %v1445, 1.1283791
    %v1447 = vmul.f32 %v1266, %v1446
    %v1448 = vmul.f32 %v1436, 3.8918573e-05
    %v1449 = vadd.f32 %v1448, 0.001143296
    %v1450 = vmul.f32 %v1436, %v1449
    %v1451 = vadd.f32 %v1450, 0.014752088
    %v1452 = vmul.f32 %v1436, %v1451
    %v1453 = vadd.f32 %v1452, 0.112945676
    %v1454 = vmul.f32 %v1436, %v1453
    %v1455 = vadd.f32 %v1454, 0.4994258
    %v1456 = vmul.f32 %v1436, %v1455
    %v1457 = vadd.f32 %v1456, 1.0
    %v1458 = vrcp.pop %v1457
    %v1459 = vmul.f32 %v1457, %v1458
    %v1460 = vsub.f32 1.0, %v1459
    %v1461 = vmul.f32 %v1458, %v1460
    %v1462 = vadd.f32 %v1458, %v1461
    %vm1463 = vweird.f32 %v1457
    %vm1464 = vweird.f32 %v1458
    %vm1465 = vmor %vm1463, %vm1464
    %v1466 = vsel %vm1465, %v1458, %v1462
    %v1467 = vand.u32 2147483647, %v1457
    %vm1468 = vcmp.eq.f32.partialorder %v1467, 8.507059e+37
    %v1469 = vand.u32 %v1457, 2147483648
    %v1470 = vor.u32 1.1754944e-38, %v1469
    %v1471 = vsel %vm1468, %v1470, %v1466
    %v1472 = vmul.f32 %v1447, %v1471
    %v1473 = vmin.f32 %v1472, 1.0
    %v1474 = vmax.f32 %v1473, -1.0
    %v1475 = vmul.f32 %v1267, %v1267
    %v1476 = vmin.f32 16.0, %v1475
    %v1477 = vmul.f32 %v1476, 2.1237322e-06
    %v1478 = vadd.f32 %v1477, 0.00028619796
    %v1479 = vmul.f32 %v1476, %v1478
    %v1480 = vadd.f32 %v1479, 0.0036580483
    %v1481 = vmul.f32 %v1476, %v1480
    %v1482 = vadd.f32 %v1481, 0.05243302
    %v1483 = vmul.f32 %v1476, %v1482
    %v1484 = vadd.f32 %v1483, 0.18741608
    %v1485 = vmul.f32 %v1476, %v1484
    %v1486 = vadd.f32 %v1485, 1.1283791
    %v1487 = vmul.f32 %v1267, %v1486
    %v1488 = vmul.f32 %v1476, 3.8918573e-05
    %v1489 = vadd.f32 %v1488, 0.001143296
    %v1490 = vmul.f32 %v1476, %v1489
    %v1491 = vadd.f32 %v1490, 0.014752088
    %v1492 = vmul.f32 %v1476, %v1491
    %v1493 = vadd.f32 %v1492, 0.112945676
    %v1494 = vmul.f32 %v1476, %v1493
    %v1495 = vadd.f32 %v1494, 0.4994258
    %v1496 = vmul.f32 %v1476, %v1495
    %v1497 = vadd.f32 %v1496, 1.0
    %v1498 = vrcp.pop %v1497
    %v1499 = vmul.f32 %v1497, %v1498
    %v1500 = vsub.f32 1.0, %v1499
    %v1501 = vmul.f32 %v1498, %v1500
    %v1502 = vadd.f32 %v1498, %v1501
    %vm1503 = vweird.f32 %v1497
    %vm1504 = vweird.f32 %v1498
    %vm1505 = vmor %vm1503, %vm1504
    %v1506 = vsel %vm1505, %v1498, %v1502
    %v1507 = vand.u32 2147483647, %v1497
    %vm1508 = vcmp.eq.f32.partialorder %v1507, 8.507059e+37
    %v1509 = vand.u32 %v1497, 2147483648
    %v1510 = vor.u32 1.1754944e-38, %v1509
    %v1511 = vsel %vm1508, %v1510, %v1506
    %v1512 = vmul.f32 %v1487, %v1511
    %v1513 = vmin.f32 %v1512, 1.0
    %v1514 = vmax.f32 %v1513, -1.0
    %v1515 = vmul.f32 %v1268, %v1268
    %v1516 = vmin.f32 16.0, %v1515
    %v1517 = vmul.f32 %v1516, 2.1237322e-06
    %v1518 = vadd.f32 %v1517, 0.00028619796
    %v1519 = vmul.f32 %v1516, %v1518
    %v1520 = vadd.f32 %v1519, 0.0036580483
    %v1521 = vmul.f32 %v1516, %v1520
    %v1522 = vadd.f32 %v1521, 0.05243302
    %v1523 = vmul.f32 %v1516, %v1522
    %v1524 = vadd.f32 %v1523, 0.18741608
    %v1525 = vmul.f32 %v1516, %v1524
    %v1526 = vadd.f32 %v1525, 1.1283791
    %v1527 = vmul.f32 %v1268, %v1526
    %v1528 = vmul.f32 %v1516, 3.8918573e-05
    %v1529 = vadd.f32 %v1528, 0.001143296
    %v1530 = vmul.f32 %v1516, %v1529
    %v1531 = vadd.f32 %v1530, 0.014752088
    %v1532 = vmul.f32 %v1516, %v1531
    %v1533 = vadd.f32 %v1532, 0.112945676
    %v1534 = vmul.f32 %v1516, %v1533
    %v1535 = vadd.f32 %v1534, 0.4994258
    %v1536 = vmul.f32 %v1516, %v1535
    %v1537 = vadd.f32 %v1536, 1.0
    %v1538 = vrcp.pop %v1537
    %v1539 = vmul.f32 %v1537, %v1538
    %v1540 = vsub.f32 1.0, %v1539
    %v1541 = vmul.f32 %v1538, %v1540
    %v1542 = vadd.f32 %v1538, %v1541
    %vm1543 = vweird.f32 %v1537
    %vm1544 = vweird.f32 %v1538
    %vm1545 = vmor %vm1543, %vm1544
    %v1546 = vsel %vm1545, %v1538, %v1542
    %v1547 = vand.u32 2147483647, %v1537
    %vm1548 = vcmp.eq.f32.partialorder %v1547, 8.507059e+37
    %v1549 = vand.u32 %v1537, 2147483648
    %v1550 = vor.u32 1.1754944e-38, %v1549
    %v1551 = vsel %vm1548, %v1550, %v1546
    %v1552 = vmul.f32 %v1527, %v1551
    %v1553 = vmin.f32 %v1552, 1.0
    %v1554 = vmax.f32 %v1553, -1.0
    %v1555 = vmul.f32 %v1269, %v1269
    %v1556 = vmin.f32 16.0, %v1555
    %v1557 = vmul.f32 %v1556, 2.1237322e-06
    %v1558 = vadd.f32 %v1557, 0.00028619796
    %v1559 = vmul.f32 %v1556, %v1558
    %v1560 = vadd.f32 %v1559, 0.0036580483
    %v1561 = vmul.f32 %v1556, %v1560
    %v1562 = vadd.f32 %v1561, 0.05243302
    %v1563 = vmul.f32 %v1556, %v1562
    %v1564 = vadd.f32 %v1563, 0.18741608
    %v1565 = vmul.f32 %v1556, %v1564
    %v1566 = vadd.f32 %v1565, 1.1283791
    %v1567 = vmul.f32 %v1269, %v1566
    %v1568 = vmul.f32 %v1556, 3.8918573e-05
    %v1569 = vadd.f32 %v1568, 0.001143296
    %v1570 = vmul.f32 %v1556, %v1569
    %v1571 = vadd.f32 %v1570, 0.014752088
    %v1572 = vmul.f32 %v1556, %v1571
    %v1573 = vadd.f32 %v1572, 0.112945676
    %v1574 = vmul.f32 %v1556, %v1573
    %v1575 = vadd.f32 %v1574, 0.4994258
    %v1576 = vmul.f32 %v1556, %v1575
    %v1577 = vadd.f32 %v1576, 1.0
    %v1578 = vrcp.pop %v1577
    %v1579 = vmul.f32 %v1577, %v1578
    %v1580 = vsub.f32 1.0, %v1579
    %v1581 = vmul.f32 %v1578, %v1580
    %v1582 = vadd.f32 %v1578, %v1581
    %vm1583 = vweird.f32 %v1577
    %vm1584 = vweird.f32 %v1578
    %vm1585 = vmor %vm1583, %vm1584
    %v1586 = vsel %vm1585, %v1578, %v1582
    %v1587 = vand.u32 2147483647, %v1577
    %vm1588 = vcmp.eq.f32.partialorder %v1587, 8.507059e+37
    %v1589 = vand.u32 %v1577, 2147483648
    %v1590 = vor.u32 1.1754944e-38, %v1589
    %v1591 = vsel %vm1588, %v1590, %v1586
    %v1592 = vmul.f32 %v1567, %v1591
    %v1593 = vmin.f32 %v1592, 1.0
    %v1594 = vmax.f32 %v1593, -1.0
    %v1595 = vmul.f32 %v1270, %v1270
    %v1596 = vmin.f32 16.0, %v1595
    %v1597 = vmul.f32 %v1596, 2.1237322e-06
    %v1598 = vadd.f32 %v1597, 0.00028619796
    %v1599 = vmul.f32 %v1596, %v1598
    %v1600 = vadd.f32 %v1599, 0.0036580483
    %v1601 = vmul.f32 %v1596, %v1600
    %v1602 = vadd.f32 %v1601, 0.05243302
    %v1603 = vmul.f32 %v1596, %v1602
    %v1604 = vadd.f32 %v1603, 0.18741608
    %v1605 = vmul.f32 %v1596, %v1604
    %v1606 = vadd.f32 %v1605, 1.1283791
    %v1607 = vmul.f32 %v1270, %v1606
    %v1608 = vmul.f32 %v1596, 3.8918573e-05
    %v1609 = vadd.f32 %v1608, 0.001143296
    %v1610 = vmul.f32 %v1596, %v1609
    %v1611 = vadd.f32 %v1610, 0.014752088
    %v1612 = vmul.f32 %v1596, %v1611
    %v1613 = vadd.f32 %v1612, 0.112945676
    %v1614 = vmul.f32 %v1596, %v1613
    %v1615 = vadd.f32 %v1614, 0.4994258
    %v1616 = vmul.f32 %v1596, %v1615
    %v1617 = vadd.f32 %v1616, 1.0
    %v1618 = vrcp.pop %v1617
    %v1619 = vmul.f32 %v1617, %v1618
    %v1620 = vsub.f32 1.0, %v1619
    %v1621 = vmul.f32 %v1618, %v1620
    %v1622 = vadd.f32 %v1618, %v1621
    %vm1623 = vweird.f32 %v1617
    %vm1624 = vweird.f32 %v1618
    %vm1625 = vmor %vm1623, %vm1624
    %v1626 = vsel %vm1625, %v1618, %v1622
    %v1627 = vand.u32 2147483647, %v1617
    %vm1628 = vcmp.eq.f32.partialorder %v1627, 8.507059e+37
    %v1629 = vand.u32 %v1617, 2147483648
    %v1630 = vor.u32 1.1754944e-38, %v1629
    %v1631 = vsel %vm1628, %v1630, %v1626
    %v1632 = vmul.f32 %v1607, %v1631
    %v1633 = vmin.f32 %v1632, 1.0
    %v1634 = vmax.f32 %v1633, -1.0
    %v1635 = vmul.f32 %v1271, %v1271
    %v1636 = vmin.f32 16.0, %v1635
    %v1637 = vmul.f32 %v1636, 2.1237322e-06
    %v1638 = vadd.f32 %v1637, 0.00028619796
    %v1639 = vmul.f32 %v1636, %v1638
    %v1640 = vadd.f32 %v1639, 0.0036580483
    %v1641 = vmul.f32 %v1636, %v1640
    %v1642 = vadd.f32 %v1641, 0.05243302
    %v1643 = vmul.f32 %v1636, %v1642
    %v1644 = vadd.f32 %v1643, 0.18741608
    %v1645 = vmul.f32 %v1636, %v1644
    %v1646 = vadd.f32 %v1645, 1.1283791
    %v1647 = vmul.f32 %v1271, %v1646
    %v1648 = vmul.f32 %v1636, 3.8918573e-05
    %v1649 = vadd.f32 %v1648, 0.001143296
    %v1650 = vmul.f32 %v1636, %v1649
    %v1651 = vadd.f32 %v1650, 0.014752088
    %v1652 = vmul.f32 %v1636, %v1651
    %v1653 = vadd.f32 %v1652, 0.112945676
    %v1654 = vmul.f32 %v1636, %v1653
    %v1655 = vadd.f32 %v1654, 0.4994258
    %v1656 = vmul.f32 %v1636, %v1655
    %v1657 = vadd.f32 %v1656, 1.0
    %v1658 = vrcp.pop %v1657
    %v1659 = vmul.f32 %v1657, %v1658
    %v1660 = vsub.f32 1.0, %v1659
    %v1661 = vmul.f32 %v1658, %v1660
    %v1662 = vadd.f32 %v1658, %v1661
    %vm1663 = vweird.f32 %v1657
    %vm1664 = vweird.f32 %v1658
    %vm1665 = vmor %vm1663, %vm1664
    %v1666 = vsel %vm1665, %v1658, %v1662
    %v1667 = vand.u32 2147483647, %v1657
    %vm1668 = vcmp.eq.f32.partialorder %v1667, 8.507059e+37
    %v1669 = vand.u32 %v1657, 2147483648
    %v1670 = vor.u32 1.1754944e-38, %v1669
    %v1671 = vsel %vm1668, %v1670, %v1666
    %v1672 = vmul.f32 %v1647, %v1671
    %v1673 = vmin.f32 %v1672, 1.0
    %v1674 = vmax.f32 %v1673, -1.0
    %v1675 = vmul.f32 %v1272, %v1272
    %v1676 = vmin.f32 16.0, %v1675
    %v1677 = vmul.f32 %v1676, 2.1237322e-06
    %v1678 = vadd.f32 %v1677, 0.00028619796
    %v1679 = vmul.f32 %v1676, %v1678
    %v1680 = vadd.f32 %v1679, 0.0036580483
    %v1681 = vmul.f32 %v1676, %v1680
    %v1682 = vadd.f32 %v1681, 0.05243302
    %v1683 = vmul.f32 %v1676, %v1682
    %v1684 = vadd.f32 %v1683, 0.18741608
    %v1685 = vmul.f32 %v1676, %v1684
    %v1686 = vadd.f32 %v1685, 1.1283791
    %v1687 = vmul.f32 %v1272, %v1686
    %v1688 = vmul.f32 %v1676, 3.8918573e-05
    %v1689 = vadd.f32 %v1688, 0.001143296
    %v1690 = vmul.f32 %v1676, %v1689
    %v1691 = vadd.f32 %v1690, 0.014752088
    %v1692 = vmul.f32 %v1676, %v1691
    %v1693 = vadd.f32 %v1692, 0.112945676
    %v1694 = vmul.f32 %v1676, %v1693
    %v1695 = vadd.f32 %v1694, 0.4994258
    %v1696 = vmul.f32 %v1676, %v1695
    %v1697 = vadd.f32 %v1696, 1.0
    %v1698 = vrcp.pop %v1697
    %v1699 = vmul.f32 %v1697, %v1698
    %v1700 = vsub.f32 1.0, %v1699
    %v1701 = vmul.f32 %v1698, %v1700
    %v1702 = vadd.f32 %v1698, %v1701
    %vm1703 = vweird.f32 %v1697
    %vm1704 = vweird.f32 %v1698
    %vm1705 = vmor %vm1703, %vm1704
    %v1706 = vsel %vm1705, %v1698, %v1702
    %v1707 = vand.u32 2147483647, %v1697
    %vm1708 = vcmp.eq.f32.partialorder %v1707, 8.507059e+37
    %v1709 = vand.u32 %v1697, 2147483648
    %v1710 = vor.u32 1.1754944e-38, %v1709
    %v1711 = vsel %vm1708, %v1710, %v1706
    %v1712 = vmul.f32 %v1687, %v1711
    %v1713 = vmin.f32 %v1712, 1.0
    %v1714 = vmax.f32 %v1713, -1.0
    %v1715 = vmul.f32 %v1273, %v1273
    %v1716 = vmin.f32 16.0, %v1715
    %v1717 = vmul.f32 %v1716, 2.1237322e-06
    %v1718 = vadd.f32 %v1717, 0.00028619796
    %v1719 = vmul.f32 %v1716, %v1718
    %v1720 = vadd.f32 %v1719, 0.0036580483
    %v1721 = vmul.f32 %v1716, %v1720
    %v1722 = vadd.f32 %v1721, 0.05243302
    %v1723 = vmul.f32 %v1716, %v1722
    %v1724 = vadd.f32 %v1723, 0.18741608
    %v1725 = vmul.f32 %v1716, %v1724
    %v1726 = vadd.f32 %v1725, 1.1283791
    %v1727 = vmul.f32 %v1273, %v1726
    %v1728 = vmul.f32 %v1716, 3.8918573e-05
    %v1729 = vadd.f32 %v1728, 0.001143296
    %v1730 = vmul.f32 %v1716, %v1729
    %v1731 = vadd.f32 %v1730, 0.014752088
    %v1732 = vmul.f32 %v1716, %v1731
    %v1733 = vadd.f32 %v1732, 0.112945676
    %v1734 = vmul.f32 %v1716, %v1733
    %v1735 = vadd.f32 %v1734, 0.4994258
    %v1736 = vmul.f32 %v1716, %v1735
    %v1737 = vadd.f32 %v1736, 1.0
    %v1738 = vrcp.pop %v1737
    %v1739 = vmul.f32 %v1737, %v1738
    %v1740 = vsub.f32 1.0, %v1739
    %v1741 = vmul.f32 %v1738, %v1740
    %v1742 = vadd.f32 %v1738, %v1741
    %vm1743 = vweird.f32 %v1737
    %vm1744 = vweird.f32 %v1738
    %vm1745 = vmor %vm1743, %vm1744
    %v1746 = vsel %vm1745, %v1738, %v1742
    %v1747 = vand.u32 2147483647, %v1737
    %vm1748 = vcmp.eq.f32.partialorder %v1747, 8.507059e+37
    %v1749 = vand.u32 %v1737, 2147483648
    %v1750 = vor.u32 1.1754944e-38, %v1749
    %v1751 = vsel %vm1748, %v1750, %v1746
    %v1752 = vmul.f32 %v1727, %v1751
    %v1753 = vmin.f32 %v1752, 1.0
    %v1754 = vmax.f32 %v1753, -1.0
    %v1755 = vmul.f32 %v1274, %v1274
    %v1756 = vmin.f32 16.0, %v1755
    %v1757 = vmul.f32 %v1756, 2.1237322e-06
    %v1758 = vadd.f32 %v1757, 0.00028619796
    %v1759 = vmul.f32 %v1756, %v1758
    %v1760 = vadd.f32 %v1759, 0.0036580483
    %v1761 = vmul.f32 %v1756, %v1760
    %v1762 = vadd.f32 %v1761, 0.05243302
    %v1763 = vmul.f32 %v1756, %v1762
    %v1764 = vadd.f32 %v1763, 0.18741608
    %v1765 = vmul.f32 %v1756, %v1764
    %v1766 = vadd.f32 %v1765, 1.1283791
    %v1767 = vmul.f32 %v1274, %v1766
    %v1768 = vmul.f32 %v1756, 3.8918573e-05
    %v1769 = vadd.f32 %v1768, 0.001143296
    %v1770 = vmul.f32 %v1756, %v1769
    %v1771 = vadd.f32 %v1770, 0.014752088
    %v1772 = vmul.f32 %v1756, %v1771
    %v1773 = vadd.f32 %v1772, 0.112945676
    %v1774 = vmul.f32 %v1756, %v1773
    %v1775 = vadd.f32 %v1774, 0.4994258
    %v1776 = vmul.f32 %v1756, %v1775
    %v1777 = vadd.f32 %v1776, 1.0
    %v1778 = vrcp.pop %v1777
    %v1779 = vmul.f32 %v1777, %v1778
    %v1780 = vsub.f32 1.0, %v1779
    %v1781 = vmul.f32 %v1778, %v1780
    %v1782 = vadd.f32 %v1778, %v1781
    %vm1783 = vweird.f32 %v1777
    %vm1784 = vweird.f32 %v1778
    %vm1785 = vmor %vm1783, %vm1784
    %v1786 = vsel %vm1785, %v1778, %v1782
    %v1787 = vand.u32 2147483647, %v1777
    %vm1788 = vcmp.eq.f32.partialorder %v1787, 8.507059e+37
    %v1789 = vand.u32 %v1777, 2147483648
    %v1790 = vor.u32 1.1754944e-38, %v1789
    %v1791 = vsel %vm1788, %v1790, %v1786
    %v1792 = vmul.f32 %v1767, %v1791
    %v1793 = vmin.f32 %v1792, 1.0
    %v1794 = vmax.f32 %v1793, -1.0
    %v1795 = vmul.f32 %v1275, %v1275
    %v1796 = vmin.f32 16.0, %v1795
    %v1797 = vmul.f32 %v1796, 2.1237322e-06
    %v1798 = vadd.f32 %v1797, 0.00028619796
    %v1799 = vmul.f32 %v1796, %v1798
    %v1800 = vadd.f32 %v1799, 0.0036580483
    %v1801 = vmul.f32 %v1796, %v1800
    %v1802 = vadd.f32 %v1801, 0.05243302
    %v1803 = vmul.f32 %v1796, %v1802
    %v1804 = vadd.f32 %v1803, 0.18741608
    %v1805 = vmul.f32 %v1796, %v1804
    %v1806 = vadd.f32 %v1805, 1.1283791
    %v1807 = vmul.f32 %v1275, %v1806
    %v1808 = vmul.f32 %v1796, 3.8918573e-05
    %v1809 = vadd.f32 %v1808, 0.001143296
    %v1810 = vmul.f32 %v1796, %v1809
    %v1811 = vadd.f32 %v1810, 0.014752088
    %v1812 = vmul.f32 %v1796, %v1811
    %v1813 = vadd.f32 %v1812, 0.112945676
    %v1814 = vmul.f32 %v1796, %v1813
    %v1815 = vadd.f32 %v1814, 0.4994258
    %v1816 = vmul.f32 %v1796, %v1815
    %v1817 = vadd.f32 %v1816, 1.0
    %v1818 = vrcp.pop %v1817
    %v1819 = vmul.f32 %v1817, %v1818
    %v1820 = vsub.f32 1.0, %v1819
    %v1821 = vmul.f32 %v1818, %v1820
    %v1822 = vadd.f32 %v1818, %v1821
    %vm1823 = vweird.f32 %v1817
    %vm1824 = vweird.f32 %v1818
    %vm1825 = vmor %vm1823, %vm1824
    %v1826 = vsel %vm1825, %v1818, %v1822
    %v1827 = vand.u32 2147483647, %v1817
    %vm1828 = vcmp.eq.f32.partialorder %v1827, 8.507059e+37
    %v1829 = vand.u32 %v1817, 2147483648
    %v1830 = vor.u32 1.1754944e-38, %v1829
    %v1831 = vsel %vm1828, %v1830, %v1826
    %v1832 = vmul.f32 %v1807, %v1831
    %v1833 = vmin.f32 %v1832, 1.0
    %v1834 = vmax.f32 %v1833, -1.0
    %v1835 = vmul.f32 %v1276, %v1276
    %v1836 = vmin.f32 16.0, %v1835
    %v1837 = vmul.f32 %v1836, 2.1237322e-06
    %v1838 = vadd.f32 %v1837, 0.00028619796
    %v1839 = vmul.f32 %v1836, %v1838
    %v1840 = vadd.f32 %v1839, 0.0036580483
    %v1841 = vmul.f32 %v1836, %v1840
    %v1842 = vadd.f32 %v1841, 0.05243302
    %v1843 = vmul.f32 %v1836, %v1842
    %v1844 = vadd.f32 %v1843, 0.18741608
    %v1845 = vmul.f32 %v1836, %v1844
    %v1846 = vadd.f32 %v1845, 1.1283791
    %v1847 = vmul.f32 %v1276, %v1846
    %v1848 = vmul.f32 %v1836, 3.8918573e-05
    %v1849 = vadd.f32 %v1848, 0.001143296
    %v1850 = vmul.f32 %v1836, %v1849
    %v1851 = vadd.f32 %v1850, 0.014752088
    %v1852 = vmul.f32 %v1836, %v1851
    %v1853 = vadd.f32 %v1852, 0.112945676
    %v1854 = vmul.f32 %v1836, %v1853
    %v1855 = vadd.f32 %v1854, 0.4994258
    %v1856 = vmul.f32 %v1836, %v1855
    %v1857 = vadd.f32 %v1856, 1.0
    %v1858 = vrcp.pop %v1857
    %v1859 = vmul.f32 %v1857, %v1858
    %v1860 = vsub.f32 1.0, %v1859
    %v1861 = vmul.f32 %v1858, %v1860
    %v1862 = vadd.f32 %v1858, %v1861
    %vm1863 = vweird.f32 %v1857
    %vm1864 = vweird.f32 %v1858
    %vm1865 = vmor %vm1863, %vm1864
    %v1866 = vsel %vm1865, %v1858, %v1862
    %v1867 = vand.u32 2147483647, %v1857
    %vm1868 = vcmp.eq.f32.partialorder %v1867, 8.507059e+37
    %v1869 = vand.u32 %v1857, 2147483648
    %v1870 = vor.u32 1.1754944e-38, %v1869
    %v1871 = vsel %vm1868, %v1870, %v1866
    %v1872 = vmul.f32 %v1847, %v1871
    %v1873 = vmin.f32 %v1872, 1.0
    %v1874 = vmax.f32 %v1873, -1.0
    %v1875 = vmul.f32 %v1277, %v1277
    %v1876 = vmin.f32 16.0, %v1875
    %v1877 = vmul.f32 %v1876, 2.1237322e-06
    %v1878 = vadd.f32 %v1877, 0.00028619796
    %v1879 = vmul.f32 %v1876, %v1878
    %v1880 = vadd.f32 %v1879, 0.0036580483
    %v1881 = vmul.f32 %v1876, %v1880
    %v1882 = vadd.f32 %v1881, 0.05243302
    %v1883 = vmul.f32 %v1876, %v1882
    %v1884 = vadd.f32 %v1883, 0.18741608
    %v1885 = vmul.f32 %v1876, %v1884
    %v1886 = vadd.f32 %v1885, 1.1283791
    %v1887 = vmul.f32 %v1277, %v1886
    %v1888 = vmul.f32 %v1876, 3.8918573e-05
    %v1889 = vadd.f32 %v1888, 0.001143296
    %v1890 = vmul.f32 %v1876, %v1889
    %v1891 = vadd.f32 %v1890, 0.014752088
    %v1892 = vmul.f32 %v1876, %v1891
    %v1893 = vadd.f32 %v1892, 0.112945676
    %v1894 = vmul.f32 %v1876, %v1893
    %v1895 = vadd.f32 %v1894, 0.4994258
    %v1896 = vmul.f32 %v1876, %v1895
    %v1897 = vadd.f32 %v1896, 1.0
    %v1898 = vrcp.pop %v1897
    %v1899 = vmul.f32 %v1897, %v1898
    %v1900 = vsub.f32 1.0, %v1899
    %v1901 = vmul.f32 %v1898, %v1900
    %v1902 = vadd.f32 %v1898, %v1901
    %vm1903 = vweird.f32 %v1897
    %vm1904 = vweird.f32 %v1898
    %vm1905 = vmor %vm1903, %vm1904
    %v1906 = vsel %vm1905, %v1898, %v1902
    %v1907 = vand.u32 2147483647, %v1897
    %vm1908 = vcmp.eq.f32.partialorder %v1907, 8.507059e+37
    %v1909 = vand.u32 %v1897, 2147483648
    %v1910 = vor.u32 1.1754944e-38, %v1909
    %v1911 = vsel %vm1908, %v1910, %v1906
    %v1912 = vmul.f32 %v1887, %v1911
    %v1913 = vmin.f32 %v1912, 1.0
    %v1914 = vmax.f32 %v1913, -1.0
    %v1915 = vmul.f32 %v1278, %v1278
    %v1916 = vmin.f32 16.0, %v1915
    %v1917 = vmul.f32 %v1916, 2.1237322e-06
    %v1918 = vadd.f32 %v1917, 0.00028619796
    %v1919 = vmul.f32 %v1916, %v1918
    %v1920 = vadd.f32 %v1919, 0.0036580483
    %v1921 = vmul.f32 %v1916, %v1920
    %v1922 = vadd.f32 %v1921, 0.05243302
    %v1923 = vmul.f32 %v1916, %v1922
    %v1924 = vadd.f32 %v1923, 0.18741608
    %v1925 = vmul.f32 %v1916, %v1924
    %v1926 = vadd.f32 %v1925, 1.1283791
    %v1927 = vmul.f32 %v1278, %v1926
    %v1928 = vmul.f32 %v1916, 3.8918573e-05
    %v1929 = vadd.f32 %v1928, 0.001143296
    %v1930 = vmul.f32 %v1916, %v1929
    %v1931 = vadd.f32 %v1930, 0.014752088
    %v1932 = vmul.f32 %v1916, %v1931
    %v1933 = vadd.f32 %v1932, 0.112945676
    %v1934 = vmul.f32 %v1916, %v1933
    %v1935 = vadd.f32 %v1934, 0.4994258
    %v1936 = vmul.f32 %v1916, %v1935
    %v1937 = vadd.f32 %v1936, 1.0
    %v1938 = vrcp.pop %v1937
    %v1939 = vmul.f32 %v1937, %v1938
    %v1940 = vsub.f32 1.0, %v1939
    %v1941 = vmul.f32 %v1938, %v1940
    %v1942 = vadd.f32 %v1938, %v1941
    %vm1943 = vweird.f32 %v1937
    %vm1944 = vweird.f32 %v1938
    %vm1945 = vmor %vm1943, %vm1944
    %v1946 = vsel %vm1945, %v1938, %v1942
    %v1947 = vand.u32 2147483647, %v1937
    %vm1948 = vcmp.eq.f32.partialorder %v1947, 8.507059e+37
    %v1949 = vand.u32 %v1937, 2147483648
    %v1950 = vor.u32 1.1754944e-38, %v1949
    %v1951 = vsel %vm1948, %v1950, %v1946
    %v1952 = vmul.f32 %v1927, %v1951
    %v1953 = vmin.f32 %v1952, 1.0
    %v1954 = vmax.f32 %v1953, -1.0
    %v1955 = vmul.f32 %v1279, %v1279
    %v1956 = vmin.f32 16.0, %v1955
    %v1957 = vmul.f32 %v1956, 2.1237322e-06
    %v1958 = vadd.f32 %v1957, 0.00028619796
    %v1959 = vmul.f32 %v1956, %v1958
    %v1960 = vadd.f32 %v1959, 0.0036580483
    %v1961 = vmul.f32 %v1956, %v1960
    %v1962 = vadd.f32 %v1961, 0.05243302
    %v1963 = vmul.f32 %v1956, %v1962
    %v1964 = vadd.f32 %v1963, 0.18741608
    %v1965 = vmul.f32 %v1956, %v1964
    %v1966 = vadd.f32 %v1965, 1.1283791
    %v1967 = vmul.f32 %v1279, %v1966
    %v1968 = vmul.f32 %v1956, 3.8918573e-05
    %v1969 = vadd.f32 %v1968, 0.001143296
    %v1970 = vmul.f32 %v1956, %v1969
    %v1971 = vadd.f32 %v1970, 0.014752088
    %v1972 = vmul.f32 %v1956, %v1971
    %v1973 = vadd.f32 %v1972, 0.112945676
    %v1974 = vmul.f32 %v1956, %v1973
    %v1975 = vadd.f32 %v1974, 0.4994258
    %v1976 = vmul.f32 %v1956, %v1975
    %v1977 = vadd.f32 %v1976, 1.0
    %v1978 = vrcp.pop %v1977
    %v1979 = vmul.f32 %v1977, %v1978
    %v1980 = vsub.f32 1.0, %v1979
    %v1981 = vmul.f32 %v1978, %v1980
    %v1982 = vadd.f32 %v1978, %v1981
    %vm1983 = vweird.f32 %v1977
    %vm1984 = vweird.f32 %v1978
    %vm1985 = vmor %vm1983, %vm1984
    %v1986 = vsel %vm1985, %v1978, %v1982
    %v1987 = vand.u32 2147483647, %v1977
    %vm1988 = vcmp.eq.f32.partialorder %v1987, 8.507059e+37
    %v1989 = vand.u32 %v1977, 2147483648
    %v1990 = vor.u32 1.1754944e-38, %v1989
    %v1991 = vsel %vm1988, %v1990, %v1986
    %v1992 = vmul.f32 %v1967, %v1991
    %v1993 = vmin.f32 %v1992, 1.0
    %v1994 = vmax.f32 %v1993, -1.0
    %v1995 = vmul.f32 %v1280, %v1280
    %v1996 = vmin.f32 16.0, %v1995
    %v1997 = vmul.f32 %v1996, 2.1237322e-06
    %v1998 = vadd.f32 %v1997, 0.00028619796
    %v1999 = vmul.f32 %v1996, %v1998
    %v2000 = vadd.f32 %v1999, 0.0036580483
    %v2001 = vmul.f32 %v1996, %v2000
    %v2002 = vadd.f32 %v2001, 0.05243302
    %v2003 = vmul.f32 %v1996, %v2002
    %v2004 = vadd.f32 %v2003, 0.18741608
    %v2005 = vmul.f32 %v1996, %v2004
    %v2006 = vadd.f32 %v2005, 1.1283791
    %v2007 = vmul.f32 %v1280, %v2006
    %v2008 = vmul.f32 %v1996, 3.8918573e-05
    %v2009 = vadd.f32 %v2008, 0.001143296
    %v2010 = vmul.f32 %v1996, %v2009
    %v2011 = vadd.f32 %v2010, 0.014752088
    %v2012 = vmul.f32 %v1996, %v2011
    %v2013 = vadd.f32 %v2012, 0.112945676
    %v2014 = vmul.f32 %v1996, %v2013
    %v2015 = vadd.f32 %v2014, 0.4994258
    %v2016 = vmul.f32 %v1996, %v2015
    %v2017 = vadd.f32 %v2016, 1.0
    %v2018 = vrcp.pop %v2017
    %v2019 = vmul.f32 %v2017, %v2018
    %v2020 = vsub.f32 1.0, %v2019
    %v2021 = vmul.f32 %v2018, %v2020
    %v2022 = vadd.f32 %v2018, %v2021
    %vm2023 = vweird.f32 %v2017
    %vm2024 = vweird.f32 %v2018
    %vm2025 = vmor %vm2023, %vm2024
    %v2026 = vsel %vm2025, %v2018, %v2022
    %v2027 = vand.u32 2147483647, %v2017
    %vm2028 = vcmp.eq.f32.partialorder %v2027, 8.507059e+37
    %v2029 = vand.u32 %v2017, 2147483648
    %v2030 = vor.u32 1.1754944e-38, %v2029
    %v2031 = vsel %vm2028, %v2030, %v2026
    %v2032 = vmul.f32 %v2007, %v2031
    %v2033 = vmin.f32 %v2032, 1.0
    %v2034 = vmax.f32 %v2033, -1.0
    %v2035 = vmul.f32 %v1281, %v1281
    %v2036 = vmin.f32 16.0, %v2035
    %v2037 = vmul.f32 %v2036, 2.1237322e-06
    %v2038 = vadd.f32 %v2037, 0.00028619796
    %v2039 = vmul.f32 %v2036, %v2038
    %v2040 = vadd.f32 %v2039, 0.0036580483
    %v2041 = vmul.f32 %v2036, %v2040
    %v2042 = vadd.f32 %v2041, 0.05243302
    %v2043 = vmul.f32 %v2036, %v2042
    %v2044 = vadd.f32 %v2043, 0.18741608
    %v2045 = vmul.f32 %v2036, %v2044
    %v2046 = vadd.f32 %v2045, 1.1283791
    %v2047 = vmul.f32 %v1281, %v2046
    %v2048 = vmul.f32 %v2036, 3.8918573e-05
    %v2049 = vadd.f32 %v2048, 0.001143296
    %v2050 = vmul.f32 %v2036, %v2049
    %v2051 = vadd.f32 %v2050, 0.014752088
    %v2052 = vmul.f32 %v2036, %v2051
    %v2053 = vadd.f32 %v2052, 0.112945676
    %v2054 = vmul.f32 %v2036, %v2053
    %v2055 = vadd.f32 %v2054, 0.4994258
    %v2056 = vmul.f32 %v2036, %v2055
    %v2057 = vadd.f32 %v2056, 1.0
    %v2058 = vrcp.pop %v2057
    %v2059 = vmul.f32 %v2057, %v2058
    %v2060 = vsub.f32 1.0, %v2059
    %v2061 = vmul.f32 %v2058, %v2060
    %v2062 = vadd.f32 %v2058, %v2061
    %vm2063 = vweird.f32 %v2057
    %vm2064 = vweird.f32 %v2058
    %vm2065 = vmor %vm2063, %vm2064
    %v2066 = vsel %vm2065, %v2058, %v2062
    %v2067 = vand.u32 2147483647, %v2057
    %vm2068 = vcmp.eq.f32.partialorder %v2067, 8.507059e+37
    %v2069 = vand.u32 %v2057, 2147483648
    %v2070 = vor.u32 1.1754944e-38, %v2069
    %v2071 = vsel %vm2068, %v2070, %v2066
    %v2072 = vmul.f32 %v2047, %v2071
    %v2073 = vmin.f32 %v2072, 1.0
    %v2074 = vmax.f32 %v2073, -1.0
    %v2075 = vmul.f32 %v1282, %v1282
    %v2076 = vmin.f32 16.0, %v2075
    %v2077 = vmul.f32 %v2076, 2.1237322e-06
    %v2078 = vadd.f32 %v2077, 0.00028619796
    %v2079 = vmul.f32 %v2076, %v2078
    %v2080 = vadd.f32 %v2079, 0.0036580483
    %v2081 = vmul.f32 %v2076, %v2080
    %v2082 = vadd.f32 %v2081, 0.05243302
    %v2083 = vmul.f32 %v2076, %v2082
    %v2084 = vadd.f32 %v2083, 0.18741608
    %v2085 = vmul.f32 %v2076, %v2084
    %v2086 = vadd.f32 %v2085, 1.1283791
    %v2087 = vmul.f32 %v1282, %v2086
    %v2088 = vmul.f32 %v2076, 3.8918573e-05
    %v2089 = vadd.f32 %v2088, 0.001143296
    %v2090 = vmul.f32 %v2076, %v2089
    %v2091 = vadd.f32 %v2090, 0.014752088
    %v2092 = vmul.f32 %v2076, %v2091
    %v2093 = vadd.f32 %v2092, 0.112945676
    %v2094 = vmul.f32 %v2076, %v2093
    %v2095 = vadd.f32 %v2094, 0.4994258
    %v2096 = vmul.f32 %v2076, %v2095
    %v2097 = vadd.f32 %v2096, 1.0
    %v2098 = vrcp.pop %v2097
    %v2099 = vmul.f32 %v2097, %v2098
    %v2100 = vsub.f32 1.0, %v2099
    %v2101 = vmul.f32 %v2098, %v2100
    %v2102 = vadd.f32 %v2098, %v2101
    %vm2103 = vweird.f32 %v2097
    %vm2104 = vweird.f32 %v2098
    %vm2105 = vmor %vm2103, %vm2104
    %v2106 = vsel %vm2105, %v2098, %v2102
    %v2107 = vand.u32 2147483647, %v2097
    %vm2108 = vcmp.eq.f32.partialorder %v2107, 8.507059e+37
    %v2109 = vand.u32 %v2097, 2147483648
    %v2110 = vor.u32 1.1754944e-38, %v2109
    %v2111 = vsel %vm2108, %v2110, %v2106
    %v2112 = vmul.f32 %v2087, %v2111
    %v2113 = vmin.f32 %v2112, 1.0
    %v2114 = vmax.f32 %v2113, -1.0
    %v2115 = vmul.f32 %v1283, %v1283
    %v2116 = vmin.f32 16.0, %v2115
    %v2117 = vmul.f32 %v2116, 2.1237322e-06
    %v2118 = vadd.f32 %v2117, 0.00028619796
    %v2119 = vmul.f32 %v2116, %v2118
    %v2120 = vadd.f32 %v2119, 0.0036580483
    %v2121 = vmul.f32 %v2116, %v2120
    %v2122 = vadd.f32 %v2121, 0.05243302
    %v2123 = vmul.f32 %v2116, %v2122
    %v2124 = vadd.f32 %v2123, 0.18741608
    %v2125 = vmul.f32 %v2116, %v2124
    %v2126 = vadd.f32 %v2125, 1.1283791
    %v2127 = vmul.f32 %v1283, %v2126
    %v2128 = vmul.f32 %v2116, 3.8918573e-05
    %v2129 = vadd.f32 %v2128, 0.001143296
    %v2130 = vmul.f32 %v2116, %v2129
    %v2131 = vadd.f32 %v2130, 0.014752088
    %v2132 = vmul.f32 %v2116, %v2131
    %v2133 = vadd.f32 %v2132, 0.112945676
    %v2134 = vmul.f32 %v2116, %v2133
    %v2135 = vadd.f32 %v2134, 0.4994258
    %v2136 = vmul.f32 %v2116, %v2135
    %v2137 = vadd.f32 %v2136, 1.0
    %v2138 = vrcp.pop %v2137
    %v2139 = vmul.f32 %v2137, %v2138
    %v2140 = vsub.f32 1.0, %v2139
    %v2141 = vmul.f32 %v2138, %v2140
    %v2142 = vadd.f32 %v2138, %v2141
    %vm2143 = vweird.f32 %v2137
    %vm2144 = vweird.f32 %v2138
    %vm2145 = vmor %vm2143, %vm2144
    %v2146 = vsel %vm2145, %v2138, %v2142
    %v2147 = vand.u32 2147483647, %v2137
    %vm2148 = vcmp.eq.f32.partialorder %v2147, 8.507059e+37
    %v2149 = vand.u32 %v2137, 2147483648
    %v2150 = vor.u32 1.1754944e-38, %v2149
    %v2151 = vsel %vm2148, %v2150, %v2146
    %v2152 = vmul.f32 %v2127, %v2151
    %v2153 = vmin.f32 %v2152, 1.0
    %v2154 = vmax.f32 %v2153, -1.0
    %v2155 = vmul.f32 %v1284, %v1284
    %v2156 = vmin.f32 16.0, %v2155
    %v2157 = vmul.f32 %v2156, 2.1237322e-06
    %v2158 = vadd.f32 %v2157, 0.00028619796
    %v2159 = vmul.f32 %v2156, %v2158
    %v2160 = vadd.f32 %v2159, 0.0036580483
    %v2161 = vmul.f32 %v2156, %v2160
    %v2162 = vadd.f32 %v2161, 0.05243302
    %v2163 = vmul.f32 %v2156, %v2162
    %v2164 = vadd.f32 %v2163, 0.18741608
    %v2165 = vmul.f32 %v2156, %v2164
    %v2166 = vadd.f32 %v2165, 1.1283791
    %v2167 = vmul.f32 %v1284, %v2166
    %v2168 = vmul.f32 %v2156, 3.8918573e-05
    %v2169 = vadd.f32 %v2168, 0.001143296
    %v2170 = vmul.f32 %v2156, %v2169
    %v2171 = vadd.f32 %v2170, 0.014752088
    %v2172 = vmul.f32 %v2156, %v2171
    %v2173 = vadd.f32 %v2172, 0.112945676
    %v2174 = vmul.f32 %v2156, %v2173
    %v2175 = vadd.f32 %v2174, 0.4994258
    %v2176 = vmul.f32 %v2156, %v2175
    %v2177 = vadd.f32 %v2176, 1.0
    %v2178 = vrcp.pop %v2177
    %v2179 = vmul.f32 %v2177, %v2178
    %v2180 = vsub.f32 1.0, %v2179
    %v2181 = vmul.f32 %v2178, %v2180
    %v2182 = vadd.f32 %v2178, %v2181
    %vm2183 = vweird.f32 %v2177
    %vm2184 = vweird.f32 %v2178
    %vm2185 = vmor %vm2183, %vm2184
    %v2186 = vsel %vm2185, %v2178, %v2182
    %v2187 = vand.u32 2147483647, %v2177
    %vm2188 = vcmp.eq.f32.partialorder %v2187, 8.507059e+37
    %v2189 = vand.u32 %v2177, 2147483648
    %v2190 = vor.u32 1.1754944e-38, %v2189
    %v2191 = vsel %vm2188, %v2190, %v2186
    %v2192 = vmul.f32 %v2167, %v2191
    %v2193 = vmin.f32 %v2192, 1.0
    %v2194 = vmax.f32 %v2193, -1.0
    %v2195 = vmul.f32 %v1285, %v1285
    %v2196 = vmin.f32 16.0, %v2195
    %v2197 = vmul.f32 %v2196, 2.1237322e-06
    %v2198 = vadd.f32 %v2197, 0.00028619796
    %v2199 = vmul.f32 %v2196, %v2198
    %v2200 = vadd.f32 %v2199, 0.0036580483
    %v2201 = vmul.f32 %v2196, %v2200
    %v2202 = vadd.f32 %v2201, 0.05243302
    %v2203 = vmul.f32 %v2196, %v2202
    %v2204 = vadd.f32 %v2203, 0.18741608
    %v2205 = vmul.f32 %v2196, %v2204
    %v2206 = vadd.f32 %v2205, 1.1283791
    %v2207 = vmul.f32 %v1285, %v2206
    %v2208 = vmul.f32 %v2196, 3.8918573e-05
    %v2209 = vadd.f32 %v2208, 0.001143296
    %v2210 = vmul.f32 %v2196, %v2209
    %v2211 = vadd.f32 %v2210, 0.014752088
    %v2212 = vmul.f32 %v2196, %v2211
    %v2213 = vadd.f32 %v2212, 0.112945676
    %v2214 = vmul.f32 %v2196, %v2213
    %v2215 = vadd.f32 %v2214, 0.4994258
    %v2216 = vmul.f32 %v2196, %v2215
    %v2217 = vadd.f32 %v2216, 1.0
    %v2218 = vrcp.pop %v2217
    %v2219 = vmul.f32 %v2217, %v2218
    %v2220 = vsub.f32 1.0, %v2219
    %v2221 = vmul.f32 %v2218, %v2220
    %v2222 = vadd.f32 %v2218, %v2221
    %vm2223 = vweird.f32 %v2217
    %vm2224 = vweird.f32 %v2218
    %vm2225 = vmor %vm2223, %vm2224
    %v2226 = vsel %vm2225, %v2218, %v2222
    %v2227 = vand.u32 2147483647, %v2217
    %vm2228 = vcmp.eq.f32.partialorder %v2227, 8.507059e+37
    %v2229 = vand.u32 %v2217, 2147483648
    %v2230 = vor.u32 1.1754944e-38, %v2229
    %v2231 = vsel %vm2228, %v2230, %v2226
    %v2232 = vmul.f32 %v2207, %v2231
    %v2233 = vmin.f32 %v2232, 1.0
    %v2234 = vmax.f32 %v2233, -1.0
    %v2235 = vmul.f32 %v1286, %v1286
    %v2236 = vmin.f32 16.0, %v2235
    %v2237 = vmul.f32 %v2236, 2.1237322e-06
    %v2238 = vadd.f32 %v2237, 0.00028619796
    %v2239 = vmul.f32 %v2236, %v2238
    %v2240 = vadd.f32 %v2239, 0.0036580483
    %v2241 = vmul.f32 %v2236, %v2240
    %v2242 = vadd.f32 %v2241, 0.05243302
    %v2243 = vmul.f32 %v2236, %v2242
    %v2244 = vadd.f32 %v2243, 0.18741608
    %v2245 = vmul.f32 %v2236, %v2244
    %v2246 = vadd.f32 %v2245, 1.1283791
    %v2247 = vmul.f32 %v1286, %v2246
    %v2248 = vmul.f32 %v2236, 3.8918573e-05
    %v2249 = vadd.f32 %v2248, 0.001143296
    %v2250 = vmul.f32 %v2236, %v2249
    %v2251 = vadd.f32 %v2250, 0.014752088
    %v2252 = vmul.f32 %v2236, %v2251
    %v2253 = vadd.f32 %v2252, 0.112945676
    %v2254 = vmul.f32 %v2236, %v2253
    %v2255 = vadd.f32 %v2254, 0.4994258
    %v2256 = vmul.f32 %v2236, %v2255
    %v2257 = vadd.f32 %v2256, 1.0
    %v2258 = vrcp.pop %v2257
    %v2259 = vmul.f32 %v2257, %v2258
    %v2260 = vsub.f32 1.0, %v2259
    %v2261 = vmul.f32 %v2258, %v2260
    %v2262 = vadd.f32 %v2258, %v2261
    %vm2263 = vweird.f32 %v2257
    %vm2264 = vweird.f32 %v2258
    %vm2265 = vmor %vm2263, %vm2264
    %v2266 = vsel %vm2265, %v2258, %v2262
    %v2267 = vand.u32 2147483647, %v2257
    %vm2268 = vcmp.eq.f32.partialorder %v2267, 8.507059e+37
    %v2269 = vand.u32 %v2257, 2147483648
    %v2270 = vor.u32 1.1754944e-38, %v2269
    %v2271 = vsel %vm2268, %v2270, %v2266
    %v2272 = vmul.f32 %v2247, %v2271
    %v2273 = vmin.f32 %v2272, 1.0
    %v2274 = vmax.f32 %v2273, -1.0
    %v2275 = vmul.f32 %v1287, %v1287
    %v2276 = vmin.f32 16.0, %v2275
    %v2277 = vmul.f32 %v2276, 2.1237322e-06
    %v2278 = vadd.f32 %v2277, 0.00028619796
    %v2279 = vmul.f32 %v2276, %v2278
    %v2280 = vadd.f32 %v2279, 0.0036580483
    %v2281 = vmul.f32 %v2276, %v2280
    %v2282 = vadd.f32 %v2281, 0.05243302
    %v2283 = vmul.f32 %v2276, %v2282
    %v2284 = vadd.f32 %v2283, 0.18741608
    %v2285 = vmul.f32 %v2276, %v2284
    %v2286 = vadd.f32 %v2285, 1.1283791
    %v2287 = vmul.f32 %v1287, %v2286
    %v2288 = vmul.f32 %v2276, 3.8918573e-05
    %v2289 = vadd.f32 %v2288, 0.001143296
    %v2290 = vmul.f32 %v2276, %v2289
    %v2291 = vadd.f32 %v2290, 0.014752088
    %v2292 = vmul.f32 %v2276, %v2291
    %v2293 = vadd.f32 %v2292, 0.112945676
    %v2294 = vmul.f32 %v2276, %v2293
    %v2295 = vadd.f32 %v2294, 0.4994258
    %v2296 = vmul.f32 %v2276, %v2295
    %v2297 = vadd.f32 %v2296, 1.0
    %v2298 = vrcp.pop %v2297
    %v2299 = vmul.f32 %v2297, %v2298
    %v2300 = vsub.f32 1.0, %v2299
    %v2301 = vmul.f32 %v2298, %v2300
    %v2302 = vadd.f32 %v2298, %v2301
    %vm2303 = vweird.f32 %v2297
    %vm2304 = vweird.f32 %v2298
    %vm2305 = vmor %vm2303, %vm2304
    %v2306 = vsel %vm2305, %v2298, %v2302
    %v2307 = vand.u32 2147483647, %v2297
    %vm2308 = vcmp.eq.f32.partialorder %v2307, 8.507059e+37
    %v2309 = vand.u32 %v2297, 2147483648
    %v2310 = vor.u32 1.1754944e-38, %v2309
    %v2311 = vsel %vm2308, %v2310, %v2306
    %v2312 = vmul.f32 %v2287, %v2311
    %v2313 = vmin.f32 %v2312, 1.0
    %v2314 = vmax.f32 %v2313, -1.0
    %v2315 = vmul.f32 %v1288, %v1288
    %v2316 = vmin.f32 16.0, %v2315
    %v2317 = vmul.f32 %v2316, 2.1237322e-06
    %v2318 = vadd.f32 %v2317, 0.00028619796
    %v2319 = vmul.f32 %v2316, %v2318
    %v2320 = vadd.f32 %v2319, 0.0036580483
    %v2321 = vmul.f32 %v2316, %v2320
    %v2322 = vadd.f32 %v2321, 0.05243302
    %v2323 = vmul.f32 %v2316, %v2322
    %v2324 = vadd.f32 %v2323, 0.18741608
    %v2325 = vmul.f32 %v2316, %v2324
    %v2326 = vadd.f32 %v2325, 1.1283791
    %v2327 = vmul.f32 %v1288, %v2326
    %v2328 = vmul.f32 %v2316, 3.8918573e-05
    %v2329 = vadd.f32 %v2328, 0.001143296
    %v2330 = vmul.f32 %v2316, %v2329
    %v2331 = vadd.f32 %v2330, 0.014752088
    %v2332 = vmul.f32 %v2316, %v2331
    %v2333 = vadd.f32 %v2332, 0.112945676
    %v2334 = vmul.f32 %v2316, %v2333
    %v2335 = vadd.f32 %v2334, 0.4994258
    %v2336 = vmul.f32 %v2316, %v2335
    %v2337 = vadd.f32 %v2336, 1.0
    %v2338 = vrcp.pop %v2337
    %v2339 = vmul.f32 %v2337, %v2338
    %v2340 = vsub.f32 1.0, %v2339
    %v2341 = vmul.f32 %v2338, %v2340
    %v2342 = vadd.f32 %v2338, %v2341
    %vm2343 = vweird.f32 %v2337
    %vm2344 = vweird.f32 %v2338
    %vm2345 = vmor %vm2343, %vm2344
    %v2346 = vsel %vm2345, %v2338, %v2342
    %v2347 = vand.u32 2147483647, %v2337
    %vm2348 = vcmp.eq.f32.partialorder %v2347, 8.507059e+37
    %v2349 = vand.u32 %v2337, 2147483648
    %v2350 = vor.u32 1.1754944e-38, %v2349
    %v2351 = vsel %vm2348, %v2350, %v2346
    %v2352 = vmul.f32 %v2327, %v2351
    %v2353 = vmin.f32 %v2352, 1.0
    %v2354 = vmax.f32 %v2353, -1.0
    %v2355 = vmul.f32 %v1289, %v1289
    %v2356 = vmin.f32 16.0, %v2355
    %v2357 = vmul.f32 %v2356, 2.1237322e-06
    %v2358 = vadd.f32 %v2357, 0.00028619796
    %v2359 = vmul.f32 %v2356, %v2358
    %v2360 = vadd.f32 %v2359, 0.0036580483
    %v2361 = vmul.f32 %v2356, %v2360
    %v2362 = vadd.f32 %v2361, 0.05243302
    %v2363 = vmul.f32 %v2356, %v2362
    %v2364 = vadd.f32 %v2363, 0.18741608
    %v2365 = vmul.f32 %v2356, %v2364
    %v2366 = vadd.f32 %v2365, 1.1283791
    %v2367 = vmul.f32 %v1289, %v2366
    %v2368 = vmul.f32 %v2356, 3.8918573e-05
    %v2369 = vadd.f32 %v2368, 0.001143296
    %v2370 = vmul.f32 %v2356, %v2369
    %v2371 = vadd.f32 %v2370, 0.014752088
    %v2372 = vmul.f32 %v2356, %v2371
    %v2373 = vadd.f32 %v2372, 0.112945676
    %v2374 = vmul.f32 %v2356, %v2373
    %v2375 = vadd.f32 %v2374, 0.4994258
    %v2376 = vmul.f32 %v2356, %v2375
    %v2377 = vadd.f32 %v2376, 1.0
    %v2378 = vrcp.pop %v2377
    %v2379 = vmul.f32 %v2377, %v2378
    %v2380 = vsub.f32 1.0, %v2379
    %v2381 = vmul.f32 %v2378, %v2380
    %v2382 = vadd.f32 %v2378, %v2381
    %vm2383 = vweird.f32 %v2377
    %vm2384 = vweird.f32 %v2378
    %vm2385 = vmor %vm2383, %vm2384
    %v2386 = vsel %vm2385, %v2378, %v2382
    %v2387 = vand.u32 2147483647, %v2377
    %vm2388 = vcmp.eq.f32.partialorder %v2387, 8.507059e+37
    %v2389 = vand.u32 %v2377, 2147483648
    %v2390 = vor.u32 1.1754944e-38, %v2389
    %v2391 = vsel %vm2388, %v2390, %v2386
    %v2392 = vmul.f32 %v2367, %v2391
    %v2393 = vmin.f32 %v2392, 1.0
    %v2394 = vmax.f32 %v2393, -1.0
    %v2395 = vmul.f32 %v1290, %v1290
    %v2396 = vmin.f32 16.0, %v2395
    %v2397 = vmul.f32 %v2396, 2.1237322e-06
    %v2398 = vadd.f32 %v2397, 0.00028619796
    %v2399 = vmul.f32 %v2396, %v2398
    %v2400 = vadd.f32 %v2399, 0.0036580483
    %v2401 = vmul.f32 %v2396, %v2400
    %v2402 = vadd.f32 %v2401, 0.05243302
    %v2403 = vmul.f32 %v2396, %v2402
    %v2404 = vadd.f32 %v2403, 0.18741608
    %v2405 = vmul.f32 %v2396, %v2404
    %v2406 = vadd.f32 %v2405, 1.1283791
    %v2407 = vmul.f32 %v1290, %v2406
    %v2408 = vmul.f32 %v2396, 3.8918573e-05
    %v2409 = vadd.f32 %v2408, 0.001143296
    %v2410 = vmul.f32 %v2396, %v2409
    %v2411 = vadd.f32 %v2410, 0.014752088
    %v2412 = vmul.f32 %v2396, %v2411
    %v2413 = vadd.f32 %v2412, 0.112945676
    %v2414 = vmul.f32 %v2396, %v2413
    %v2415 = vadd.f32 %v2414, 0.4994258
    %v2416 = vmul.f32 %v2396, %v2415
    %v2417 = vadd.f32 %v2416, 1.0
    %v2418 = vrcp.pop %v2417
    %v2419 = vmul.f32 %v2417, %v2418
    %v2420 = vsub.f32 1.0, %v2419
    %v2421 = vmul.f32 %v2418, %v2420
    %v2422 = vadd.f32 %v2418, %v2421
    %vm2423 = vweird.f32 %v2417
    %vm2424 = vweird.f32 %v2418
    %vm2425 = vmor %vm2423, %vm2424
    %v2426 = vsel %vm2425, %v2418, %v2422
    %v2427 = vand.u32 2147483647, %v2417
    %vm2428 = vcmp.eq.f32.partialorder %v2427, 8.507059e+37
    %v2429 = vand.u32 %v2417, 2147483648
    %v2430 = vor.u32 1.1754944e-38, %v2429
    %v2431 = vsel %vm2428, %v2430, %v2426
    %v2432 = vmul.f32 %v2407, %v2431
    %v2433 = vmin.f32 %v2432, 1.0
    %v2434 = vmax.f32 %v2433, -1.0
    %v2435 = vmul.f32 %v1291, %v1291
    %v2436 = vmin.f32 16.0, %v2435
    %v2437 = vmul.f32 %v2436, 2.1237322e-06
    %v2438 = vadd.f32 %v2437, 0.00028619796
    %v2439 = vmul.f32 %v2436, %v2438
    %v2440 = vadd.f32 %v2439, 0.0036580483
    %v2441 = vmul.f32 %v2436, %v2440
    %v2442 = vadd.f32 %v2441, 0.05243302
    %v2443 = vmul.f32 %v2436, %v2442
    %v2444 = vadd.f32 %v2443, 0.18741608
    %v2445 = vmul.f32 %v2436, %v2444
    %v2446 = vadd.f32 %v2445, 1.1283791
    %v2447 = vmul.f32 %v1291, %v2446
    %v2448 = vmul.f32 %v2436, 3.8918573e-05
    %v2449 = vadd.f32 %v2448, 0.001143296
    %v2450 = vmul.f32 %v2436, %v2449
    %v2451 = vadd.f32 %v2450, 0.014752088
    %v2452 = vmul.f32 %v2436, %v2451
    %v2453 = vadd.f32 %v2452, 0.112945676
    %v2454 = vmul.f32 %v2436, %v2453
    %v2455 = vadd.f32 %v2454, 0.4994258
    %v2456 = vmul.f32 %v2436, %v2455
    %v2457 = vadd.f32 %v2456, 1.0
    %v2458 = vrcp.pop %v2457
    %v2459 = vmul.f32 %v2457, %v2458
    %v2460 = vsub.f32 1.0, %v2459
    %v2461 = vmul.f32 %v2458, %v2460
    %v2462 = vadd.f32 %v2458, %v2461
    %vm2463 = vweird.f32 %v2457
    %vm2464 = vweird.f32 %v2458
    %vm2465 = vmor %vm2463, %vm2464
    %v2466 = vsel %vm2465, %v2458, %v2462
    %v2467 = vand.u32 2147483647, %v2457
    %vm2468 = vcmp.eq.f32.partialorder %v2467, 8.507059e+37
    %v2469 = vand.u32 %v2457, 2147483648
    %v2470 = vor.u32 1.1754944e-38, %v2469
    %v2471 = vsel %vm2468, %v2470, %v2466
    %v2472 = vmul.f32 %v2447, %v2471
    %v2473 = vmin.f32 %v2472, 1.0
    %v2474 = vmax.f32 %v2473, -1.0
    %v2475 = vmul.f32 %v1292, %v1292
    %v2476 = vmin.f32 16.0, %v2475
    %v2477 = vmul.f32 %v2476, 2.1237322e-06
    %v2478 = vadd.f32 %v2477, 0.00028619796
    %v2479 = vmul.f32 %v2476, %v2478
    %v2480 = vadd.f32 %v2479, 0.0036580483
    %v2481 = vmul.f32 %v2476, %v2480
    %v2482 = vadd.f32 %v2481, 0.05243302
    %v2483 = vmul.f32 %v2476, %v2482
    %v2484 = vadd.f32 %v2483, 0.18741608
    %v2485 = vmul.f32 %v2476, %v2484
    %v2486 = vadd.f32 %v2485, 1.1283791
    %v2487 = vmul.f32 %v1292, %v2486
    %v2488 = vmul.f32 %v2476, 3.8918573e-05
    %v2489 = vadd.f32 %v2488, 0.001143296
    %v2490 = vmul.f32 %v2476, %v2489
    %v2491 = vadd.f32 %v2490, 0.014752088
    %v2492 = vmul.f32 %v2476, %v2491
    %v2493 = vadd.f32 %v2492, 0.112945676
    %v2494 = vmul.f32 %v2476, %v2493
    %v2495 = vadd.f32 %v2494, 0.4994258
    %v2496 = vmul.f32 %v2476, %v2495
    %v2497 = vadd.f32 %v2496, 1.0
    %v2498 = vrcp.pop %v2497
    %v2499 = vmul.f32 %v2497, %v2498
    %v2500 = vsub.f32 1.0, %v2499
    %v2501 = vmul.f32 %v2498, %v2500
    %v2502 = vadd.f32 %v2498, %v2501
    %vm2503 = vweird.f32 %v2497
    %vm2504 = vweird.f32 %v2498
    %vm2505 = vmor %vm2503, %vm2504
    %v2506 = vsel %vm2505, %v2498, %v2502
    %v2507 = vand.u32 2147483647, %v2497
    %vm2508 = vcmp.eq.f32.partialorder %v2507, 8.507059e+37
    %v2509 = vand.u32 %v2497, 2147483648
    %v2510 = vor.u32 1.1754944e-38, %v2509
    %v2511 = vsel %vm2508, %v2510, %v2506
    %v2512 = vmul.f32 %v2487, %v2511
    %v2513 = vmin.f32 %v2512, 1.0
    %v2514 = vmax.f32 %v2513, -1.0
    %v2515 = vmul.f32 %v1293, %v1293
    %v2516 = vmin.f32 16.0, %v2515
    %v2517 = vmul.f32 %v2516, 2.1237322e-06
    %v2518 = vadd.f32 %v2517, 0.00028619796
    %v2519 = vmul.f32 %v2516, %v2518
    %v2520 = vadd.f32 %v2519, 0.0036580483
    %v2521 = vmul.f32 %v2516, %v2520
    %v2522 = vadd.f32 %v2521, 0.05243302
    %v2523 = vmul.f32 %v2516, %v2522
    %v2524 = vadd.f32 %v2523, 0.18741608
    %v2525 = vmul.f32 %v2516, %v2524
    %v2526 = vadd.f32 %v2525, 1.1283791
    %v2527 = vmul.f32 %v1293, %v2526
    %v2528 = vmul.f32 %v2516, 3.8918573e-05
    %v2529 = vadd.f32 %v2528, 0.001143296
    %v2530 = vmul.f32 %v2516, %v2529
    %v2531 = vadd.f32 %v2530, 0.014752088
    %v2532 = vmul.f32 %v2516, %v2531
    %v2533 = vadd.f32 %v2532, 0.112945676
    %v2534 = vmul.f32 %v2516, %v2533
    %v2535 = vadd.f32 %v2534, 0.4994258
    %v2536 = vmul.f32 %v2516, %v2535
    %v2537 = vadd.f32 %v2536, 1.0
    %v2538 = vrcp.pop %v2537
    %v2539 = vmul.f32 %v2537, %v2538
    %v2540 = vsub.f32 1.0, %v2539
    %v2541 = vmul.f32 %v2538, %v2540
    %v2542 = vadd.f32 %v2538, %v2541
    %vm2543 = vweird.f32 %v2537
    %vm2544 = vweird.f32 %v2538
    %vm2545 = vmor %vm2543, %vm2544
    %v2546 = vsel %vm2545, %v2538, %v2542
    %v2547 = vand.u32 2147483647, %v2537
    %vm2548 = vcmp.eq.f32.partialorder %v2547, 8.507059e+37
    %v2549 = vand.u32 %v2537, 2147483648
    %v2550 = vor.u32 1.1754944e-38, %v2549
    %v2551 = vsel %vm2548, %v2550, %v2546
    %v2552 = vmul.f32 %v2527, %v2551
    %v2553 = vmin.f32 %v2552, 1.0
    %v2554 = vmax.f32 %v2553, -1.0
    %v2555 = vmul.f32 %v1294, %v1294
    %v2556 = vmin.f32 16.0, %v2555
    %v2557 = vmul.f32 %v2556, 2.1237322e-06
    %v2558 = vadd.f32 %v2557, 0.00028619796
    %v2559 = vmul.f32 %v2556, %v2558
    %v2560 = vadd.f32 %v2559, 0.0036580483
    %v2561 = vmul.f32 %v2556, %v2560
    %v2562 = vadd.f32 %v2561, 0.05243302
    %v2563 = vmul.f32 %v2556, %v2562
    %v2564 = vadd.f32 %v2563, 0.18741608
    %v2565 = vmul.f32 %v2556, %v2564
    %v2566 = vadd.f32 %v2565, 1.1283791
    %v2567 = vmul.f32 %v1294, %v2566
    %v2568 = vmul.f32 %v2556, 3.8918573e-05
    %v2569 = vadd.f32 %v2568, 0.001143296
    %v2570 = vmul.f32 %v2556, %v2569
    %v2571 = vadd.f32 %v2570, 0.014752088
    %v2572 = vmul.f32 %v2556, %v2571
    %v2573 = vadd.f32 %v2572, 0.112945676
    %v2574 = vmul.f32 %v2556, %v2573
    %v2575 = vadd.f32 %v2574, 0.4994258
    %v2576 = vmul.f32 %v2556, %v2575
    %v2577 = vadd.f32 %v2576, 1.0
    %v2578 = vrcp.pop %v2577
    %v2579 = vmul.f32 %v2577, %v2578
    %v2580 = vsub.f32 1.0, %v2579
    %v2581 = vmul.f32 %v2578, %v2580
    %v2582 = vadd.f32 %v2578, %v2581
    %vm2583 = vweird.f32 %v2577
    %vm2584 = vweird.f32 %v2578
    %vm2585 = vmor %vm2583, %vm2584
    %v2586 = vsel %vm2585, %v2578, %v2582
    %v2587 = vand.u32 2147483647, %v2577
    %vm2588 = vcmp.eq.f32.partialorder %v2587, 8.507059e+37
    %v2589 = vand.u32 %v2577, 2147483648
    %v2590 = vor.u32 1.1754944e-38, %v2589
    %v2591 = vsel %vm2588, %v2590, %v2586
    %v2592 = vmul.f32 %v2567, %v2591
    %v2593 = vmin.f32 %v2592, 1.0
    %v2594 = vmax.f32 %v2593, -1.0
    %v2595 = vmul.f32 %v1295, %v1295
    %v2596 = vmin.f32 16.0, %v2595
    %v2597 = vmul.f32 %v2596, 2.1237322e-06
    %v2598 = vadd.f32 %v2597, 0.00028619796
    %v2599 = vmul.f32 %v2596, %v2598
    %v2600 = vadd.f32 %v2599, 0.0036580483
    %v2601 = vmul.f32 %v2596, %v2600
    %v2602 = vadd.f32 %v2601, 0.05243302
    %v2603 = vmul.f32 %v2596, %v2602
    %v2604 = vadd.f32 %v2603, 0.18741608
    %v2605 = vmul.f32 %v2596, %v2604
    %v2606 = vadd.f32 %v2605, 1.1283791
    %v2607 = vmul.f32 %v1295, %v2606
    %v2608 = vmul.f32 %v2596, 3.8918573e-05
    %v2609 = vadd.f32 %v2608, 0.001143296
    %v2610 = vmul.f32 %v2596, %v2609
    %v2611 = vadd.f32 %v2610, 0.014752088
    %v2612 = vmul.f32 %v2596, %v2611
    %v2613 = vadd.f32 %v2612, 0.112945676
    %v2614 = vmul.f32 %v2596, %v2613
    %v2615 = vadd.f32 %v2614, 0.4994258
    %v2616 = vmul.f32 %v2596, %v2615
    %v2617 = vadd.f32 %v2616, 1.0
    %v2618 = vrcp.pop %v2617
    %v2619 = vmul.f32 %v2617, %v2618
    %v2620 = vsub.f32 1.0, %v2619
    %v2621 = vmul.f32 %v2618, %v2620
    %v2622 = vadd.f32 %v2618, %v2621
    %vm2623 = vweird.f32 %v2617
    %vm2624 = vweird.f32 %v2618
    %vm2625 = vmor %vm2623, %vm2624
    %v2626 = vsel %vm2625, %v2618, %v2622
    %v2627 = vand.u32 2147483647, %v2617
    %vm2628 = vcmp.eq.f32.partialorder %v2627, 8.507059e+37
    %v2629 = vand.u32 %v2617, 2147483648
    %v2630 = vor.u32 1.1754944e-38, %v2629
    %v2631 = vsel %vm2628, %v2630, %v2626
    %v2632 = vmul.f32 %v2607, %v2631
    %v2633 = vmin.f32 %v2632, 1.0
    %v2634 = vmax.f32 %v2633, -1.0
    %v2635 = vmul.f32 %v1296, %v1296
    %v2636 = vmin.f32 16.0, %v2635
    %v2637 = vmul.f32 %v2636, 2.1237322e-06
    %v2638 = vadd.f32 %v2637, 0.00028619796
    %v2639 = vmul.f32 %v2636, %v2638
    %v2640 = vadd.f32 %v2639, 0.0036580483
    %v2641 = vmul.f32 %v2636, %v2640
    %v2642 = vadd.f32 %v2641, 0.05243302
    %v2643 = vmul.f32 %v2636, %v2642
    %v2644 = vadd.f32 %v2643, 0.18741608
    %v2645 = vmul.f32 %v2636, %v2644
    %v2646 = vadd.f32 %v2645, 1.1283791
    %v2647 = vmul.f32 %v1296, %v2646
    %v2648 = vmul.f32 %v2636, 3.8918573e-05
    %v2649 = vadd.f32 %v2648, 0.001143296
    %v2650 = vmul.f32 %v2636, %v2649
    %v2651 = vadd.f32 %v2650, 0.014752088
    %v2652 = vmul.f32 %v2636, %v2651
    %v2653 = vadd.f32 %v2652, 0.112945676
    %v2654 = vmul.f32 %v2636, %v2653
    %v2655 = vadd.f32 %v2654, 0.4994258
    %v2656 = vmul.f32 %v2636, %v2655
    %v2657 = vadd.f32 %v2656, 1.0
    %v2658 = vrcp.pop %v2657
    %v2659 = vmul.f32 %v2657, %v2658
    %v2660 = vsub.f32 1.0, %v2659
    %v2661 = vmul.f32 %v2658, %v2660
    %v2662 = vadd.f32 %v2658, %v2661
    %vm2663 = vweird.f32 %v2657
    %vm2664 = vweird.f32 %v2658
    %vm2665 = vmor %vm2663, %vm2664
    %v2666 = vsel %vm2665, %v2658, %v2662
    %v2667 = vand.u32 2147483647, %v2657
    %vm2668 = vcmp.eq.f32.partialorder %v2667, 8.507059e+37
    %v2669 = vand.u32 %v2657, 2147483648
    %v2670 = vor.u32 1.1754944e-38, %v2669
    %v2671 = vsel %vm2668, %v2670, %v2666
    %v2672 = vmul.f32 %v2647, %v2671
    %v2673 = vmin.f32 %v2672, 1.0
    %v2674 = vmax.f32 %v2673, -1.0
    %v2675 = vmul.f32 %v1297, %v1297
    %v2676 = vmin.f32 16.0, %v2675
    %v2677 = vmul.f32 %v2676, 2.1237322e-06
    %v2678 = vadd.f32 %v2677, 0.00028619796
    %v2679 = vmul.f32 %v2676, %v2678
    %v2680 = vadd.f32 %v2679, 0.0036580483
    %v2681 = vmul.f32 %v2676, %v2680
    %v2682 = vadd.f32 %v2681, 0.05243302
    %v2683 = vmul.f32 %v2676, %v2682
    %v2684 = vadd.f32 %v2683, 0.18741608
    %v2685 = vmul.f32 %v2676, %v2684
    %v2686 = vadd.f32 %v2685, 1.1283791
    %v2687 = vmul.f32 %v1297, %v2686
    %v2688 = vmul.f32 %v2676, 3.8918573e-05
    %v2689 = vadd.f32 %v2688, 0.001143296
    %v2690 = vmul.f32 %v2676, %v2689
    %v2691 = vadd.f32 %v2690, 0.014752088
    %v2692 = vmul.f32 %v2676, %v2691
    %v2693 = vadd.f32 %v2692, 0.112945676
    %v2694 = vmul.f32 %v2676, %v2693
    %v2695 = vadd.f32 %v2694, 0.4994258
    %v2696 = vmul.f32 %v2676, %v2695
    %v2697 = vadd.f32 %v2696, 1.0
    %v2698 = vrcp.pop %v2697
    %v2699 = vmul.f32 %v2697, %v2698
    %v2700 = vsub.f32 1.0, %v2699
    %v2701 = vmul.f32 %v2698, %v2700
    %v2702 = vadd.f32 %v2698, %v2701
    %vm2703 = vweird.f32 %v2697
    %vm2704 = vweird.f32 %v2698
    %vm2705 = vmor %vm2703, %vm2704
    %v2706 = vsel %vm2705, %v2698, %v2702
    %v2707 = vand.u32 2147483647, %v2697
    %vm2708 = vcmp.eq.f32.partialorder %v2707, 8.507059e+37
    %v2709 = vand.u32 %v2697, 2147483648
    %v2710 = vor.u32 1.1754944e-38, %v2709
    %v2711 = vsel %vm2708, %v2710, %v2706
    %v2712 = vmul.f32 %v2687, %v2711
    %v2713 = vmin.f32 %v2712, 1.0
    %v2714 = vmax.f32 %v2713, -1.0
    %v2715 = vmul.f32 %v1298, %v1298
    %v2716 = vmin.f32 16.0, %v2715
    %v2717 = vmul.f32 %v2716, 2.1237322e-06
    %v2718 = vadd.f32 %v2717, 0.00028619796
    %v2719 = vmul.f32 %v2716, %v2718
    %v2720 = vadd.f32 %v2719, 0.0036580483
    %v2721 = vmul.f32 %v2716, %v2720
    %v2722 = vadd.f32 %v2721, 0.05243302
    %v2723 = vmul.f32 %v2716, %v2722
    %v2724 = vadd.f32 %v2723, 0.18741608
    %v2725 = vmul.f32 %v2716, %v2724
    %v2726 = vadd.f32 %v2725, 1.1283791
    %v2727 = vmul.f32 %v1298, %v2726
    %v2728 = vmul.f32 %v2716, 3.8918573e-05
    %v2729 = vadd.f32 %v2728, 0.001143296
    %v2730 = vmul.f32 %v2716, %v2729
    %v2731 = vadd.f32 %v2730, 0.014752088
    %v2732 = vmul.f32 %v2716, %v2731
    %v2733 = vadd.f32 %v2732, 0.112945676
    %v2734 = vmul.f32 %v2716, %v2733
    %v2735 = vadd.f32 %v2734, 0.4994258
    %v2736 = vmul.f32 %v2716, %v2735
    %v2737 = vadd.f32 %v2736, 1.0
    %v2738 = vrcp.pop %v2737
    %v2739 = vmul.f32 %v2737, %v2738
    %v2740 = vsub.f32 1.0, %v2739
    %v2741 = vmul.f32 %v2738, %v2740
    %v2742 = vadd.f32 %v2738, %v2741
    %vm2743 = vweird.f32 %v2737
    %vm2744 = vweird.f32 %v2738
    %vm2745 = vmor %vm2743, %vm2744
    %v2746 = vsel %vm2745, %v2738, %v2742
    %v2747 = vand.u32 2147483647, %v2737
    %vm2748 = vcmp.eq.f32.partialorder %v2747, 8.507059e+37
    %v2749 = vand.u32 %v2737, 2147483648
    %v2750 = vor.u32 1.1754944e-38, %v2749
    %v2751 = vsel %vm2748, %v2750, %v2746
    %v2752 = vmul.f32 %v2727, %v2751
    %v2753 = vmin.f32 %v2752, 1.0
    %v2754 = vmax.f32 %v2753, -1.0
    %v2755 = vmul.f32 %v1299, %v1299
    %v2756 = vmin.f32 16.0, %v2755
    %v2757 = vmul.f32 %v2756, 2.1237322e-06
    %v2758 = vadd.f32 %v2757, 0.00028619796
    %v2759 = vmul.f32 %v2756, %v2758
    %v2760 = vadd.f32 %v2759, 0.0036580483
    %v2761 = vmul.f32 %v2756, %v2760
    %v2762 = vadd.f32 %v2761, 0.05243302
    %v2763 = vmul.f32 %v2756, %v2762
    %v2764 = vadd.f32 %v2763, 0.18741608
    %v2765 = vmul.f32 %v2756, %v2764
    %v2766 = vadd.f32 %v2765, 1.1283791
    %v2767 = vmul.f32 %v1299, %v2766
    %v2768 = vmul.f32 %v2756, 3.8918573e-05
    %v2769 = vadd.f32 %v2768, 0.001143296
    %v2770 = vmul.f32 %v2756, %v2769
    %v2771 = vadd.f32 %v2770, 0.014752088
    %v2772 = vmul.f32 %v2756, %v2771
    %v2773 = vadd.f32 %v2772, 0.112945676
    %v2774 = vmul.f32 %v2756, %v2773
    %v2775 = vadd.f32 %v2774, 0.4994258
    %v2776 = vmul.f32 %v2756, %v2775
    %v2777 = vadd.f32 %v2776, 1.0
    %v2778 = vrcp.pop %v2777
    %v2779 = vmul.f32 %v2777, %v2778
    %v2780 = vsub.f32 1.0, %v2779
    %v2781 = vmul.f32 %v2778, %v2780
    %v2782 = vadd.f32 %v2778, %v2781
    %vm2783 = vweird.f32 %v2777
    %vm2784 = vweird.f32 %v2778
    %vm2785 = vmor %vm2783, %vm2784
    %v2786 = vsel %vm2785, %v2778, %v2782
    %v2787 = vand.u32 2147483647, %v2777
    %vm2788 = vcmp.eq.f32.partialorder %v2787, 8.507059e+37
    %v2789 = vand.u32 %v2777, 2147483648
    %v2790 = vor.u32 1.1754944e-38, %v2789
    %v2791 = vsel %vm2788, %v2790, %v2786
    %v2792 = vmul.f32 %v2767, %v2791
    %v2793 = vmin.f32 %v2792, 1.0
    %v2794 = vmax.f32 %v2793, -1.0
    %v2795 = vmul.f32 %v1300, %v1300
    %v2796 = vmin.f32 16.0, %v2795
    %v2797 = vmul.f32 %v2796, 2.1237322e-06
    %v2798 = vadd.f32 %v2797, 0.00028619796
    %v2799 = vmul.f32 %v2796, %v2798
    %v2800 = vadd.f32 %v2799, 0.0036580483
    %v2801 = vmul.f32 %v2796, %v2800
    %v2802 = vadd.f32 %v2801, 0.05243302
    %v2803 = vmul.f32 %v2796, %v2802
    %v2804 = vadd.f32 %v2803, 0.18741608
    %v2805 = vmul.f32 %v2796, %v2804
    %v2806 = vadd.f32 %v2805, 1.1283791
    %v2807 = vmul.f32 %v1300, %v2806
    %v2808 = vmul.f32 %v2796, 3.8918573e-05
    %v2809 = vadd.f32 %v2808, 0.001143296
    %v2810 = vmul.f32 %v2796, %v2809
    %v2811 = vadd.f32 %v2810, 0.014752088
    %v2812 = vmul.f32 %v2796, %v2811
    %v2813 = vadd.f32 %v2812, 0.112945676
    %v2814 = vmul.f32 %v2796, %v2813
    %v2815 = vadd.f32 %v2814, 0.4994258
    %v2816 = vmul.f32 %v2796, %v2815
    %v2817 = vadd.f32 %v2816, 1.0
    %v2818 = vrcp.pop %v2817
    %v2819 = vmul.f32 %v2817, %v2818
    %v2820 = vsub.f32 1.0, %v2819
    %v2821 = vmul.f32 %v2818, %v2820
    %v2822 = vadd.f32 %v2818, %v2821
    %vm2823 = vweird.f32 %v2817
    %vm2824 = vweird.f32 %v2818
    %vm2825 = vmor %vm2823, %vm2824
    %v2826 = vsel %vm2825, %v2818, %v2822
    %v2827 = vand.u32 2147483647, %v2817
    %vm2828 = vcmp.eq.f32.partialorder %v2827, 8.507059e+37
    %v2829 = vand.u32 %v2817, 2147483648
    %v2830 = vor.u32 1.1754944e-38, %v2829
    %v2831 = vsel %vm2828, %v2830, %v2826
    %v2832 = vmul.f32 %v2807, %v2831
    %v2833 = vmin.f32 %v2832, 1.0
    %v2834 = vmax.f32 %v2833, -1.0
    %v2835 = vmul.f32 %v1301, %v1301
    %v2836 = vmin.f32 16.0, %v2835
    %v2837 = vmul.f32 %v2836, 2.1237322e-06
    %v2838 = vadd.f32 %v2837, 0.00028619796
    %v2839 = vmul.f32 %v2836, %v2838
    %v2840 = vadd.f32 %v2839, 0.0036580483
    %v2841 = vmul.f32 %v2836, %v2840
    %v2842 = vadd.f32 %v2841, 0.05243302
    %v2843 = vmul.f32 %v2836, %v2842
    %v2844 = vadd.f32 %v2843, 0.18741608
    %v2845 = vmul.f32 %v2836, %v2844
    %v2846 = vadd.f32 %v2845, 1.1283791
    %v2847 = vmul.f32 %v1301, %v2846
    %v2848 = vmul.f32 %v2836, 3.8918573e-05
    %v2849 = vadd.f32 %v2848, 0.001143296
    %v2850 = vmul.f32 %v2836, %v2849
    %v2851 = vadd.f32 %v2850, 0.014752088
    %v2852 = vmul.f32 %v2836, %v2851
    %v2853 = vadd.f32 %v2852, 0.112945676
    %v2854 = vmul.f32 %v2836, %v2853
    %v2855 = vadd.f32 %v2854, 0.4994258
    %v2856 = vmul.f32 %v2836, %v2855
    %v2857 = vadd.f32 %v2856, 1.0
    %v2858 = vrcp.pop %v2857
    %v2859 = vmul.f32 %v2857, %v2858
    %v2860 = vsub.f32 1.0, %v2859
    %v2861 = vmul.f32 %v2858, %v2860
    %v2862 = vadd.f32 %v2858, %v2861
    %vm2863 = vweird.f32 %v2857
    %vm2864 = vweird.f32 %v2858
    %vm2865 = vmor %vm2863, %vm2864
    %v2866 = vsel %vm2865, %v2858, %v2862
    %v2867 = vand.u32 2147483647, %v2857
    %vm2868 = vcmp.eq.f32.partialorder %v2867, 8.507059e+37
    %v2869 = vand.u32 %v2857, 2147483648
    %v2870 = vor.u32 1.1754944e-38, %v2869
    %v2871 = vsel %vm2868, %v2870, %v2866
    %v2872 = vmul.f32 %v2847, %v2871
    %v2873 = vmin.f32 %v2872, 1.0
    %v2874 = vmax.f32 %v2873, -1.0
    %v2875 = vmul.f32 %v1302, %v1302
    %v2876 = vmin.f32 16.0, %v2875
    %v2877 = vmul.f32 %v2876, 2.1237322e-06
    %v2878 = vadd.f32 %v2877, 0.00028619796
    %v2879 = vmul.f32 %v2876, %v2878
    %v2880 = vadd.f32 %v2879, 0.0036580483
    %v2881 = vmul.f32 %v2876, %v2880
    %v2882 = vadd.f32 %v2881, 0.05243302
    %v2883 = vmul.f32 %v2876, %v2882
    %v2884 = vadd.f32 %v2883, 0.18741608
    %v2885 = vmul.f32 %v2876, %v2884
    %v2886 = vadd.f32 %v2885, 1.1283791
    %v2887 = vmul.f32 %v1302, %v2886
    %v2888 = vmul.f32 %v2876, 3.8918573e-05
    %v2889 = vadd.f32 %v2888, 0.001143296
    %v2890 = vmul.f32 %v2876, %v2889
    %v2891 = vadd.f32 %v2890, 0.014752088
    %v2892 = vmul.f32 %v2876, %v2891
    %v2893 = vadd.f32 %v2892, 0.112945676
    %v2894 = vmul.f32 %v2876, %v2893
    %v2895 = vadd.f32 %v2894, 0.4994258
    %v2896 = vmul.f32 %v2876, %v2895
    %v2897 = vadd.f32 %v2896, 1.0
    %v2898 = vrcp.pop %v2897
    %v2899 = vmul.f32 %v2897, %v2898
    %v2900 = vsub.f32 1.0, %v2899
    %v2901 = vmul.f32 %v2898, %v2900
    %v2902 = vadd.f32 %v2898, %v2901
    %vm2903 = vweird.f32 %v2897
    %vm2904 = vweird.f32 %v2898
    %vm2905 = vmor %vm2903, %vm2904
    %v2906 = vsel %vm2905, %v2898, %v2902
    %v2907 = vand.u32 2147483647, %v2897
    %vm2908 = vcmp.eq.f32.partialorder %v2907, 8.507059e+37
    %v2909 = vand.u32 %v2897, 2147483648
    %v2910 = vor.u32 1.1754944e-38, %v2909
    %v2911 = vsel %vm2908, %v2910, %v2906
    %v2912 = vmul.f32 %v2887, %v2911
    %v2913 = vmin.f32 %v2912, 1.0
    %v2914 = vmax.f32 %v2913, -1.0
    %v2915 = vmul.f32 %v1303, %v1303
    %v2916 = vmin.f32 16.0, %v2915
    %v2917 = vmul.f32 %v2916, 2.1237322e-06
    %v2918 = vadd.f32 %v2917, 0.00028619796
    %v2919 = vmul.f32 %v2916, %v2918
    %v2920 = vadd.f32 %v2919, 0.0036580483
    %v2921 = vmul.f32 %v2916, %v2920
    %v2922 = vadd.f32 %v2921, 0.05243302
    %v2923 = vmul.f32 %v2916, %v2922
    %v2924 = vadd.f32 %v2923, 0.18741608
    %v2925 = vmul.f32 %v2916, %v2924
    %v2926 = vadd.f32 %v2925, 1.1283791
    %v2927 = vmul.f32 %v1303, %v2926
    %v2928 = vmul.f32 %v2916, 3.8918573e-05
    %v2929 = vadd.f32 %v2928, 0.001143296
    %v2930 = vmul.f32 %v2916, %v2929
    %v2931 = vadd.f32 %v2930, 0.014752088
    %v2932 = vmul.f32 %v2916, %v2931
    %v2933 = vadd.f32 %v2932, 0.112945676
    %v2934 = vmul.f32 %v2916, %v2933
    %v2935 = vadd.f32 %v2934, 0.4994258
    %v2936 = vmul.f32 %v2916, %v2935
    %v2937 = vadd.f32 %v2936, 1.0
    %v2938 = vrcp.pop %v2937
    %v2939 = vmul.f32 %v2937, %v2938
    %v2940 = vsub.f32 1.0, %v2939
    %v2941 = vmul.f32 %v2938, %v2940
    %v2942 = vadd.f32 %v2938, %v2941
    %vm2943 = vweird.f32 %v2937
    %vm2944 = vweird.f32 %v2938
    %vm2945 = vmor %vm2943, %vm2944
    %v2946 = vsel %vm2945, %v2938, %v2942
    %v2947 = vand.u32 2147483647, %v2937
    %vm2948 = vcmp.eq.f32.partialorder %v2947, 8.507059e+37
    %v2949 = vand.u32 %v2937, 2147483648
    %v2950 = vor.u32 1.1754944e-38, %v2949
    %v2951 = vsel %vm2948, %v2950, %v2946
    %v2952 = vmul.f32 %v2927, %v2951
    %v2953 = vmin.f32 %v2952, 1.0
    %v2954 = vmax.f32 %v2953, -1.0
    %v2955 = vmul.f32 %v1304, %v1304
    %v2956 = vmin.f32 16.0, %v2955
    %v2957 = vmul.f32 %v2956, 2.1237322e-06
    %v2958 = vadd.f32 %v2957, 0.00028619796
    %v2959 = vmul.f32 %v2956, %v2958
    %v2960 = vadd.f32 %v2959, 0.0036580483
    %v2961 = vmul.f32 %v2956, %v2960
    %v2962 = vadd.f32 %v2961, 0.05243302
    %v2963 = vmul.f32 %v2956, %v2962
    %v2964 = vadd.f32 %v2963, 0.18741608
    %v2965 = vmul.f32 %v2956, %v2964
    %v2966 = vadd.f32 %v2965, 1.1283791
    %v2967 = vmul.f32 %v1304, %v2966
    %v2968 = vmul.f32 %v2956, 3.8918573e-05
    %v2969 = vadd.f32 %v2968, 0.001143296
    %v2970 = vmul.f32 %v2956, %v2969
    %v2971 = vadd.f32 %v2970, 0.014752088
    %v2972 = vmul.f32 %v2956, %v2971
    %v2973 = vadd.f32 %v2972, 0.112945676
    %v2974 = vmul.f32 %v2956, %v2973
    %v2975 = vadd.f32 %v2974, 0.4994258
    %v2976 = vmul.f32 %v2956, %v2975
    %v2977 = vadd.f32 %v2976, 1.0
    %v2978 = vrcp.pop %v2977
    %v2979 = vmul.f32 %v2977, %v2978
    %v2980 = vsub.f32 1.0, %v2979
    %v2981 = vmul.f32 %v2978, %v2980
    %v2982 = vadd.f32 %v2978, %v2981
    %vm2983 = vweird.f32 %v2977
    %vm2984 = vweird.f32 %v2978
    %vm2985 = vmor %vm2983, %vm2984
    %v2986 = vsel %vm2985, %v2978, %v2982
    %v2987 = vand.u32 2147483647, %v2977
    %vm2988 = vcmp.eq.f32.partialorder %v2987, 8.507059e+37
    %v2989 = vand.u32 %v2977, 2147483648
    %v2990 = vor.u32 1.1754944e-38, %v2989
    %v2991 = vsel %vm2988, %v2990, %v2986
    %v2992 = vmul.f32 %v2967, %v2991
    %v2993 = vmin.f32 %v2992, 1.0
    %v2994 = vmax.f32 %v2993, -1.0
    %v2995 = vmul.f32 %v1305, %v1305
    %v2996 = vmin.f32 16.0, %v2995
    %v2997 = vmul.f32 %v2996, 2.1237322e-06
    %v2998 = vadd.f32 %v2997, 0.00028619796
    %v2999 = vmul.f32 %v2996, %v2998
    %v3000 = vadd.f32 %v2999, 0.0036580483
    %v3001 = vmul.f32 %v2996, %v3000
    %v3002 = vadd.f32 %v3001, 0.05243302
    %v3003 = vmul.f32 %v2996, %v3002
    %v3004 = vadd.f32 %v3003, 0.18741608
    %v3005 = vmul.f32 %v2996, %v3004
    %v3006 = vadd.f32 %v3005, 1.1283791
    %v3007 = vmul.f32 %v1305, %v3006
    %v3008 = vmul.f32 %v2996, 3.8918573e-05
    %v3009 = vadd.f32 %v3008, 0.001143296
    %v3010 = vmul.f32 %v2996, %v3009
    %v3011 = vadd.f32 %v3010, 0.014752088
    %v3012 = vmul.f32 %v2996, %v3011
    %v3013 = vadd.f32 %v3012, 0.112945676
    %v3014 = vmul.f32 %v2996, %v3013
    %v3015 = vadd.f32 %v3014, 0.4994258
    %v3016 = vmul.f32 %v2996, %v3015
    %v3017 = vadd.f32 %v3016, 1.0
    %v3018 = vrcp.pop %v3017
    %v3019 = vmul.f32 %v3017, %v3018
    %v3020 = vsub.f32 1.0, %v3019
    %v3021 = vmul.f32 %v3018, %v3020
    %v3022 = vadd.f32 %v3018, %v3021
    %vm3023 = vweird.f32 %v3017
    %vm3024 = vweird.f32 %v3018
    %vm3025 = vmor %vm3023, %vm3024
    %v3026 = vsel %vm3025, %v3018, %v3022
    %v3027 = vand.u32 2147483647, %v3017
    %vm3028 = vcmp.eq.f32.partialorder %v3027, 8.507059e+37
    %v3029 = vand.u32 %v3017, 2147483648
    %v3030 = vor.u32 1.1754944e-38, %v3029
    %v3031 = vsel %vm3028, %v3030, %v3026
    %v3032 = vmul.f32 %v3007, %v3031
    %v3033 = vmin.f32 %v3032, 1.0
    %v3034 = vmax.f32 %v3033, -1.0
    %v3035 = vmul.f32 %v1306, %v1306
    %v3036 = vmin.f32 16.0, %v3035
    %v3037 = vmul.f32 %v3036, 2.1237322e-06
    %v3038 = vadd.f32 %v3037, 0.00028619796
    %v3039 = vmul.f32 %v3036, %v3038
    %v3040 = vadd.f32 %v3039, 0.0036580483
    %v3041 = vmul.f32 %v3036, %v3040
    %v3042 = vadd.f32 %v3041, 0.05243302
    %v3043 = vmul.f32 %v3036, %v3042
    %v3044 = vadd.f32 %v3043, 0.18741608
    %v3045 = vmul.f32 %v3036, %v3044
    %v3046 = vadd.f32 %v3045, 1.1283791
    %v3047 = vmul.f32 %v1306, %v3046
    %v3048 = vmul.f32 %v3036, 3.8918573e-05
    %v3049 = vadd.f32 %v3048, 0.001143296
    %v3050 = vmul.f32 %v3036, %v3049
    %v3051 = vadd.f32 %v3050, 0.014752088
    %v3052 = vmul.f32 %v3036, %v3051
    %v3053 = vadd.f32 %v3052, 0.112945676
    %v3054 = vmul.f32 %v3036, %v3053
    %v3055 = vadd.f32 %v3054, 0.4994258
    %v3056 = vmul.f32 %v3036, %v3055
    %v3057 = vadd.f32 %v3056, 1.0
    %v3058 = vrcp.pop %v3057
    %v3059 = vmul.f32 %v3057, %v3058
    %v3060 = vsub.f32 1.0, %v3059
    %v3061 = vmul.f32 %v3058, %v3060
    %v3062 = vadd.f32 %v3058, %v3061
    %vm3063 = vweird.f32 %v3057
    %vm3064 = vweird.f32 %v3058
    %vm3065 = vmor %vm3063, %vm3064
    %v3066 = vsel %vm3065, %v3058, %v3062
    %v3067 = vand.u32 2147483647, %v3057
    %vm3068 = vcmp.eq.f32.partialorder %v3067, 8.507059e+37
    %v3069 = vand.u32 %v3057, 2147483648
    %v3070 = vor.u32 1.1754944e-38, %v3069
    %v3071 = vsel %vm3068, %v3070, %v3066
    %v3072 = vmul.f32 %v3047, %v3071
    %v3073 = vmin.f32 %v3072, 1.0
    %v3074 = vmax.f32 %v3073, -1.0
    %v3075 = vmul.f32 %v1307, %v1307
    %v3076 = vmin.f32 16.0, %v3075
    %v3077 = vmul.f32 %v3076, 2.1237322e-06
    %v3078 = vadd.f32 %v3077, 0.00028619796
    %v3079 = vmul.f32 %v3076, %v3078
    %v3080 = vadd.f32 %v3079, 0.0036580483
    %v3081 = vmul.f32 %v3076, %v3080
    %v3082 = vadd.f32 %v3081, 0.05243302
    %v3083 = vmul.f32 %v3076, %v3082
    %v3084 = vadd.f32 %v3083, 0.18741608
    %v3085 = vmul.f32 %v3076, %v3084
    %v3086 = vadd.f32 %v3085, 1.1283791
    %v3087 = vmul.f32 %v1307, %v3086
    %v3088 = vmul.f32 %v3076, 3.8918573e-05
    %v3089 = vadd.f32 %v3088, 0.001143296
    %v3090 = vmul.f32 %v3076, %v3089
    %v3091 = vadd.f32 %v3090, 0.014752088
    %v3092 = vmul.f32 %v3076, %v3091
    %v3093 = vadd.f32 %v3092, 0.112945676
    %v3094 = vmul.f32 %v3076, %v3093
    %v3095 = vadd.f32 %v3094, 0.4994258
    %v3096 = vmul.f32 %v3076, %v3095
    %v3097 = vadd.f32 %v3096, 1.0
    %v3098 = vrcp.pop %v3097
    %v3099 = vmul.f32 %v3097, %v3098
    %v3100 = vsub.f32 1.0, %v3099
    %v3101 = vmul.f32 %v3098, %v3100
    %v3102 = vadd.f32 %v3098, %v3101
    %vm3103 = vweird.f32 %v3097
    %vm3104 = vweird.f32 %v3098
    %vm3105 = vmor %vm3103, %vm3104
    %v3106 = vsel %vm3105, %v3098, %v3102
    %v3107 = vand.u32 2147483647, %v3097
    %vm3108 = vcmp.eq.f32.partialorder %v3107, 8.507059e+37
    %v3109 = vand.u32 %v3097, 2147483648
    %v3110 = vor.u32 1.1754944e-38, %v3109
    %v3111 = vsel %vm3108, %v3110, %v3106
    %v3112 = vmul.f32 %v3087, %v3111
    %v3113 = vmin.f32 %v3112, 1.0
    %v3114 = vmax.f32 %v3113, -1.0
    %v3115 = vmul.f32 %v1308, %v1308
    %v3116 = vmin.f32 16.0, %v3115
    %v3117 = vmul.f32 %v3116, 2.1237322e-06
    %v3118 = vadd.f32 %v3117, 0.00028619796
    %v3119 = vmul.f32 %v3116, %v3118
    %v3120 = vadd.f32 %v3119, 0.0036580483
    %v3121 = vmul.f32 %v3116, %v3120
    %v3122 = vadd.f32 %v3121, 0.05243302
    %v3123 = vmul.f32 %v3116, %v3122
    %v3124 = vadd.f32 %v3123, 0.18741608
    %v3125 = vmul.f32 %v3116, %v3124
    %v3126 = vadd.f32 %v3125, 1.1283791
    %v3127 = vmul.f32 %v1308, %v3126
    %v3128 = vmul.f32 %v3116, 3.8918573e-05
    %v3129 = vadd.f32 %v3128, 0.001143296
    %v3130 = vmul.f32 %v3116, %v3129
    %v3131 = vadd.f32 %v3130, 0.014752088
    %v3132 = vmul.f32 %v3116, %v3131
    %v3133 = vadd.f32 %v3132, 0.112945676
    %v3134 = vmul.f32 %v3116, %v3133
    %v3135 = vadd.f32 %v3134, 0.4994258
    %v3136 = vmul.f32 %v3116, %v3135
    %v3137 = vadd.f32 %v3136, 1.0
    %v3138 = vrcp.pop %v3137
    %v3139 = vmul.f32 %v3137, %v3138
    %v3140 = vsub.f32 1.0, %v3139
    %v3141 = vmul.f32 %v3138, %v3140
    %v3142 = vadd.f32 %v3138, %v3141
    %vm3143 = vweird.f32 %v3137
    %vm3144 = vweird.f32 %v3138
    %vm3145 = vmor %vm3143, %vm3144
    %v3146 = vsel %vm3145, %v3138, %v3142
    %v3147 = vand.u32 2147483647, %v3137
    %vm3148 = vcmp.eq.f32.partialorder %v3147, 8.507059e+37
    %v3149 = vand.u32 %v3137, 2147483648
    %v3150 = vor.u32 1.1754944e-38, %v3149
    %v3151 = vsel %vm3148, %v3150, %v3146
    %v3152 = vmul.f32 %v3127, %v3151
    %v3153 = vmin.f32 %v3152, 1.0
    %v3154 = vmax.f32 %v3153, -1.0
    %v3155 = vmul.f32 %v1309, %v1309
    %v3156 = vmin.f32 16.0, %v3155
    %v3157 = vmul.f32 %v3156, 2.1237322e-06
    %v3158 = vadd.f32 %v3157, 0.00028619796
    %v3159 = vmul.f32 %v3156, %v3158
    %v3160 = vadd.f32 %v3159, 0.0036580483
    %v3161 = vmul.f32 %v3156, %v3160
    %v3162 = vadd.f32 %v3161, 0.05243302
    %v3163 = vmul.f32 %v3156, %v3162
    %v3164 = vadd.f32 %v3163, 0.18741608
    %v3165 = vmul.f32 %v3156, %v3164
    %v3166 = vadd.f32 %v3165, 1.1283791
    %v3167 = vmul.f32 %v1309, %v3166
    %v3168 = vmul.f32 %v3156, 3.8918573e-05
    %v3169 = vadd.f32 %v3168, 0.001143296
    %v3170 = vmul.f32 %v3156, %v3169
    %v3171 = vadd.f32 %v3170, 0.014752088
    %v3172 = vmul.f32 %v3156, %v3171
    %v3173 = vadd.f32 %v3172, 0.112945676
    %v3174 = vmul.f32 %v3156, %v3173
    %v3175 = vadd.f32 %v3174, 0.4994258
    %v3176 = vmul.f32 %v3156, %v3175
    %v3177 = vadd.f32 %v3176, 1.0
    %v3178 = vrcp.pop %v3177
    %v3179 = vmul.f32 %v3177, %v3178
    %v3180 = vsub.f32 1.0, %v3179
    %v3181 = vmul.f32 %v3178, %v3180
    %v3182 = vadd.f32 %v3178, %v3181
    %vm3183 = vweird.f32 %v3177
    %vm3184 = vweird.f32 %v3178
    %vm3185 = vmor %vm3183, %vm3184
    %v3186 = vsel %vm3185, %v3178, %v3182
    %v3187 = vand.u32 2147483647, %v3177
    %vm3188 = vcmp.eq.f32.partialorder %v3187, 8.507059e+37
    %v3189 = vand.u32 %v3177, 2147483648
    %v3190 = vor.u32 1.1754944e-38, %v3189
    %v3191 = vsel %vm3188, %v3190, %v3186
    %v3192 = vmul.f32 %v3167, %v3191
    %v3193 = vmin.f32 %v3192, 1.0
    %v3194 = vmax.f32 %v3193, -1.0
    %v3195 = vmul.f32 %v1310, %v1310
    %v3196 = vmin.f32 16.0, %v3195
    %v3197 = vmul.f32 %v3196, 2.1237322e-06
    %v3198 = vadd.f32 %v3197, 0.00028619796
    %v3199 = vmul.f32 %v3196, %v3198
    %v3200 = vadd.f32 %v3199, 0.0036580483
    %v3201 = vmul.f32 %v3196, %v3200
    %v3202 = vadd.f32 %v3201, 0.05243302
    %v3203 = vmul.f32 %v3196, %v3202
    %v3204 = vadd.f32 %v3203, 0.18741608
    %v3205 = vmul.f32 %v3196, %v3204
    %v3206 = vadd.f32 %v3205, 1.1283791
    %v3207 = vmul.f32 %v1310, %v3206
    %v3208 = vmul.f32 %v3196, 3.8918573e-05
    %v3209 = vadd.f32 %v3208, 0.001143296
    %v3210 = vmul.f32 %v3196, %v3209
    %v3211 = vadd.f32 %v3210, 0.014752088
    %v3212 = vmul.f32 %v3196, %v3211
    %v3213 = vadd.f32 %v3212, 0.112945676
    %v3214 = vmul.f32 %v3196, %v3213
    %v3215 = vadd.f32 %v3214, 0.4994258
    %v3216 = vmul.f32 %v3196, %v3215
    %v3217 = vadd.f32 %v3216, 1.0
    %v3218 = vrcp.pop %v3217
    %v3219 = vmul.f32 %v3217, %v3218
    %v3220 = vsub.f32 1.0, %v3219
    %v3221 = vmul.f32 %v3218, %v3220
    %v3222 = vadd.f32 %v3218, %v3221
    %vm3223 = vweird.f32 %v3217
    %vm3224 = vweird.f32 %v3218
    %vm3225 = vmor %vm3223, %vm3224
    %v3226 = vsel %vm3225, %v3218, %v3222
    %v3227 = vand.u32 2147483647, %v3217
    %vm3228 = vcmp.eq.f32.partialorder %v3227, 8.507059e+37
    %v3229 = vand.u32 %v3217, 2147483648
    %v3230 = vor.u32 1.1754944e-38, %v3229
    %v3231 = vsel %vm3228, %v3230, %v3226
    %v3232 = vmul.f32 %v3207, %v3231
    %v3233 = vmin.f32 %v3232, 1.0
    %v3234 = vmax.f32 %v3233, -1.0
    %v3235 = vmul.f32 %v1311, %v1311
    %v3236 = vmin.f32 16.0, %v3235
    %v3237 = vmul.f32 %v3236, 2.1237322e-06
    %v3238 = vadd.f32 %v3237, 0.00028619796
    %v3239 = vmul.f32 %v3236, %v3238
    %v3240 = vadd.f32 %v3239, 0.0036580483
    %v3241 = vmul.f32 %v3236, %v3240
    %v3242 = vadd.f32 %v3241, 0.05243302
    %v3243 = vmul.f32 %v3236, %v3242
    %v3244 = vadd.f32 %v3243, 0.18741608
    %v3245 = vmul.f32 %v3236, %v3244
    %v3246 = vadd.f32 %v3245, 1.1283791
    %v3247 = vmul.f32 %v1311, %v3246
    %v3248 = vmul.f32 %v3236, 3.8918573e-05
    %v3249 = vadd.f32 %v3248, 0.001143296
    %v3250 = vmul.f32 %v3236, %v3249
    %v3251 = vadd.f32 %v3250, 0.014752088
    %v3252 = vmul.f32 %v3236, %v3251
    %v3253 = vadd.f32 %v3252, 0.112945676
    %v3254 = vmul.f32 %v3236, %v3253
    %v3255 = vadd.f32 %v3254, 0.4994258
    %v3256 = vmul.f32 %v3236, %v3255
    %v3257 = vadd.f32 %v3256, 1.0
    %v3258 = vrcp.pop %v3257
    %v3259 = vmul.f32 %v3257, %v3258
    %v3260 = vsub.f32 1.0, %v3259
    %v3261 = vmul.f32 %v3258, %v3260
    %v3262 = vadd.f32 %v3258, %v3261
    %vm3263 = vweird.f32 %v3257
    %vm3264 = vweird.f32 %v3258
    %vm3265 = vmor %vm3263, %vm3264
    %v3266 = vsel %vm3265, %v3258, %v3262
    %v3267 = vand.u32 2147483647, %v3257
    %vm3268 = vcmp.eq.f32.partialorder %v3267, 8.507059e+37
    %v3269 = vand.u32 %v3257, 2147483648
    %v3270 = vor.u32 1.1754944e-38, %v3269
    %v3271 = vsel %vm3268, %v3270, %v3266
    %v3272 = vmul.f32 %v3247, %v3271
    %v3273 = vmin.f32 %v3272, 1.0
    %v3274 = vmax.f32 %v3273, -1.0
    %v3275 = vmul.f32 %v1312, %v1312
    %v3276 = vmin.f32 16.0, %v3275
    %v3277 = vmul.f32 %v3276, 2.1237322e-06
    %v3278 = vadd.f32 %v3277, 0.00028619796
    %v3279 = vmul.f32 %v3276, %v3278
    %v3280 = vadd.f32 %v3279, 0.0036580483
    %v3281 = vmul.f32 %v3276, %v3280
    %v3282 = vadd.f32 %v3281, 0.05243302
    %v3283 = vmul.f32 %v3276, %v3282
    %v3284 = vadd.f32 %v3283, 0.18741608
    %v3285 = vmul.f32 %v3276, %v3284
    %v3286 = vadd.f32 %v3285, 1.1283791
    %v3287 = vmul.f32 %v1312, %v3286
    %v3288 = vmul.f32 %v3276, 3.8918573e-05
    %v3289 = vadd.f32 %v3288, 0.001143296
    %v3290 = vmul.f32 %v3276, %v3289
    %v3291 = vadd.f32 %v3290, 0.014752088
    %v3292 = vmul.f32 %v3276, %v3291
    %v3293 = vadd.f32 %v3292, 0.112945676
    %v3294 = vmul.f32 %v3276, %v3293
    %v3295 = vadd.f32 %v3294, 0.4994258
    %v3296 = vmul.f32 %v3276, %v3295
    %v3297 = vadd.f32 %v3296, 1.0
    %v3298 = vrcp.pop %v3297
    %v3299 = vmul.f32 %v3297, %v3298
    %v3300 = vsub.f32 1.0, %v3299
    %v3301 = vmul.f32 %v3298, %v3300
    %v3302 = vadd.f32 %v3298, %v3301
    %vm3303 = vweird.f32 %v3297
    %vm3304 = vweird.f32 %v3298
    %vm3305 = vmor %vm3303, %vm3304
    %v3306 = vsel %vm3305, %v3298, %v3302
    %v3307 = vand.u32 2147483647, %v3297
    %vm3308 = vcmp.eq.f32.partialorder %v3307, 8.507059e+37
    %v3309 = vand.u32 %v3297, 2147483648
    %v3310 = vor.u32 1.1754944e-38, %v3309
    %v3311 = vsel %vm3308, %v3310, %v3306
    %v3312 = vmul.f32 %v3287, %v3311
    %v3313 = vmin.f32 %v3312, 1.0
    %v3314 = vmax.f32 %v3313, -1.0
    %v3315 = vmul.f32 %v1313, %v1313
    %v3316 = vmin.f32 16.0, %v3315
    %v3317 = vmul.f32 %v3316, 2.1237322e-06
    %v3318 = vadd.f32 %v3317, 0.00028619796
    %v3319 = vmul.f32 %v3316, %v3318
    %v3320 = vadd.f32 %v3319, 0.0036580483
    %v3321 = vmul.f32 %v3316, %v3320
    %v3322 = vadd.f32 %v3321, 0.05243302
    %v3323 = vmul.f32 %v3316, %v3322
    %v3324 = vadd.f32 %v3323, 0.18741608
    %v3325 = vmul.f32 %v3316, %v3324
    %v3326 = vadd.f32 %v3325, 1.1283791
    %v3327 = vmul.f32 %v1313, %v3326
    %v3328 = vmul.f32 %v3316, 3.8918573e-05
    %v3329 = vadd.f32 %v3328, 0.001143296
    %v3330 = vmul.f32 %v3316, %v3329
    %v3331 = vadd.f32 %v3330, 0.014752088
    %v3332 = vmul.f32 %v3316, %v3331
    %v3333 = vadd.f32 %v3332, 0.112945676
    %v3334 = vmul.f32 %v3316, %v3333
    %v3335 = vadd.f32 %v3334, 0.4994258
    %v3336 = vmul.f32 %v3316, %v3335
    %v3337 = vadd.f32 %v3336, 1.0
    %v3338 = vrcp.pop %v3337
    %v3339 = vmul.f32 %v3337, %v3338
    %v3340 = vsub.f32 1.0, %v3339
    %v3341 = vmul.f32 %v3338, %v3340
    %v3342 = vadd.f32 %v3338, %v3341
    %vm3343 = vweird.f32 %v3337
    %vm3344 = vweird.f32 %v3338
    %vm3345 = vmor %vm3343, %vm3344
    %v3346 = vsel %vm3345, %v3338, %v3342
    %v3347 = vand.u32 2147483647, %v3337
    %vm3348 = vcmp.eq.f32.partialorder %v3347, 8.507059e+37
    %v3349 = vand.u32 %v3337, 2147483648
    %v3350 = vor.u32 1.1754944e-38, %v3349
    %v3351 = vsel %vm3348, %v3350, %v3346
    %v3352 = vmul.f32 %v3327, %v3351
    %v3353 = vmin.f32 %v3352, 1.0
    %v3354 = vmax.f32 %v3353, -1.0
    %v3355 = vmul.f32 %v1314, %v1314
    %v3356 = vmin.f32 16.0, %v3355
    %v3357 = vmul.f32 %v3356, 2.1237322e-06
    %v3358 = vadd.f32 %v3357, 0.00028619796
    %v3359 = vmul.f32 %v3356, %v3358
    %v3360 = vadd.f32 %v3359, 0.0036580483
    %v3361 = vmul.f32 %v3356, %v3360
    %v3362 = vadd.f32 %v3361, 0.05243302
    %v3363 = vmul.f32 %v3356, %v3362
    %v3364 = vadd.f32 %v3363, 0.18741608
    %v3365 = vmul.f32 %v3356, %v3364
    %v3366 = vadd.f32 %v3365, 1.1283791
    %v3367 = vmul.f32 %v1314, %v3366
    %v3368 = vmul.f32 %v3356, 3.8918573e-05
    %v3369 = vadd.f32 %v3368, 0.001143296
    %v3370 = vmul.f32 %v3356, %v3369
    %v3371 = vadd.f32 %v3370, 0.014752088
    %v3372 = vmul.f32 %v3356, %v3371
    %v3373 = vadd.f32 %v3372, 0.112945676
    %v3374 = vmul.f32 %v3356, %v3373
    %v3375 = vadd.f32 %v3374, 0.4994258
    %v3376 = vmul.f32 %v3356, %v3375
    %v3377 = vadd.f32 %v3376, 1.0
    %v3378 = vrcp.pop %v3377
    %v3379 = vmul.f32 %v3377, %v3378
    %v3380 = vsub.f32 1.0, %v3379
    %v3381 = vmul.f32 %v3378, %v3380
    %v3382 = vadd.f32 %v3378, %v3381
    %vm3383 = vweird.f32 %v3377
    %vm3384 = vweird.f32 %v3378
    %vm3385 = vmor %vm3383, %vm3384
    %v3386 = vsel %vm3385, %v3378, %v3382
    %v3387 = vand.u32 2147483647, %v3377
    %vm3388 = vcmp.eq.f32.partialorder %v3387, 8.507059e+37
    %v3389 = vand.u32 %v3377, 2147483648
    %v3390 = vor.u32 1.1754944e-38, %v3389
    %v3391 = vsel %vm3388, %v3390, %v3386
    %v3392 = vmul.f32 %v3367, %v3391
    %v3393 = vmin.f32 %v3392, 1.0
    %v3394 = vmax.f32 %v3393, -1.0
    %v3395 = vadd.f32 %v1354, 1.0
    %v3396 = vadd.f32 %v1394, 1.0
    %v3397 = vadd.f32 %v1434, 1.0
    %v3398 = vadd.f32 %v1474, 1.0
    %v3399 = vadd.f32 %v1514, 1.0
    %v3400 = vadd.f32 %v1554, 1.0
    %v3401 = vadd.f32 %v1594, 1.0
    %v3402 = vadd.f32 %v1634, 1.0
    %v3403 = vadd.f32 %v1674, 1.0
    %v3404 = vadd.f32 %v1714, 1.0
    %v3405 = vadd.f32 %v1754, 1.0
    %v3406 = vadd.f32 %v1794, 1.0
    %v3407 = vadd.f32 %v1834, 1.0
    %v3408 = vadd.f32 %v1874, 1.0
    %v3409 = vadd.f32 %v1914, 1.0
    %v3410 = vadd.f32 %v1954, 1.0
    %v3411 = vadd.f32 %v1994, 1.0
    %v3412 = vadd.f32 %v2034, 1.0
    %v3413 = vadd.f32 %v2074, 1.0
    %v3414 = vadd.f32 %v2114, 1.0
    %v3415 = vadd.f32 %v2154, 1.0
    %v3416 = vadd.f32 %v2194, 1.0
    %v3417 = vadd.f32 %v2234, 1.0
    %v3418 = vadd.f32 %v2274, 1.0
    %v3419 = vadd.f32 %v2314, 1.0
    %v3420 = vadd.f32 %v2354, 1.0
    %v3421 = vadd.f32 %v2394, 1.0
    %v3422 = vadd.f32 %v2434, 1.0
    %v3423 = vadd.f32 %v2474, 1.0
    %v3424 = vadd.f32 %v2514, 1.0
    %v3425 = vadd.f32 %v2554, 1.0
    %v3426 = vadd.f32 %v2594, 1.0
    %v3427 = vadd.f32 %v2634, 1.0
    %v3428 = vadd.f32 %v2674, 1.0
    %v3429 = vadd.f32 %v2714, 1.0
    %v3430 = vadd.f32 %v2754, 1.0
    %v3431 = vadd.f32 %v2794, 1.0
    %v3432 = vadd.f32 %v2834, 1.0
    %v3433 = vadd.f32 %v2874, 1.0
    %v3434 = vadd.f32 %v2914, 1.0
    %v3435 = vadd.f32 %v2954, 1.0
    %v3436 = vadd.f32 %v2994, 1.0
    %v3437 = vadd.f32 %v3034, 1.0
    %v3438 = vadd.f32 %v3074, 1.0
    %v3439 = vadd.f32 %v3114, 1.0
    %v3440 = vadd.f32 %v3154, 1.0
    %v3441 = vadd.f32 %v3194, 1.0
    %v3442 = vadd.f32 %v3234, 1.0
    %v3443 = vadd.f32 %v3274, 1.0
    %v3444 = vadd.f32 %v3314, 1.0
    %v3445 = vadd.f32 %v3354, 1.0
    %v3446 = vadd.f32 %v3394, 1.0
    %v3447 = vmul.f32 %v1204, %v3395
    %v3448 = vmul.f32 %v1205, %v3396
    %v3449 = vmul.f32 %v1206, %v3397
    %v3450 = vmul.f32 %v1207, %v3398
    %v3451 = vmul.f32 %v1208, %v3399
    %v3452 = vmul.f32 %v1209, %v3400
    %v3453 = vmul.f32 %v1210, %v3401
    %v3454 = vmul.f32 %v1211, %v3402
    %v3455 = vmul.f32 %v1212, %v3403
    %v3456 = vmul.f32 %v1213, %v3404
    %v3457 = vmul.f32 %v1214, %v3405
    %v3458 = vmul.f32 %v1215, %v3406
    %v3459 = vmul.f32 %v1216, %v3407
    %v3460 = vmul.f32 %v1217, %v3408
    %v3461 = vmul.f32 %v1218, %v3409
    %v3462 = vmul.f32 %v1219, %v3410
    %v3463 = vmul.f32 %v1220, %v3411
    %v3464 = vmul.f32 %v1221, %v3412
    %v3465 = vmul.f32 %v1222, %v3413
    %v3466 = vmul.f32 %v1223, %v3414
    %v3467 = vmul.f32 %v1224, %v3415
    %v3468 = vmul.f32 %v1225, %v3416
    %v3469 = vmul.f32 %v1226, %v3417
    %v3470 = vmul.f32 %v1227, %v3418
    %v3471 = vmul.f32 %v1228, %v3419
    %v3472 = vmul.f32 %v1229, %v3420
    %v3473 = vmul.f32 %v1230, %v3421
    %v3474 = vmul.f32 %v1231, %v3422
    %v3475 = vmul.f32 %v1232, %v3423
    %v3476 = vmul.f32 %v1233, %v3424
    %v3477 = vmul.f32 %v1234, %v3425
    %v3478 = vmul.f32 %v1235, %v3426
    %v3479 = vmul.f32 %v1236, %v3427
    %v3480 = vmul.f32 %v1237, %v3428
    %v3481 = vmul.f32 %v1238, %v3429
    %v3482 = vmul.f32 %v1239, %v3430
    %v3483 = vmul.f32 %v1240, %v3431
    %v3484 = vmul.f32 %v1241, %v3432
    %v3485 = vmul.f32 %v1242, %v3433
    %v3486 = vmul.f32 %v1243, %v3434
    %v3487 = vmul.f32 %v1244, %v3435
    %v3488 = vmul.f32 %v1245, %v3436
    %v3489 = vmul.f32 %v1246, %v3437
    %v3490 = vmul.f32 %v1247, %v3438
    %v3491 = vmul.f32 %v1248, %v3439
    %v3492 = vmul.f32 %v1249, %v3440
    %v3493 = vmul.f32 %v1250, %v3441
    %v3494 = vmul.f32 %v1251, %v3442
    %v3495 = vmul.f32 %v1252, %v3443
    %v3496 = vmul.f32 %v1253, %v3444
    %v3497 = vmul.f32 %v1254, %v3445
    %v3498 = vmul.f32 %v1255, %v3446
    %v3499 = vmul.f32 %v822, %v3447
    %v3500 = vmul.f32 %v896, %v3448
    %v3501 = vmul.f32 %v824, %v3449
    %v3502 = vmul.f32 %v898, %v3450
    %v3503 = vmul.f32 %v827, %v3451
    %v3504 = vmul.f32 %v901, %v3452
    %v3505 = vmul.f32 %v829, %v3453
    %v3506 = vmul.f32 %v903, %v3454
    %v3507 = vmul.f32 %v832, %v3455
    %v3508 = vmul.f32 %v906, %v3456
    %v3509 = vmul.f32 %v834, %v3457
    %v3510 = vmul.f32 %v908, %v3458
    %v3511 = vmul.f32 %v837, %v3459
    %v3512 = vmul.f32 %v911, %v3460
    %v3513 = vmul.f32 %v839, %v3461
    %v3514 = vmul.f32 %v913, %v3462
    %v3515 = vmul.f32 %v842, %v3463
    %v3516 = vmul.f32 %v916, %v3464
    %v3517 = vmul.f32 %v844, %v3465
    %v3518 = vmul.f32 %v918, %v3466
    %v3519 = vmul.f32 %v847, %v3467
    %v3520 = vmul.f32 %v921, %v3468
    %v3521 = vmul.f32 %v849, %v3469
    %v3522 = vmul.f32 %v923, %v3470
    %v3523 = vmul.f32 %v852, %v3471
    %v3524 = vmul.f32 %v926, %v3472
    %v3525 = vmul.f32 %v854, %v3473
    %v3526 = vmul.f32 %v928, %v3474
    %v3527 = vmul.f32 %v857, %v3475
    %v3528 = vmul.f32 %v931, %v3476
    %v3529 = vmul.f32 %v859, %v3477
    %v3530 = vmul.f32 %v933, %v3478
    %v3531 = vmul.f32 %v862, %v3479
    %v3532 = vmul.f32 %v936, %v3480
    %v3533 = vmul.f32 %v864, %v3481
    %v3534 = vmul.f32 %v938, %v3482
    %v3535 = vmul.f32 %v867, %v3483
    %v3536 = vmul.f32 %v941, %v3484
    %v3537 = vmul.f32 %v869, %v3485
    %v3538 = vmul.f32 %v943, %v3486
    %v3539 = vmul.f32 %v872, %v3487
    %v3540 = vmul.f32 %v946, %v3488
    %v3541 = vmul.f32 %v874, %v3489
    %v3542 = vmul.f32 %v948, %v3490
    %v3543 = vmul.f32 %v877, %v3491
    %v3544 = vmul.f32 %v951, %v3492
    %v3545 = vmul.f32 %v879, %v3493
    %v3546 = vmul.f32 %v953, %v3494
    %v3547 = vmul.f32 %v882, %v3495
    %v3548 = vmul.f32 %v956, %v3496
    %v3549 = vmul.f32 %v884, %v3497
    %v3550 = vmul.f32 %v958, %v3498
    %v3551 = vpack.c.bf16 %v3501, %v3499
    %v3552 = vpack.c.bf16 %v3502, %v3500
    %v3553 = vpack.c.bf16 %v3505, %v3503
    %v3554 = vpack.c.bf16 %v3506, %v3504
    %v3555 = vpack.c.bf16 %v3509, %v3507
    %v3556 = vpack.c.bf16 %v3510, %v3508
    %v3557 = vpack.c.bf16 %v3513, %v3511
    %v3558 = vpack.c.bf16 %v3514, %v3512
    %v3559 = vpack.c.bf16 %v3517, %v3515
    %v3560 = vpack.c.bf16 %v3518, %v3516
    %v3561 = vpack.c.bf16 %v3521, %v3519
    %v3562 = vpack.c.bf16 %v3522, %v3520
    %v3563 = vpack.c.bf16 %v3525, %v3523
    %v3564 = vpack.c.bf16 %v3526, %v3524
    %v3565 = vpack.c.bf16 %v3529, %v3527
    %v3566 = vpack.c.bf16 %v3530, %v3528
    %v3567 = vpack.c.bf16 %v3533, %v3531
    %v3568 = vpack.c.bf16 %v3534, %v3532
    %v3569 = vpack.c.bf16 %v3537, %v3535
    %v3570 = vpack.c.bf16 %v3538, %v3536
    %v3571 = vpack.c.bf16 %v3541, %v3539
    %v3572 = vpack.c.bf16 %v3542, %v3540
    %v3573 = vpack.c.bf16 %v3545, %v3543
    %v3574 = vpack.c.bf16 %v3546, %v3544
    %v3575 = vpack.c.bf16 %v3549, %v3547
    %v3576 = vpack.c.bf16 %v3550, %v3548
    %v3577 = vld [vmem:[#allocation2] sm:$0xff]
    %v3578 = vld [vmem:[#allocation2 + $0x8] sm:$0xff]
    %v3579 = vld [vmem:[#allocation2 + $0x10] sm:$0xff]
    %v3580 = vld [vmem:[#allocation2 + $0x18] sm:$0xff]
    %v3581 = vld [vmem:[#allocation2 + $0x20] sm:$0xff]
    %v3582 = vld [vmem:[#allocation2 + $0x28] sm:$0xff]
    %v3583 = vld [vmem:[#allocation2 + $0x30] sm:$0xff]
    %v3584 = vld [vmem:[#allocation2 + $0x38] sm:$0xff]
    %v3585 = vld [vmem:[#allocation2 + $0x40] sm:$0xff]
    %v3586 = vld [vmem:[#allocation2 + $0x48] sm:$0xff]
    %v3587 = vld [vmem:[#allocation2 + $0x50] sm:$0xff]
    %v3588 = vld [vmem:[#allocation2 + $0x58] sm:$0xff]
    %v3589 = vld [vmem:[#allocation2 + $0x60] sm:$0xff]
    %v3590 = vld [vmem:[#allocation2 + $0x68] sm:$0xff]
    %v3591 = vld [vmem:[#allocation2 + $0x70] sm:$0xff]
    %v3592 = vld [vmem:[#allocation2 + $0x78] sm:$0xff]
    %v3593 = vld [vmem:[#allocation2 + $0x80] sm:$0xff]
    %v3594 = vld [vmem:[#allocation2 + $0x88] sm:$0xff]
    %v3595 = vld [vmem:[#allocation2 + $0x90] sm:$0xff]
    %v3596 = vld [vmem:[#allocation2 + $0x98] sm:$0xff]
    %v3597 = vld [vmem:[#allocation2 + $0xa0] sm:$0xff]
    %v3598 = vld [vmem:[#allocation2 + $0xa8] sm:$0xff]
    %v3599 = vld [vmem:[#allocation2 + $0xb0] sm:$0xff]
    %v3600 = vld [vmem:[#allocation2 + $0xb8] sm:$0xff]
    %v3601 = vld [vmem:[#allocation2 + $0xc0] sm:$0xff]
    %v3602 = vld [vmem:[#allocation2 + $0xc8] sm:$0xff]
    %v3603 = vld [vmem:[#allocation10] sm:$0xf]
    %v3604 = vld [vmem:[#allocation10 + $0x4] sm:$0xf]
    %v3605 = vld [vmem:[#allocation10 + $0x8] sm:$0xf]
    %v3606 = vld [vmem:[#allocation10 + $0xc] sm:$0xf]
    %v3607 = vld [vmem:[#allocation10 + $0x10] sm:$0xf]
    %v3608 = vld [vmem:[#allocation10 + $0x14] sm:$0xf]
    %v3609 = vld [vmem:[#allocation10 + $0x18] sm:$0xf]
    %v3610 = vld [vmem:[#allocation10 + $0x1c] sm:$0xf]
    %v3611 = vld [vmem:[#allocation10 + $0x20] sm:$0xf]
    %v3612 = vld [vmem:[#allocation10 + $0x24] sm:$0xf]
    %v3613 = vld [vmem:[#allocation10 + $0x28] sm:$0xf]
    %v3614 = vld [vmem:[#allocation10 + $0x2c] sm:$0xf]
    %v3615 = vld [vmem:[#allocation10 + $0x30] sm:$0xf]
    %v3616 = vld [vmem:[#allocation10 + $0x34] sm:$0xf]
    %v3617 = vld [vmem:[#allocation10 + $0x38] sm:$0xf]
    %v3618 = vld [vmem:[#allocation10 + $0x3c] sm:$0xf]
    %v3619 = vld [vmem:[#allocation10 + $0x40] sm:$0xf]
    %v3620 = vld [vmem:[#allocation10 + $0x44] sm:$0xf]
    %v3621 = vld [vmem:[#allocation10 + $0x48] sm:$0xf]
    %v3622 = vld [vmem:[#allocation10 + $0x4c] sm:$0xf]
    %v3623 = vld [vmem:[#allocation10 + $0x50] sm:$0xf]
    %v3624 = vld [vmem:[#allocation10 + $0x54] sm:$0xf]
    %v3625 = vld [vmem:[#allocation10 + $0x58] sm:$0xf]
    %v3626 = vld [vmem:[#allocation10 + $0x5c] sm:$0xf]
    %v3627 = vld [vmem:[#allocation10 + $0x60] sm:$0xf]
    %v3628 = vld [vmem:[#allocation10 + $0x64] sm:$0xf]
    %v3629 = vld [vmem:[#allocation10 + $0x68] sm:$0xf]
    %v3630 = vld [vmem:[#allocation10 + $0x6c] sm:$0xf]
    %v3631 = vld [vmem:[#allocation10 + $0x70] sm:$0xf]
    %v3632 = vld [vmem:[#allocation10 + $0x74] sm:$0xf]
    %v3633 = vld [vmem:[#allocation10 + $0x78] sm:$0xf]
    %v3634 = vld [vmem:[#allocation10 + $0x7c] sm:$0xf]
    %v3667 = vunpack.c.l.b16 %v3603
    %v3668 = vunpack.c.l.b16 %v3604
    %v3669 = vunpack.c.l.b16 %v3605
    %v3670 = vunpack.c.l.b16 %v3606
    %v3671 = vunpack.c.l.b16 %v3607
    %v3672 = vunpack.c.l.b16 %v3608
    %v3673 = vunpack.c.l.b16 %v3609
    %v3674 = vunpack.c.l.b16 %v3610
    %v3675 = vunpack.c.l.b16 %v3611
    %v3676 = vunpack.c.l.b16 %v3612
    %v3677 = vunpack.c.l.b16 %v3613
    %v3678 = vunpack.c.l.b16 %v3614
    %v3679 = vunpack.c.l.b16 %v3615
    %v3680 = vunpack.c.l.b16 %v3616
    %v3681 = vunpack.c.l.b16 %v3617
    %v3682 = vunpack.c.l.b16 %v3618
    %v3683 = vunpack.c.l.b16 %v3619
    %v3684 = vunpack.c.l.b16 %v3620
    %v3685 = vunpack.c.l.b16 %v3621
    %v3686 = vunpack.c.l.b16 %v3622
    %v3687 = vunpack.c.l.b16 %v3623
    %v3688 = vunpack.c.l.b16 %v3624
    %v3689 = vunpack.c.l.b16 %v3625
    %v3690 = vunpack.c.l.b16 %v3626
    %v3691 = vunpack.c.l.b16 %v3627
    %v3692 = vunpack.c.l.b16 %v3628
    %v3693 = vunpack.c.l.b16 %v3629
    %v3694 = vunpack.c.l.b16 %v3630
    %v3695 = vunpack.c.l.b16 %v3631
    %v3696 = vunpack.c.l.b16 %v3632
    %v3697 = vunpack.c.l.b16 %v3633
    %v3698 = vunpack.c.l.b16 %v3634
    %v3699 = vpack.c.b16 %v3668, %v3667
    %v3700 = vpack.c.b16 %v3670, %v3669
    %v3701 = vpack.c.b16 %v3672, %v3671
    %v3702 = vpack.c.b16 %v3674, %v3673
    %v3703 = vpack.c.b16 %v3676, %v3675
    %v3704 = vpack.c.b16 %v3678, %v3677
    %v3705 = vpack.c.b16 %v3680, %v3679
    %v3706 = vpack.c.b16 %v3682, %v3681
    %v3707 = vpack.c.b16 %v3684, %v3683
    %v3708 = vpack.c.b16 %v3686, %v3685
    %v3709 = vpack.c.b16 %v3688, %v3687
    %v3710 = vpack.c.b16 %v3690, %v3689
    %v3711 = vpack.c.b16 %v3692, %v3691
    %v3712 = vpack.c.b16 %v3694, %v3693
    %v3713 = vpack.c.b16 %v3696, %v3695
    %v3714 = vpack.c.b16 %v3698, %v3697
    %3731 = vmatpush.bf16.msra.mxu0 %v3706
    %3732 = vmatpush.bf16.msra.mxu0 %v3705
    %3733 = vmatpush.bf16.msra.mxu0 %v3704
    %3734 = vmatpush.bf16.msra.mxu0 %v3703
    %3735 = vmatpush.bf16.msra.mxu0 %v3702
    %3736 = vmatpush.bf16.msra.mxu0 %v3701
    %3737 = vmatpush.bf16.msra.mxu0 %v3700
    %3738 = vmatpush.bf16.msra.mxu0 %v3699
    %3739 = vmatmul.bf16.gmra.mxu0 %v3551
    %v3740 = vpop.f32.mrf.mxu0
    %v3741 = vadd.f32 0.0, %v3740
    %v3742 = vpop.f32.mrf.mxu0
    %v3743 = vadd.f32 0.0, %v3742
    %3744 = vmatmul.bf16.gmra.mxu0 %v3553
    %v3745 = vpop.f32.mrf.mxu0
    %v3746 = vadd.f32 0.0, %v3745
    %v3747 = vpop.f32.mrf.mxu0
    %v3748 = vadd.f32 0.0, %v3747
    %3749 = vmatmul.bf16.gmra.mxu0 %v3555
    %v3750 = vpop.f32.mrf.mxu0
    %v3751 = vadd.f32 0.0, %v3750
    %v3752 = vpop.f32.mrf.mxu0
    %v3753 = vadd.f32 0.0, %v3752
    %3754 = vmatmul.bf16.gmra.mxu0 %v3557
    %v3755 = vpop.f32.mrf.mxu0
    %v3756 = vadd.f32 0.0, %v3755
    %v3757 = vpop.f32.mrf.mxu0
    %v3758 = vadd.f32 0.0, %v3757
    %3759 = vmatmul.bf16.gmra.mxu0 %v3559
    %v3760 = vpop.f32.mrf.mxu0
    %v3761 = vadd.f32 0.0, %v3760
    %v3762 = vpop.f32.mrf.mxu0
    %v3763 = vadd.f32 0.0, %v3762
    %3764 = vmatmul.bf16.gmra.mxu0 %v3561
    %v3765 = vpop.f32.mrf.mxu0
    %v3766 = vadd.f32 0.0, %v3765
    %v3767 = vpop.f32.mrf.mxu0
    %v3768 = vadd.f32 0.0, %v3767
    %3769 = vmatmul.bf16.gmra.mxu0 %v3563
    %v3770 = vpop.f32.mrf.mxu0
    %v3771 = vadd.f32 0.0, %v3770
    %v3772 = vpop.f32.mrf.mxu0
    %v3773 = vadd.f32 0.0, %v3772
    %3774 = vmatmul.bf16.gmra.mxu0 %v3565
    %v3775 = vpop.f32.mrf.mxu0
    %v3776 = vadd.f32 0.0, %v3775
    %v3777 = vpop.f32.mrf.mxu0
    %v3778 = vadd.f32 0.0, %v3777
    %3779 = vmatmul.bf16.gmra.mxu0 %v3567
    %v3780 = vpop.f32.mrf.mxu0
    %v3781 = vadd.f32 0.0, %v3780
    %v3782 = vpop.f32.mrf.mxu0
    %v3783 = vadd.f32 0.0, %v3782
    %3784 = vmatmul.bf16.gmra.mxu0 %v3569
    %v3785 = vpop.f32.mrf.mxu0
    %v3786 = vadd.f32 0.0, %v3785
    %v3787 = vpop.f32.mrf.mxu0
    %v3788 = vadd.f32 0.0, %v3787
    %3789 = vmatmul.bf16.gmra.mxu0 %v3571
    %v3790 = vpop.f32.mrf.mxu0
    %v3791 = vadd.f32 0.0, %v3790
    %v3792 = vpop.f32.mrf.mxu0
    %v3793 = vadd.f32 0.0, %v3792
    %3794 = vmatmul.bf16.gmra.mxu0 %v3573
    %v3795 = vpop.f32.mrf.mxu0
    %v3796 = vadd.f32 0.0, %v3795
    %v3797 = vpop.f32.mrf.mxu0
    %v3798 = vadd.f32 0.0, %v3797
    %3799 = vmatmul.bf16.gmra.mxu0 %v3575
    %v3800 = vpop.f32.mrf.mxu0
    %v3801 = vadd.f32 0.0, %v3800
    %v3802 = vpop.f32.mrf.mxu0
    %v3803 = vadd.f32 0.0, %v3802
    %3804 = vdwg.mxu0
    %3805 = vmatpush.bf16.msra.mxu0 %v3714
    %3806 = vmatpush.bf16.msra.mxu0 %v3713
    %3807 = vmatpush.bf16.msra.mxu0 %v3712
    %3808 = vmatpush.bf16.msra.mxu0 %v3711
    %3809 = vmatpush.bf16.msra.mxu0 %v3710
    %3810 = vmatpush.bf16.msra.mxu0 %v3709
    %3811 = vmatpush.bf16.msra.mxu0 %v3708
    %3812 = vmatpush.bf16.msra.mxu0 %v3707
    %3813 = vmatmul.bf16.gmra.mxu0 %v3552
    %v3814 = vpop.f32.mrf.mxu0
    %v3815 = vadd.f32 %v3741, %v3814
    %v3816 = vpop.f32.mrf.mxu0
    %v3817 = vadd.f32 %v3743, %v3816
    %3818 = vmatmul.bf16.gmra.mxu0 %v3554
    %v3819 = vpop.f32.mrf.mxu0
    %v3820 = vadd.f32 %v3746, %v3819
    %v3821 = vpop.f32.mrf.mxu0
    %v3822 = vadd.f32 %v3748, %v3821
    %3823 = vmatmul.bf16.gmra.mxu0 %v3556
    %v3824 = vpop.f32.mrf.mxu0
    %v3825 = vadd.f32 %v3751, %v3824
    %v3826 = vpop.f32.mrf.mxu0
    %v3827 = vadd.f32 %v3753, %v3826
    %3828 = vmatmul.bf16.gmra.mxu0 %v3558
    %v3829 = vpop.f32.mrf.mxu0
    %v3830 = vadd.f32 %v3756, %v3829
    %v3831 = vpop.f32.mrf.mxu0
    %v3832 = vadd.f32 %v3758, %v3831
    %3833 = vmatmul.bf16.gmra.mxu0 %v3560
    %v3834 = vpop.f32.mrf.mxu0
    %v3835 = vadd.f32 %v3761, %v3834
    %v3836 = vpop.f32.mrf.mxu0
    %v3837 = vadd.f32 %v3763, %v3836
    %3838 = vmatmul.bf16.gmra.mxu0 %v3562
    %v3839 = vpop.f32.mrf.mxu0
    %v3840 = vadd.f32 %v3766, %v3839
    %v3841 = vpop.f32.mrf.mxu0
    %v3842 = vadd.f32 %v3768, %v3841
    %3843 = vmatmul.bf16.gmra.mxu0 %v3564
    %v3844 = vpop.f32.mrf.mxu0
    %v3845 = vadd.f32 %v3771, %v3844
    %v3846 = vpop.f32.mrf.mxu0
    %v3847 = vadd.f32 %v3773, %v3846
    %3848 = vmatmul.bf16.gmra.mxu0 %v3566
    %v3849 = vpop.f32.mrf.mxu0
    %v3850 = vadd.f32 %v3776, %v3849
    %v3851 = vpop.f32.mrf.mxu0
    %v3852 = vadd.f32 %v3778, %v3851
    %3853 = vmatmul.bf16.gmra.mxu0 %v3568
    %v3854 = vpop.f32.mrf.mxu0
    %v3855 = vadd.f32 %v3781, %v3854
    %v3856 = vpop.f32.mrf.mxu0
    %v3857 = vadd.f32 %v3783, %v3856
    %3858 = vmatmul.bf16.gmra.mxu0 %v3570
    %v3859 = vpop.f32.mrf.mxu0
    %v3860 = vadd.f32 %v3786, %v3859
    %v3861 = vpop.f32.mrf.mxu0
    %v3862 = vadd.f32 %v3788, %v3861
    %3863 = vmatmul.bf16.gmra.mxu0 %v3572
    %v3864 = vpop.f32.mrf.mxu0
    %v3865 = vadd.f32 %v3791, %v3864
    %v3866 = vpop.f32.mrf.mxu0
    %v3867 = vadd.f32 %v3793, %v3866
    %3868 = vmatmul.bf16.gmra.mxu0 %v3574
    %v3869 = vpop.f32.mrf.mxu0
    %v3870 = vadd.f32 %v3796, %v3869
    %v3871 = vpop.f32.mrf.mxu0
    %v3872 = vadd.f32 %v3798, %v3871
    %3873 = vmatmul.bf16.gmra.mxu0 %v3576
    %v3874 = vpop.f32.mrf.mxu0
    %v3875 = vadd.f32 %v3801, %v3874
    %v3876 = vpop.f32.mrf.mxu0
    %v3877 = vadd.f32 %v3803, %v3876
    %3878 = vdwg.mxu0
    %v3879 = vadd.f32 %v3577, %v3815
    %v3880 = vadd.f32 %v3578, %v3817
    %v3881 = vadd.f32 %v3579, %v3820
    %v3882 = vadd.f32 %v3580, %v3822
    %v3883 = vadd.f32 %v3581, %v3825
    %v3884 = vadd.f32 %v3582, %v3827
    %v3885 = vadd.f32 %v3583, %v3830
    %v3886 = vadd.f32 %v3584, %v3832
    %v3887 = vadd.f32 %v3585, %v3835
    %v3888 = vadd.f32 %v3586, %v3837
    %v3889 = vadd.f32 %v3587, %v3840
    %v3890 = vadd.f32 %v3588, %v3842
    %v3891 = vadd.f32 %v3589, %v3845
    %v3892 = vadd.f32 %v3590, %v3847
    %v3893 = vadd.f32 %v3591, %v3850
    %v3894 = vadd.f32 %v3592, %v3852
    %v3895 = vadd.f32 %v3593, %v3855
    %v3896 = vadd.f32 %v3594, %v3857
    %v3897 = vadd.f32 %v3595, %v3860
    %v3898 = vadd.f32 %v3596, %v3862
    %v3899 = vadd.f32 %v3597, %v3865
    %v3900 = vadd.f32 %v3598, %v3867
    %v3901 = vadd.f32 %v3599, %v3870
    %v3902 = vadd.f32 %v3600, %v3872
    %v3903 = vadd.f32 %v3601, %v3875
    %v3904 = vadd.f32 %v3602, %v3877
    %3905 = vst [vmem:[#allocation2] sm:$0xff] %v3879
    %3906 = vst [vmem:[#allocation2 + $0x8] sm:$0xff] %v3880
    %3907 = vst [vmem:[#allocation2 + $0x10] sm:$0xff] %v3881
    %3908 = vst [vmem:[#allocation2 + $0x18] sm:$0xff] %v3882
    %3909 = vst [vmem:[#allocation2 + $0x20] sm:$0xff] %v3883
    %3910 = vst [vmem:[#allocation2 + $0x28] sm:$0xff] %v3884
    %3911 = vst [vmem:[#allocation2 + $0x30] sm:$0xff] %v3885
    %3912 = vst [vmem:[#allocation2 + $0x38] sm:$0xff] %v3886
    %3913 = vst [vmem:[#allocation2 + $0x40] sm:$0xff] %v3887
    %3914 = vst [vmem:[#allocation2 + $0x48] sm:$0xff] %v3888
    %3915 = vst [vmem:[#allocation2 + $0x50] sm:$0xff] %v3889
    %3916 = vst [vmem:[#allocation2 + $0x58] sm:$0xff] %v3890
    %3917 = vst [vmem:[#allocation2 + $0x60] sm:$0xff] %v3891
    %3918 = vst [vmem:[#allocation2 + $0x68] sm:$0xff] %v3892
    %3919 = vst [vmem:[#allocation2 + $0x70] sm:$0xff] %v3893
    %3920 = vst [vmem:[#allocation2 + $0x78] sm:$0xff] %v3894
    %3921 = vst [vmem:[#allocation2 + $0x80] sm:$0xff] %v3895
    %3922 = vst [vmem:[#allocation2 + $0x88] sm:$0xff] %v3896
    %3923 = vst [vmem:[#allocation2 + $0x90] sm:$0xff] %v3897
    %3924 = vst [vmem:[#allocation2 + $0x98] sm:$0xff] %v3898
    %3925 = vst [vmem:[#allocation2 + $0xa0] sm:$0xff] %v3899
    %3926 = vst [vmem:[#allocation2 + $0xa8] sm:$0xff] %v3900
    %3927 = vst [vmem:[#allocation2 + $0xb0] sm:$0xff] %v3901
    %3928 = vst [vmem:[#allocation2 + $0xb8] sm:$0xff] %v3902
    %3929 = vst [vmem:[#allocation2 + $0xc0] sm:$0xff] %v3903
    %3930 = vst [vmem:[#allocation2 + $0xc8] sm:$0xff] %v3904
    // Predicated region
    $region38: #{tpu_custom_call.1} parent=1 // pred_check
      %p3931 = pneg %p81
    $region39: #{tpu_custom_call.1} parent=1 // pred_check_branch
      %3933 = sbr.rel (%p3931) target = $region41
    $region40: #{tpu_custom_call.1} parent=1 // pred_region
      %v3934 = vld [vmem:[#allocation2] sm:$0xff]
      %v3935 = vld [vmem:[#allocation2 + $0x8] sm:$0xff]
      %v3936 = vld [vmem:[#allocation2 + $0x10] sm:$0xff]
      %v3937 = vld [vmem:[#allocation2 + $0x18] sm:$0xff]
      %v3938 = vld [vmem:[#allocation2 + $0x20] sm:$0xff]
      %v3939 = vld [vmem:[#allocation2 + $0x28] sm:$0xff]
      %v3940 = vld [vmem:[#allocation2 + $0x30] sm:$0xff]
      %v3941 = vld [vmem:[#allocation2 + $0x38] sm:$0xff]
      %v3942 = vld [vmem:[#allocation2 + $0x40] sm:$0xff]
      %v3943 = vld [vmem:[#allocation2 + $0x48] sm:$0xff]
      %v3944 = vld [vmem:[#allocation2 + $0x50] sm:$0xff]
      %v3945 = vld [vmem:[#allocation2 + $0x58] sm:$0xff]
      %v3946 = vld [vmem:[#allocation2 + $0x60] sm:$0xff]
      %v3947 = vld [vmem:[#allocation2 + $0x68] sm:$0xff]
      %v3948 = vld [vmem:[#allocation2 + $0x70] sm:$0xff]
      %v3949 = vld [vmem:[#allocation2 + $0x78] sm:$0xff]
      %v3950 = vld [vmem:[#allocation2 + $0x80] sm:$0xff]
      %v3951 = vld [vmem:[#allocation2 + $0x88] sm:$0xff]
      %v3952 = vld [vmem:[#allocation2 + $0x90] sm:$0xff]
      %v3953 = vld [vmem:[#allocation2 + $0x98] sm:$0xff]
      %v3954 = vld [vmem:[#allocation2 + $0xa0] sm:$0xff]
      %v3955 = vld [vmem:[#allocation2 + $0xa8] sm:$0xff]
      %v3956 = vld [vmem:[#allocation2 + $0xb0] sm:$0xff]
      %v3957 = vld [vmem:[#allocation2 + $0xb8] sm:$0xff]
      %v3958 = vld [vmem:[#allocation2 + $0xc0] sm:$0xff]
      %v3959 = vld [vmem:[#allocation2 + $0xc8] sm:$0xff]
      %3960 = vst [vmem:[#allocation12] sm:$0xff] %v3934
      %3961 = vst [vmem:[#allocation12 + $0x8] sm:$0xff] %v3935
      %3962 = vst [vmem:[#allocation12 + $0x10] sm:$0xff] %v3936
      %3963 = vst [vmem:[#allocation12 + $0x18] sm:$0xff] %v3937
      %3964 = vst [vmem:[#allocation12 + $0x20] sm:$0xff] %v3938
      %3965 = vst [vmem:[#allocation12 + $0x28] sm:$0xff] %v3939
      %3966 = vst [vmem:[#allocation12 + $0x30] sm:$0xff] %v3940
      %3967 = vst [vmem:[#allocation12 + $0x38] sm:$0xff] %v3941
      %3968 = vst [vmem:[#allocation12 + $0x40] sm:$0xff] %v3942
      %3969 = vst [vmem:[#allocation12 + $0x48] sm:$0xff] %v3943
      %3970 = vst [vmem:[#allocation12 + $0x50] sm:$0xff] %v3944
      %3971 = vst [vmem:[#allocation12 + $0x58] sm:$0xff] %v3945
      %3972 = vst [vmem:[#allocation12 + $0x60] sm:$0xff] %v3946
      %3973 = vst [vmem:[#allocation12 + $0x68] sm:$0xff] %v3947
      %3974 = vst [vmem:[#allocation12 + $0x70] sm:$0xff] %v3948
      %3975 = vst [vmem:[#allocation12 + $0x78] sm:$0xff] %v3949
      %3976 = vst [vmem:[#allocation12 + $0x80] sm:$0xff] %v3950
      %3977 = vst [vmem:[#allocation12 + $0x88] sm:$0xff] %v3951
      %3978 = vst [vmem:[#allocation12 + $0x90] sm:$0xff] %v3952
      %3979 = vst [vmem:[#allocation12 + $0x98] sm:$0xff] %v3953
      %3980 = vst [vmem:[#allocation12 + $0xa0] sm:$0xff] %v3954
      %3981 = vst [vmem:[#allocation12 + $0xa8] sm:$0xff] %v3955
      %3982 = vst [vmem:[#allocation12 + $0xb0] sm:$0xff] %v3956
      %3983 = vst [vmem:[#allocation12 + $0xb8] sm:$0xff] %v3957
      %3984 = vst [vmem:[#allocation12 + $0xc0] sm:$0xff] %v3958
      %3985 = vst [vmem:[#allocation12 + $0xc8] sm:$0xff] %v3959
    $region41: #{tpu_custom_call.1} parent=1 // pred_fallthru
      _
    // Predicated region
    $region42: #{tpu_custom_call.1} parent=1 // pred_check
      _
    $region43: #{tpu_custom_call.1} parent=1 // pred_check_branch
      %3987 = sbr.rel (0) target = $region45
    $region44: #{tpu_custom_call.1} parent=1 // pred_region
      %3989 = vsyncadd [#allocation6], 0
      %s3990 = sshll.u32 [#allocation12], 4
      %s3991 = int_to_ptr.vmem [resolvable:$true] %s3990
      %s3992 = sshll.u32 %s4, 4
      %s3993 = int_to_ptr.hbm [resolvable:$true] %s3992
      %3998 = dma.vmem_to_hbm [thread:$0]  %s3991, 3328, %s3993, [#allocation6], 128, 128, 8
    $region45: #{tpu_custom_call.1} parent=1 // pred_fallthru
      _
    // Predicated region
    $region46: #{tpu_custom_call.1} parent=1 // pred_check
      _
    $region47: #{tpu_custom_call.1} parent=1 // pred_check_branch
      %4000 = sbr.rel (0) target = $region49
    $region48: #{tpu_custom_call.1} parent=1 // pred_region
      %4002 = dma.done [#allocation6], 3328
    $region49: #{tpu_custom_call.1} parent=1 // pred_fallthru
      _
    %4003 = vsyncpa [#allocation5], 1
    %4004 = vsyncpa [#allocation8], 1
    %4005 = vsyncpa [#allocation11], 1
    %4006 = vsyncpa [#allocation6], 1

</llo_original>
